<compile_context>
chip_gen: v5e
topology: v5e:2x2
jax: 0.10.0
libtpu: 0.0.40
codegen_flags: <defaults>
</compile_context>

<pallas_src>
import functools
import math

import jax
import jax.numpy as jnp
from jax.experimental import pallas as pl
from jax.experimental.pallas import tpu as pltpu


# ----------------------------------------------------------------------------
# small helpers
# ----------------------------------------------------------------------------
_CT_LAST = (((1,), (1,)), ((), ()))     # contract last axis of both: x @ W^T


def _mm_t(x, w):
    """x: (M, K), w: (N, K) -> (M, N) = x @ W^T on the MXU, bf16 in / f32 acc."""
    return jax.lax.dot_general(
        x.astype(jnp.bfloat16), w.astype(jnp.bfloat16),
        dimension_numbers=_CT_LAST, preferred_element_type=jnp.float32)


def _layernorm(s, g, b):
    # PyTorch LayerNorm: biased variance, eps = 1e-5, f32 math
    mean = jnp.mean(s, axis=-1, keepdims=True)
    var = jnp.mean((s - mean) ** 2, axis=-1, keepdims=True)
    return (s - mean) * jax.lax.rsqrt(var + 1e-5) * g + b


# ----------------------------------------------------------------------------
# fused encoder layer kernel: one grid step = one batch element's (S, D) slab
# ----------------------------------------------------------------------------
def _encoder_layer_kernel(x_ref,
                          wqkv_ref, bqkv_ref, wo_ref, bo_ref,
                          w1_ref, b1_ref, w2_ref, b2_ref,
                          g1_ref, be1_ref, g2_ref, be2_ref,
                          o_ref, *, nhead):
    x = x_ref[0]                                   # (S, D) f32
    S, D = x.shape
    H = nhead
    Dh = D // H
    scale = 1.0 / math.sqrt(Dh)

    # ---- fused QKV projection: single lane-dense MXU matmul -> (S, 3D) ----
    qkv = _mm_t(x, wqkv_ref[...]) + bqkv_ref[...]
    wo = wo_ref[...]                               # (D, D) bf16, loaded once

    # ---- multi-head attention; head merge fused into the out_proj matmul ----
    attn = jnp.zeros((S, D), jnp.float32)
    for h in range(H):                             # static unroll (tiny H)
        qs = slice(h * Dh, (h + 1) * Dh)
        q_h = qkv[:, qs]
        k_h = qkv[:, D + h * Dh:D + (h + 1) * Dh]
        v_h = qkv[:, 2 * D + h * Dh:2 * D + (h + 1) * Dh]
        # scores: q_h @ k_h^T via transposed-RHS contraction (no .T relayout)
        s = jax.lax.dot_general(
            q_h.astype(jnp.bfloat16), k_h.astype(jnp.bfloat16),
            _CT_LAST, preferred_element_type=jnp.float32) * scale      # (S, S)
        m = jnp.max(s, axis=-1, keepdims=True)
        p = jnp.exp(s - m)
        # softmax normalization via EUP approximate reciprocal (frees VALU)
        p = p * pl.reciprocal(jnp.sum(p, axis=-1, keepdims=True), approx=True)
        ctx_h = jnp.dot(p.astype(jnp.bfloat16), v_h.astype(jnp.bfloat16),
                        preferred_element_type=jnp.float32)            # (S, Dh)
        # out_proj restricted to this head's columns: ctx_h @ Wo[:, head]^T
        attn = attn + jax.lax.dot_general(
            ctx_h.astype(jnp.bfloat16), wo[:, qs], _CT_LAST,
            preferred_element_type=jnp.float32)                        # (S, D)
    attn = attn + bo_ref[...]

    # ---- residual + LayerNorm1 (post-LN, matches PyTorch default) ----
    h1 = _layernorm(x + attn, g1_ref[...], be1_ref[...])

    # ---- feed-forward: linear -> relu -> linear ----
    f = jnp.maximum(_mm_t(h1, w1_ref[...]) + b1_ref[...], 0.0)
    f = _mm_t(f, w2_ref[...]) + b2_ref[...]

    # ---- residual + LayerNorm2 ----
    o_ref[0] = _layernorm(h1 + f, g2_ref[...], be2_ref[...])


def encoder_layer(x_bsd, lp, nhead):
    B, S, D = x_bsd.shape
    act_spec = pl.BlockSpec((1, S, D), lambda b: (b, 0, 0))

    def pinned(a):
        # whole weight pinned in VMEM: same block for every grid step -> DMA'd once
        return pl.BlockSpec(a.shape, lambda b: (0,) * a.ndim)

    weights = [
        lp["in_proj_w"], lp["in_proj_b"].reshape(1, -1),
        lp["out_proj_w"], lp["out_proj_b"].reshape(1, -1),
        lp["lin1_w"], lp["lin1_b"].reshape(1, -1),
        lp["lin2_w"], lp["lin2_b"].reshape(1, -1),
        lp["norm1_w"].reshape(1, -1), lp["norm1_b"].reshape(1, -1),
        lp["norm2_w"].reshape(1, -1), lp["norm2_b"].reshape(1, -1),
    ]
    return pl.pallas_call(
        functools.partial(_encoder_layer_kernel, nhead=nhead),
        grid=(B,),
        out_shape=jax.ShapeDtypeStruct((B, S, D), jnp.float32),
        in_specs=[act_spec] + [pinned(w) for w in weights],
        out_specs=act_spec,
        compiler_params=pltpu.CompilerParams(
            dimension_semantics=("parallel",),          # shards batch over TCs (v7x)
            vmem_limit_bytes=48 * 1024 * 1024,          # explicit budget, v7x-safe
        ),
    )(x_bsd, *weights)


# ----------------------------------------------------------------------------
# tiled output projection (vocab can be large: stream weight tiles, lane-dense)
# ----------------------------------------------------------------------------
def _linear_kernel(x_ref, w_ref, b_ref, o_ref):
    o_ref[...] = (
        jax.lax.dot_general(
            x_ref[...].astype(jnp.bfloat16), w_ref[...].astype(jnp.bfloat16),
            dimension_numbers=_CT_LAST, preferred_element_type=jnp.float32)
        + b_ref[...]
    )


def _pick_block(dim, candidates):
    for c in candidates:
        if dim % c == 0:
            return c
    return dim        # full extent is always a legal block


def linear(x, w, b):
    M, K = x.shape
    N = w.shape[0]
    bm = _pick_block(M, (256, 128, 64, 32, 16, 8))   # sublane-aligned row tile
    bn = _pick_block(N, (512, 256, 128))             # lane-dense output tile
    return pl.pallas_call(
        _linear_kernel,
        grid=(M // bm, N // bn),
        out_shape=jax.ShapeDtypeStruct((M, N), jnp.float32),
        in_specs=[
            pl.BlockSpec((bm, K), lambda i, j: (i, 0)),
            pl.BlockSpec((bn, K), lambda i, j: (j, 0)),
            pl.BlockSpec((1, bn), lambda i, j: (0, j)),
        ],
        out_specs=pl.BlockSpec((bm, bn), lambda i, j: (i, j)),
        compiler_params=pltpu.CompilerParams(
            dimension_semantics=("parallel", "parallel"),
            vmem_limit_bytes=48 * 1024 * 1024,
        ),
    )(x, w, b.reshape(1, -1))


# ----------------------------------------------------------------------------
# Parameter init (deterministic, shapes match SimpleTransformer.__init__)
# ----------------------------------------------------------------------------
def init_params(key, vocab_size, d_model, nhead, num_layers, dim_feedforward):
    def nrm(k, shape, scale=0.05, dtype=jnp.float32):
        return (scale * jax.random.normal(k, shape)).astype(dtype)

    keys = jax.random.split(key, 2 + num_layers)
    params = {
        "nhead": nhead,
        "embedding": nrm(keys[0], (vocab_size, d_model)),
        # matmul weights stored bf16 (MXU feed, halves HBM/VMEM); biases/norms f32
        "fc_w": nrm(keys[1], (vocab_size, d_model), dtype=jnp.bfloat16),
        "fc_b": jnp.zeros((vocab_size,), jnp.float32),
        "layers": [],
    }
    for li in range(num_layers):
        lk = jax.random.split(keys[2 + li], 8)
        params["layers"].append(
            {
                "in_proj_w": nrm(lk[0], (3 * d_model, d_model), dtype=jnp.bfloat16),
                "in_proj_b": nrm(lk[1], (3 * d_model,)),
                "out_proj_w": nrm(lk[2], (d_model, d_model), dtype=jnp.bfloat16),
                "out_proj_b": jnp.zeros((d_model,), jnp.float32),
                "lin1_w": nrm(lk[3], (dim_feedforward, d_model), dtype=jnp.bfloat16),
                "lin1_b": nrm(lk[4], (dim_feedforward,)),
                "lin2_w": nrm(lk[5], (d_model, dim_feedforward), dtype=jnp.bfloat16),
                "lin2_b": nrm(lk[6], (d_model,)),
                "norm1_w": jnp.ones((d_model,), jnp.float32),
                "norm1_b": jnp.zeros((d_model,), jnp.float32),
                "norm2_w": jnp.ones((d_model,), jnp.float32),
                "norm2_b": jnp.zeros((d_model,), jnp.float32),
            }
        )
    return params


# ----------------------------------------------------------------------------
# Forward pass (eval mode: dropout = identity; post-LN encoder layers)
# ----------------------------------------------------------------------------
def simple_transformer_forward(params, x_ids):
    S, B = x_ids.shape
    D = params["embedding"].shape[1]
    H = params["nhead"]

    # embedding lookup (gather) is glue; go batch-major once: (B, S, D)
    h = jnp.take(params["embedding"], x_ids.T, axis=0)

    for lp in params["layers"]:
        h = encoder_layer(h, lp, H)          # one fused pallas_call per layer

    # final dropout is identity at inference; fc projects to vocab (tiled)
    logits = linear(h.reshape(B * S, D), params["fc_w"], params["fc_b"])
    V = logits.shape[-1]
    # back to PyTorch batch_first=False layout (S, B, V)
    # TODO(synk): training-only teacher-forcing branch (torch.rand concat) not implemented.
    return logits.reshape(B, S, V).transpose(1, 0, 2)


if __name__ == "__main__":
    vocab_size = 64
    d_model = 32
    nhead = 4
    num_layers = 2
    dim_feedforward = 64
    seq_len, batch = 8, 2

    key = jax.random.PRNGKey(0)
    k_param, k_ids = jax.random.split(key)
    params = init_params(k_param, vocab_size, d_model, nhead, num_layers, dim_feedforward)

    # token ids, shape (S, B) per PyTorch batch_first=False convention
    x_ids = jax.random.randint(k_ids, (seq_len, batch), 0, vocab_size, dtype=jnp.int32)

    fwd = jax.jit(functools.partial(simple_transformer_forward, params))
    logits = fwd(x_ids)
    jax.block_until_ready(logits)
    assert logits.shape == (seq_len, batch, vocab_size)
    print("KERNEL_OK")
</pallas_src>

<mosaic_0001>
module attributes {stable_mosaic.version = 11 : i64} {
  func.func @_linear_kernel(%arg0: i32, %arg1: i32, %arg2: memref<16x32xf32, #tpu.memory_space<vmem>>, %arg3: memref<64x32xbf16, #tpu.memory_space<vmem>>, %arg4: memref<1x64xf32, #tpu.memory_space<vmem>>, %arg5: memref<16x64xf32, #tpu.memory_space<vmem>>) attributes {dimension_semantics = [#tpu.dimension_semantics<parallel>, #tpu.dimension_semantics<parallel>], iteration_bounds = array<i64: 1, 1>, scalar_prefetch = 0 : i64, scratch_operands = 0 : i64, tpu.core_type = #tpu.core_type<tc>, window_params = [{transform_indices = @transform_0, window_bounds = array<i64: 16, 32>}, {transform_indices = @transform_1, window_bounds = array<i64: 64, 32>}, {transform_indices = @transform_2, window_bounds = array<i64: 1, 64>}, {transform_indices = @transform_3, window_bounds = array<i64: 16, 64>}]} {
    %c0 = arith.constant 0 : index
    %c0_0 = arith.constant 0 : index
    %0 = vector.load %arg2[%c0, %c0_0] : memref<16x32xf32, #tpu.memory_space<vmem>>, vector<16x32xf32>
    %1 = arith.truncf %0 : vector<16x32xf32> to vector<16x32xbf16>
    %c0_1 = arith.constant 0 : index
    %c0_2 = arith.constant 0 : index
    %2 = vector.load %arg3[%c0_1, %c0_2] : memref<64x32xbf16, #tpu.memory_space<vmem>>, vector<64x32xbf16>
    %cst = arith.constant dense<0.000000e+00> : vector<16x64xf32>
    %3 = tpu.matmul %1, %2, %cst {dimension_numbers = #tpu.dot_dimension_numbers<[1], [1], [0], [0], [0, 0, 1, 0], [], []>} : vector<16x32xbf16>, vector<64x32xbf16>, vector<16x64xf32> -> vector<16x64xf32>
    %c0_3 = arith.constant 0 : index
    %c0_4 = arith.constant 0 : index
    %4 = vector.load %arg4[%c0_3, %c0_4] : memref<1x64xf32, #tpu.memory_space<vmem>>, vector<1x64xf32>
    %5 = vector.broadcast %4 : vector<1x64xf32> to vector<16x64xf32>
    %6 = arith.addf %3, %5 : vector<16x64xf32>
    %c0_5 = arith.constant 0 : index
    %c0_6 = arith.constant 0 : index
    %7 = vector.load %arg5[%c0_5, %c0_6] : memref<16x64xf32, #tpu.memory_space<vmem>>, vector<16x64xf32>
    tpu.vector_store %arg5[%c0_5, %c0_6], %6 {strides = array<i32>} : memref<16x64xf32, #tpu.memory_space<vmem>>, vector<16x64xf32>,
    return
  }
  func.func @transform_0(%arg0: i32, %arg1: i32) -> (i32, i32) {
    %c0_i32 = arith.constant 0 : i32
    %c0_i32_0 = arith.constant 0 : i32
    return %arg0, %c0_i32 : i32, i32
  }
  func.func @transform_1(%arg0: i32, %arg1: i32) -> (i32, i32) {
    %c0_i32 = arith.constant 0 : i32
    %c0_i32_0 = arith.constant 0 : i32
    return %arg1, %c0_i32 : i32, i32
  }
  func.func @transform_2(%arg0: i32, %arg1: i32) -> (i32, i32) {
    %c0_i32 = arith.constant 0 : i32
    %c0_i32_0 = arith.constant 0 : i32
    return %c0_i32, %arg1 : i32, i32
  }
  func.func @transform_3(%arg0: i32, %arg1: i32) -> (i32, i32) {
    %c0_i32 = arith.constant 0 : i32
    return %arg0, %arg1 : i32, i32
  }
}

module attributes {stable_mosaic.version = 11 : i64} {
  func.func @_encoder_layer_kernel(%arg0: i32, %arg1: memref<1x8x32xf32, #tpu.memory_space<vmem>>, %arg2: memref<96x32xbf16, #tpu.memory_space<vmem>>, %arg3: memref<1x96xf32, #tpu.memory_space<vmem>>, %arg4: memref<32x32xbf16, #tpu.memory_space<vmem>>, %arg5: memref<1x32xf32, #tpu.memory_space<vmem>>, %arg6: memref<64x32xbf16, #tpu.memory_space<vmem>>, %arg7: memref<1x64xf32, #tpu.memory_space<vmem>>, %arg8: memref<32x64xbf16, #tpu.memory_space<vmem>>, %arg9: memref<1x32xf32, #tpu.memory_space<vmem>>, %arg10: memref<1x32xf32, #tpu.memory_space<vmem>>, %arg11: memref<1x32xf32, #tpu.memory_space<vmem>>, %arg12: memref<1x32xf32, #tpu.memory_space<vmem>>, %arg13: memref<1x32xf32, #tpu.memory_space<vmem>>, %arg14: memref<1x8x32xf32, #tpu.memory_space<vmem>>) attributes {dimension_semantics = [#tpu.dimension_semantics<parallel>], iteration_bounds = array<i64: 2>, scalar_prefetch = 0 : i64, scratch_operands = 0 : i64, tpu.core_type = #tpu.core_type<tc>, window_params = [{transform_indices = @transform_0, window_bounds = array<i64: 1, 8, 32>}, {pipeline_mode = #tpu.pipeline_mode<synchronous>, transform_indices = @transform_1, window_bounds = array<i64: 96, 32>}, {pipeline_mode = #tpu.pipeline_mode<synchronous>, transform_indices = @transform_2, window_bounds = array<i64: 1, 96>}, {pipeline_mode = #tpu.pipeline_mode<synchronous>, transform_indices = @transform_3, window_bounds = array<i64: 32, 32>}, {pipeline_mode = #tpu.pipeline_mode<synchronous>, transform_indices = @transform_4, window_bounds = array<i64: 1, 32>}, {pipeline_mode = #tpu.pipeline_mode<synchronous>, transform_indices = @transform_5, window_bounds = array<i64: 64, 32>}, {pipeline_mode = #tpu.pipeline_mode<synchronous>, transform_indices = @transform_6, window_bounds = array<i64: 1, 64>}, {pipeline_mode = #tpu.pipeline_mode<synchronous>, transform_indices = @transform_7, window_bounds = array<i64: 32, 64>}, {pipeline_mode = #tpu.pipeline_mode<synchronous>, transform_indices = @transform_8, window_bounds = array<i64: 1, 32>}, {pipeline_mode = #tpu.pipeline_mode<synchronous>, transform_indices = @transform_9, window_bounds = array<i64: 1, 32>}, {pipeline_mode = #tpu.pipeline_mode<synchronous>, transform_indices = @transform_10, window_bounds = array<i64: 1, 32>}, {pipeline_mode = #tpu.pipeline_mode<synchronous>, transform_indices = @transform_11, window_bounds = array<i64: 1, 32>}, {pipeline_mode = #tpu.pipeline_mode<synchronous>, transform_indices = @transform_12, window_bounds = array<i64: 1, 32>}, {transform_indices = @transform_13, window_bounds = array<i64: 1, 8, 32>}]} {
    %c0 = arith.constant 0 : index
    %c0_0 = arith.constant 0 : index
    %c0_1 = arith.constant 0 : index
    %0 = vector.load %arg1[%c0, %c0_0, %c0_1] : memref<1x8x32xf32, #tpu.memory_space<vmem>>, vector<1x8x32xf32>
    %1 = vector.shape_cast %0 : vector<1x8x32xf32> to vector<8x32xf32>
    %c0_2 = arith.constant 0 : index
    %c0_3 = arith.constant 0 : index
    %2 = vector.load %arg2[%c0_2, %c0_3] : memref<96x32xbf16, #tpu.memory_space<vmem>>, vector<96x32xbf16>
    %3 = arith.truncf %1 : vector<8x32xf32> to vector<8x32xbf16>
    %cst = arith.constant dense<0.000000e+00> : vector<8x96xf32>
    %4 = tpu.matmul %3, %2, %cst {dimension_numbers = #tpu.dot_dimension_numbers<[1], [1], [0], [0], [0, 0, 1, 0], [], []>} : vector<8x32xbf16>, vector<96x32xbf16>, vector<8x96xf32> -> vector<8x96xf32>
    %c0_4 = arith.constant 0 : index
    %c0_5 = arith.constant 0 : index
    %5 = vector.load %arg3[%c0_4, %c0_5] : memref<1x96xf32, #tpu.memory_space<vmem>>, vector<1x96xf32>
    %6 = vector.broadcast %5 : vector<1x96xf32> to vector<8x96xf32>
    %7 = arith.addf %4, %6 : vector<8x96xf32>
    %c0_6 = arith.constant 0 : index
    %c0_7 = arith.constant 0 : index
    %8 = vector.load %arg4[%c0_6, %c0_7] : memref<32x32xbf16, #tpu.memory_space<vmem>>, vector<32x32xbf16>
    %cst_8 = arith.constant 0.000000e+00 : f32
    %9 = vector.broadcast %cst_8 : f32 to vector<8x32xf32>
    %10 = vector.extract_strided_slice %7 {offsets = [0, 0], sizes = [8, 8], strides = [1, 1]} : vector<8x96xf32> to vector<8x8xf32>
    %11 = vector.extract_strided_slice %7 {offsets = [0, 32], sizes = [8, 8], strides = [1, 1]} : vector<8x96xf32> to vector<8x8xf32>
    %12 = vector.extract_strided_slice %7 {offsets = [0, 64], sizes = [8, 8], strides = [1, 1]} : vector<8x96xf32> to vector<8x8xf32>
    %13 = arith.truncf %10 : vector<8x8xf32> to vector<8x8xbf16>
    %14 = arith.truncf %11 : vector<8x8xf32> to vector<8x8xbf16>
    %cst_9 = arith.constant dense<0.000000e+00> : vector<8x8xf32>
    %15 = tpu.matmul %13, %14, %cst_9 {dimension_numbers = #tpu.dot_dimension_numbers<[1], [1], [0], [0], [0, 0, 1, 0], [], []>} : vector<8x8xbf16>, vector<8x8xbf16>, vector<8x8xf32> -> vector<8x8xf32>
    %cst_10 = arith.constant 0.353553385 : f32
    %16 = vector.broadcast %cst_10 : f32 to vector<8x8xf32>
    %17 = arith.mulf %15, %16 : vector<8x8xf32>
    %cst_11 = arith.constant dense<0xFF800000> : vector<8xf32>
    %18 = vector.multi_reduction <maximumf>, %17, %cst_11 [1] : vector<8x8xf32> to vector<8xf32>
    %19 = vector.shape_cast %18 : vector<8xf32> to vector<8x1xf32>
    %20 = vector.broadcast %19 : vector<8x1xf32> to vector<8x8xf32>
    %21 = arith.subf %17, %20 : vector<8x8xf32>
    %22 = math.exp %21 : vector<8x8xf32>
    %cst_12 = arith.constant dense<0.000000e+00> : vector<8xf32>
    %23 = vector.multi_reduction <add>, %22, %cst_12 [1] : vector<8x8xf32> to vector<8xf32>
    %24 = vector.shape_cast %23 : vector<8xf32> to vector<8x1xf32>
    %25 = tpu.reciprocal %24 {approx = true} : vector<8x1xf32> -> vector<8x1xf32>
    %26 = vector.broadcast %25 : vector<8x1xf32> to vector<8x8xf32>
    %27 = arith.mulf %22, %26 : vector<8x8xf32>
    %28 = arith.truncf %27 : vector<8x8xf32> to vector<8x8xbf16>
    %29 = arith.truncf %12 : vector<8x8xf32> to vector<8x8xbf16>
    %cst_13 = arith.constant dense<0.000000e+00> : vector<8x8xf32>
    %30 = tpu.matmul %28, %29, %cst_13 {dimension_numbers = #tpu.dot_dimension_numbers<[1], [0], [0], [1], [0, 0, 1, 1], [], []>} : vector<8x8xbf16>, vector<8x8xbf16>, vector<8x8xf32> -> vector<8x8xf32>
    %31 = arith.truncf %30 : vector<8x8xf32> to vector<8x8xbf16>
    %32 = vector.extract_strided_slice %8 {offsets = [0, 0], sizes = [32, 8], strides = [1, 1]} : vector<32x32xbf16> to vector<32x8xbf16>
    %cst_14 = arith.constant dense<0.000000e+00> : vector<8x32xf32>
    %33 = tpu.matmul %31, %32, %cst_14 {dimension_numbers = #tpu.dot_dimension_numbers<[1], [1], [0], [0], [0, 0, 1, 0], [], []>} : vector<8x8xbf16>, vector<32x8xbf16>, vector<8x32xf32> -> vector<8x32xf32>
    %34 = arith.addf %9, %33 : vector<8x32xf32>
    %35 = vector.extract_strided_slice %7 {offsets = [0, 8], sizes = [8, 8], strides = [1, 1]} : vector<8x96xf32> to vector<8x8xf32>
    %36 = vector.extract_strided_slice %7 {offsets = [0, 40], sizes = [8, 8], strides = [1, 1]} : vector<8x96xf32> to vector<8x8xf32>
    %37 = vector.extract_strided_slice %7 {offsets = [0, 72], sizes = [8, 8], strides = [1, 1]} : vector<8x96xf32> to vector<8x8xf32>
    %38 = arith.truncf %35 : vector<8x8xf32> to vector<8x8xbf16>
    %39 = arith.truncf %36 : vector<8x8xf32> to vector<8x8xbf16>
    %cst_15 = arith.constant dense<0.000000e+00> : vector<8x8xf32>
    %40 = tpu.matmul %38, %39, %cst_15 {dimension_numbers = #tpu.dot_dimension_numbers<[1], [1], [0], [0], [0, 0, 1, 0], [], []>} : vector<8x8xbf16>, vector<8x8xbf16>, vector<8x8xf32> -> vector<8x8xf32>
    %cst_16 = arith.constant 0.353553385 : f32
    %41 = vector.broadcast %cst_16 : f32 to vector<8x8xf32>
    %42 = arith.mulf %40, %41 : vector<8x8xf32>
    %cst_17 = arith.constant dense<0xFF800000> : vector<8xf32>
    %43 = vector.multi_reduction <maximumf>, %42, %cst_17 [1] : vector<8x8xf32> to vector<8xf32>
    %44 = vector.shape_cast %43 : vector<8xf32> to vector<8x1xf32>
    %45 = vector.broadcast %44 : vector<8x1xf32> to vector<8x8xf32>
    %46 = arith.subf %42, %45 : vector<8x8xf32>
    %47 = math.exp %46 : vector<8x8xf32>
    %cst_18 = arith.constant dense<0.000000e+00> : vector<8xf32>
    %48 = vector.multi_reduction <add>, %47, %cst_18 [1] : vector<8x8xf32> to vector<8xf32>
    %49 = vector.shape_cast %48 : vector<8xf32> to vector<8x1xf32>
    %50 = tpu.reciprocal %49 {approx = true} : vector<8x1xf32> -> vector<8x1xf32>
    %51 = vector.broadcast %50 : vector<8x1xf32> to vector<8x8xf32>
    %52 = arith.mulf %47, %51 : vector<8x8xf32>
    %53 = arith.truncf %52 : vector<8x8xf32> to vector<8x8xbf16>
    %54 = arith.truncf %37 : vector<8x8xf32> to vector<8x8xbf16>
    %cst_19 = arith.constant dense<0.000000e+00> : vector<8x8xf32>
    %55 = tpu.matmul %53, %54, %cst_19 {dimension_numbers = #tpu.dot_dimension_numbers<[1], [0], [0], [1], [0, 0, 1, 1], [], []>} : vector<8x8xbf16>, vector<8x8xbf16>, vector<8x8xf32> -> vector<8x8xf32>
    %56 = arith.truncf %55 : vector<8x8xf32> to vector<8x8xbf16>
    %57 = vector.extract_strided_slice %8 {offsets = [0, 8], sizes = [32, 8], strides = [1, 1]} : vector<32x32xbf16> to vector<32x8xbf16>
    %cst_20 = arith.constant dense<0.000000e+00> : vector<8x32xf32>
    %58 = tpu.matmul %56, %57, %cst_20 {dimension_numbers = #tpu.dot_dimension_numbers<[1], [1], [0], [0], [0, 0, 1, 0], [], []>} : vector<8x8xbf16>, vector<32x8xbf16>, vector<8x32xf32> -> vector<8x32xf32>
    %59 = arith.addf %34, %58 : vector<8x32xf32>
    %60 = vector.extract_strided_slice %7 {offsets = [0, 16], sizes = [8, 8], strides = [1, 1]} : vector<8x96xf32> to vector<8x8xf32>
    %61 = vector.extract_strided_slice %7 {offsets = [0, 48], sizes = [8, 8], strides = [1, 1]} : vector<8x96xf32> to vector<8x8xf32>
    %62 = vector.extract_strided_slice %7 {offsets = [0, 80], sizes = [8, 8], strides = [1, 1]} : vector<8x96xf32> to vector<8x8xf32>
    %63 = arith.truncf %60 : vector<8x8xf32> to vector<8x8xbf16>
    %64 = arith.truncf %61 : vector<8x8xf32> to vector<8x8xbf16>
    %cst_21 = arith.constant dense<0.000000e+00> : vector<8x8xf32>
    %65 = tpu.matmul %63, %64, %cst_21 {dimension_numbers = #tpu.dot_dimension_numbers<[1], [1], [0], [0], [0, 0, 1, 0], [], []>} : vector<8x8xbf16>, vector<8x8xbf16>, vector<8x8xf32> -> vector<8x8xf32>
    %cst_22 = arith.constant 0.353553385 : f32
    %66 = vector.broadcast %cst_22 : f32 to vector<8x8xf32>
    %67 = arith.mulf %65, %66 : vector<8x8xf32>
    %cst_23 = arith.constant dense<0xFF800000> : vector<8xf32>
    %68 = vector.multi_reduction <maximumf>, %67, %cst_23 [1] : vector<8x8xf32> to vector<8xf32>
    %69 = vector.shape_cast %68 : vector<8xf32> to vector<8x1xf32>
    %70 = vector.broadcast %69 : vector<8x1xf32> to vector<8x8xf32>
    %71 = arith.subf %67, %70 : vector<8x8xf32>
    %72 = math.exp %71 : vector<8x8xf32>
    %cst_24 = arith.constant dense<0.000000e+00> : vector<8xf32>
    %73 = vector.multi_reduction <add>, %72, %cst_24 [1] : vector<8x8xf32> to vector<8xf32>
    %74 = vector.shape_cast %73 : vector<8xf32> to vector<8x1xf32>
    %75 = tpu.reciprocal %74 {approx = true} : vector<8x1xf32> -> vector<8x1xf32>
    %76 = vector.broadcast %75 : vector<8x1xf32> to vector<8x8xf32>
    %77 = arith.mulf %72, %76 : vector<8x8xf32>
    %78 = arith.truncf %77 : vector<8x8xf32> to vector<8x8xbf16>
    %79 = arith.truncf %62 : vector<8x8xf32> to vector<8x8xbf16>
    %cst_25 = arith.constant dense<0.000000e+00> : vector<8x8xf32>
    %80 = tpu.matmul %78, %79, %cst_25 {dimension_numbers = #tpu.dot_dimension_numbers<[1], [0], [0], [1], [0, 0, 1, 1], [], []>} : vector<8x8xbf16>, vector<8x8xbf16>, vector<8x8xf32> -> vector<8x8xf32>
    %81 = arith.truncf %80 : vector<8x8xf32> to vector<8x8xbf16>
    %82 = vector.extract_strided_slice %8 {offsets = [0, 16], sizes = [32, 8], strides = [1, 1]} : vector<32x32xbf16> to vector<32x8xbf16>
    %cst_26 = arith.constant dense<0.000000e+00> : vector<8x32xf32>
    %83 = tpu.matmul %81, %82, %cst_26 {dimension_numbers = #tpu.dot_dimension_numbers<[1], [1], [0], [0], [0, 0, 1, 0], [], []>} : vector<8x8xbf16>, vector<32x8xbf16>, vector<8x32xf32> -> vector<8x32xf32>
    %84 = arith.addf %59, %83 : vector<8x32xf32>
    %85 = vector.extract_strided_slice %7 {offsets = [0, 24], sizes = [8, 8], strides = [1, 1]} : vector<8x96xf32> to vector<8x8xf32>
    %86 = vector.extract_strided_slice %7 {offsets = [0, 56], sizes = [8, 8], strides = [1, 1]} : vector<8x96xf32> to vector<8x8xf32>
    %87 = vector.extract_strided_slice %7 {offsets = [0, 88], sizes = [8, 8], strides = [1, 1]} : vector<8x96xf32> to vector<8x8xf32>
    %88 = arith.truncf %85 : vector<8x8xf32> to vector<8x8xbf16>
    %89 = arith.truncf %86 : vector<8x8xf32> to vector<8x8xbf16>
    %cst_27 = arith.constant dense<0.000000e+00> : vector<8x8xf32>
    %90 = tpu.matmul %88, %89, %cst_27 {dimension_numbers = #tpu.dot_dimension_numbers<[1], [1], [0], [0], [0, 0, 1, 0], [], []>} : vector<8x8xbf16>, vector<8x8xbf16>, vector<8x8xf32> -> vector<8x8xf32>
    %cst_28 = arith.constant 0.353553385 : f32
    %91 = vector.broadcast %cst_28 : f32 to vector<8x8xf32>
    %92 = arith.mulf %90, %91 : vector<8x8xf32>
    %cst_29 = arith.constant dense<0xFF800000> : vector<8xf32>
    %93 = vector.multi_reduction <maximumf>, %92, %cst_29 [1] : vector<8x8xf32> to vector<8xf32>
    %94 = vector.shape_cast %93 : vector<8xf32> to vector<8x1xf32>
    %95 = vector.broadcast %94 : vector<8x1xf32> to vector<8x8xf32>
    %96 = arith.subf %92, %95 : vector<8x8xf32>
    %97 = math.exp %96 : vector<8x8xf32>
    %cst_30 = arith.constant dense<0.000000e+00> : vector<8xf32>
    %98 = vector.multi_reduction <add>, %97, %cst_30 [1] : vector<8x8xf32> to vector<8xf32>
    %99 = vector.shape_cast %98 : vector<8xf32> to vector<8x1xf32>
    %100 = tpu.reciprocal %99 {approx = true} : vector<8x1xf32> -> vector<8x1xf32>
    %101 = vector.broadcast %100 : vector<8x1xf32> to vector<8x8xf32>
    %102 = arith.mulf %97, %101 : vector<8x8xf32>
    %103 = arith.truncf %102 : vector<8x8xf32> to vector<8x8xbf16>
    %104 = arith.truncf %87 : vector<8x8xf32> to vector<8x8xbf16>
    %cst_31 = arith.constant dense<0.000000e+00> : vector<8x8xf32>
    %105 = tpu.matmul %103, %104, %cst_31 {dimension_numbers = #tpu.dot_dimension_numbers<[1], [0], [0], [1], [0, 0, 1, 1], [], []>} : vector<8x8xbf16>, vector<8x8xbf16>, vector<8x8xf32> -> vector<8x8xf32>
    %106 = arith.truncf %105 : vector<8x8xf32> to vector<8x8xbf16>
    %107 = vector.extract_strided_slice %8 {offsets = [0, 24], sizes = [32, 8], strides = [1, 1]} : vector<32x32xbf16> to vector<32x8xbf16>
    %cst_32 = arith.constant dense<0.000000e+00> : vector<8x32xf32>
    %108 = tpu.matmul %106, %107, %cst_32 {dimension_numbers = #tpu.dot_dimension_numbers<[1], [1], [0], [0], [0, 0, 1, 0], [], []>} : vector<8x8xbf16>, vector<32x8xbf16>, vector<8x32xf32> -> vector<8x32xf32>
    %109 = arith.addf %84, %108 : vector<8x32xf32>
    %c0_33 = arith.constant 0 : index
    %c0_34 = arith.constant 0 : index
    %110 = vector.load %arg5[%c0_33, %c0_34] : memref<1x32xf32, #tpu.memory_space<vmem>>, vector<1x32xf32>
    %111 = vector.broadcast %110 : vector<1x32xf32> to vector<8x32xf32>
    %112 = arith.addf %109, %111 : vector<8x32xf32>
    %113 = arith.addf %1, %112 : vector<8x32xf32>
    %c0_35 = arith.constant 0 : index
    %c0_36 = arith.constant 0 : index
    %114 = vector.load %arg10[%c0_35, %c0_36] : memref<1x32xf32, #tpu.memory_space<vmem>>, vector<1x32xf32>
    %c0_37 = arith.constant 0 : index
    %c0_38 = arith.constant 0 : index
    %115 = vector.load %arg11[%c0_37, %c0_38] : memref<1x32xf32, #tpu.memory_space<vmem>>, vector<1x32xf32>
    %cst_39 = arith.constant dense<0.000000e+00> : vector<8xf32>
    %116 = vector.multi_reduction <add>, %113, %cst_39 [1] : vector<8x32xf32> to vector<8xf32>
    %117 = vector.shape_cast %116 : vector<8xf32> to vector<8x1xf32>
    %cst_40 = arith.constant 3.200000e+01 : f32
    %118 = vector.broadcast %cst_40 : f32 to vector<8x1xf32>
    %119 = arith.divf %117, %118 : vector<8x1xf32>
    %120 = vector.broadcast %119 : vector<8x1xf32> to vector<8x32xf32>
    %121 = arith.subf %113, %120 : vector<8x32xf32>
    %122 = arith.mulf %121, %121 : vector<8x32xf32>
    %cst_41 = arith.constant dense<0.000000e+00> : vector<8xf32>
    %123 = vector.multi_reduction <add>, %122, %cst_41 [1] : vector<8x32xf32> to vector<8xf32>
    %124 = vector.shape_cast %123 : vector<8xf32> to vector<8x1xf32>
    %cst_42 = arith.constant 3.200000e+01 : f32
    %125 = vector.broadcast %cst_42 : f32 to vector<8x1xf32>
    %126 = arith.divf %124, %125 : vector<8x1xf32>
    %127 = vector.broadcast %119 : vector<8x1xf32> to vector<8x32xf32>
    %128 = arith.subf %113, %127 : vector<8x32xf32>
    %cst_43 = arith.constant 9.99999974E-6 : f32
    %129 = vector.broadcast %cst_43 : f32 to vector<8x1xf32>
    %130 = arith.addf %126, %129 : vector<8x1xf32>
    %131 = math.rsqrt %130 : vector<8x1xf32>
    %132 = vector.broadcast %131 : vector<8x1xf32> to vector<8x32xf32>
    %133 = arith.mulf %128, %132 : vector<8x32xf32>
    %134 = vector.broadcast %114 : vector<1x32xf32> to vector<8x32xf32>
    %135 = arith.mulf %133, %134 : vector<8x32xf32>
    %136 = vector.broadcast %115 : vector<1x32xf32> to vector<8x32xf32>
    %137 = arith.addf %135, %136 : vector<8x32xf32>
    %c0_44 = arith.constant 0 : index
    %c0_45 = arith.constant 0 : index
    %138 = vector.load %arg6[%c0_44, %c0_45] : memref<64x32xbf16, #tpu.memory_space<vmem>>, vector<64x32xbf16>
    %139 = arith.truncf %137 : vector<8x32xf32> to vector<8x32xbf16>
    %cst_46 = arith.constant dense<0.000000e+00> : vector<8x64xf32>
    %140 = tpu.matmul %139, %138, %cst_46 {dimension_numbers = #tpu.dot_dimension_numbers<[1], [1], [0], [0], [0, 0, 1, 0], [], []>} : vector<8x32xbf16>, vector<64x32xbf16>, vector<8x64xf32> -> vector<8x64xf32>
    %c0_47 = arith.constant 0 : index
    %c0_48 = arith.constant 0 : index
    %141 = vector.load %arg7[%c0_47, %c0_48] : memref<1x64xf32, #tpu.memory_space<vmem>>, vector<1x64xf32>
    %142 = vector.broadcast %141 : vector<1x64xf32> to vector<8x64xf32>
    %143 = arith.addf %140, %142 : vector<8x64xf32>
    %cst_49 = arith.constant 0.000000e+00 : f32
    %144 = vector.broadcast %cst_49 : f32 to vector<8x64xf32>
    %145 = arith.maximumf %143, %144 : vector<8x64xf32>
    %c0_50 = arith.constant 0 : index
    %c0_51 = arith.constant 0 : index
    %146 = vector.load %arg8[%c0_50, %c0_51] : memref<32x64xbf16, #tpu.memory_space<vmem>>, vector<32x64xbf16>
    %147 = arith.truncf %145 : vector<8x64xf32> to vector<8x64xbf16>
    %cst_52 = arith.constant dense<0.000000e+00> : vector<8x32xf32>
    %148 = tpu.matmul %147, %146, %cst_52 {dimension_numbers = #tpu.dot_dimension_numbers<[1], [1], [0], [0], [0, 0, 1, 0], [], []>} : vector<8x64xbf16>, vector<32x64xbf16>, vector<8x32xf32> -> vector<8x32xf32>
    %c0_53 = arith.constant 0 : index
    %c0_54 = arith.constant 0 : index
    %149 = vector.load %arg9[%c0_53, %c0_54] : memref<1x32xf32, #tpu.memory_space<vmem>>, vector<1x32xf32>
    %150 = vector.broadcast %149 : vector<1x32xf32> to vector<8x32xf32>
    %151 = arith.addf %148, %150 : vector<8x32xf32>
    %152 = arith.addf %137, %151 : vector<8x32xf32>
    %c0_55 = arith.constant 0 : index
    %c0_56 = arith.constant 0 : index
    %153 = vector.load %arg12[%c0_55, %c0_56] : memref<1x32xf32, #tpu.memory_space<vmem>>, vector<1x32xf32>
    %c0_57 = arith.constant 0 : index
    %c0_58 = arith.constant 0 : index
    %154 = vector.load %arg13[%c0_57, %c0_58] : memref<1x32xf32, #tpu.memory_space<vmem>>, vector<1x32xf32>
    %cst_59 = arith.constant dense<0.000000e+00> : vector<8xf32>
    %155 = vector.multi_reduction <add>, %152, %cst_59 [1] : vector<8x32xf32> to vector<8xf32>
    %156 = vector.shape_cast %155 : vector<8xf32> to vector<8x1xf32>
    %cst_60 = arith.constant 3.200000e+01 : f32
    %157 = vector.broadcast %cst_60 : f32 to vector<8x1xf32>
    %158 = arith.divf %156, %157 : vector<8x1xf32>
    %159 = vector.broadcast %158 : vector<8x1xf32> to vector<8x32xf32>
    %160 = arith.subf %152, %159 : vector<8x32xf32>
    %161 = arith.mulf %160, %160 : vector<8x32xf32>
    %cst_61 = arith.constant dense<0.000000e+00> : vector<8xf32>
    %162 = vector.multi_reduction <add>, %161, %cst_61 [1] : vector<8x32xf32> to vector<8xf32>
    %163 = vector.shape_cast %162 : vector<8xf32> to vector<8x1xf32>
    %cst_62 = arith.constant 3.200000e+01 : f32
    %164 = vector.broadcast %cst_62 : f32 to vector<8x1xf32>
    %165 = arith.divf %163, %164 : vector<8x1xf32>
    %166 = vector.broadcast %158 : vector<8x1xf32> to vector<8x32xf32>
    %167 = arith.subf %152, %166 : vector<8x32xf32>
    %cst_63 = arith.constant 9.99999974E-6 : f32
    %168 = vector.broadcast %cst_63 : f32 to vector<8x1xf32>
    %169 = arith.addf %165, %168 : vector<8x1xf32>
    %170 = math.rsqrt %169 : vector<8x1xf32>
    %171 = vector.broadcast %170 : vector<8x1xf32> to vector<8x32xf32>
    %172 = arith.mulf %167, %171 : vector<8x32xf32>
    %173 = vector.broadcast %153 : vector<1x32xf32> to vector<8x32xf32>
    %174 = arith.mulf %172, %173 : vector<8x32xf32>
    %175 = vector.broadcast %154 : vector<1x32xf32> to vector<8x32xf32>
    %176 = arith.addf %174, %175 : vector<8x32xf32>
    %c0_64 = arith.constant 0 : index
    %c0_65 = arith.constant 0 : index
    %c0_66 = arith.constant 0 : index
    %177 = vector.load %arg14[%c0_64, %c0_65, %c0_66] : memref<1x8x32xf32, #tpu.memory_space<vmem>>, vector<1x8x32xf32>
    %178 = vector.shape_cast %177 : vector<1x8x32xf32> to vector<8x32xf32>
    %179 = vector.shape_cast %176 : vector<8x32xf32> to vector<1x8x32xf32>
    tpu.vector_store %arg14[%c0_64, %c0_65, %c0_66], %179 {strides = array<i32>} : memref<1x8x32xf32, #tpu.memory_space<vmem>>, vector<1x8x32xf32>,
    return
  }
  func.func @transform_0(%arg0: i32) -> (i32, i32, i32) {
    %c0_i32 = arith.constant 0 : i32
    %c0_i32_0 = arith.constant 0 : i32
    %c0_i32_1 = arith.constant 0 : i32
    return %arg0, %c0_i32, %c0_i32_0 : i32, i32, i32
  }
  func.func @transform_1(%arg0: i32) -> (i32, i32) {
    %c0_i32 = arith.constant 0 : i32
    %c0_i32_0 = arith.constant 0 : i32
    %c0_i32_1 = arith.constant 0 : i32
    return %c0_i32, %c0_i32_0 : i32, i32
  }
  func.func @transform_2(%arg0: i32) -> (i32, i32) {
    %c0_i32 = arith.constant 0 : i32
    %c0_i32_0 = arith.constant 0 : i32
    %c0_i32_1 = arith.constant 0 : i32
    return %c0_i32, %c0_i32_0 : i32, i32
  }
  func.func @transform_3(%arg0: i32) -> (i32, i32) {
    %c0_i32 = arith.constant 0 : i32
    %c0_i32_0 = arith.constant 0 : i32
    %c0_i32_1 = arith.constant 0 : i32
    return %c0_i32, %c0_i32_0 : i32, i32
  }
  func.func @transform_4(%arg0: i32) -> (i32, i32) {
    %c0_i32 = arith.constant 0 : i32
    %c0_i32_0 = arith.constant 0 : i32
    %c0_i32_1 = arith.constant 0 : i32
    return %c0_i32, %c0_i32_0 : i32, i32
  }
  func.func @transform_5(%arg0: i32) -> (i32, i32) {
    %c0_i32 = arith.constant 0 : i32
    %c0_i32_0 = arith.constant 0 : i32
    %c0_i32_1 = arith.constant 0 : i32
    return %c0_i32, %c0_i32_0 : i32, i32
  }
  func.func @transform_6(%arg0: i32) -> (i32, i32) {
    %c0_i32 = arith.constant 0 : i32
    %c0_i32_0 = arith.constant 0 : i32
    %c0_i32_1 = arith.constant 0 : i32
    return %c0_i32, %c0_i32_0 : i32, i32
  }
  func.func @transform_7(%arg0: i32) -> (i32, i32) {
    %c0_i32 = arith.constant 0 : i32
    %c0_i32_0 = arith.constant 0 : i32
    %c0_i32_1 = arith.constant 0 : i32
    return %c0_i32, %c0_i32_0 : i32, i32
  }
  func.func @transform_8(%arg0: i32) -> (i32, i32) {
    %c0_i32 = arith.constant 0 : i32
    %c0_i32_0 = arith.constant 0 : i32
    %c0_i32_1 = arith.constant 0 : i32
    return %c0_i32, %c0_i32_0 : i32, i32
  }
  func.func @transform_9(%arg0: i32) -> (i32, i32) {
    %c0_i32 = arith.constant 0 : i32
    %c0_i32_0 = arith.constant 0 : i32
    %c0_i32_1 = arith.constant 0 : i32
    return %c0_i32, %c0_i32_0 : i32, i32
  }
  func.func @transform_10(%arg0: i32) -> (i32, i32) {
    %c0_i32 = arith.constant 0 : i32
    %c0_i32_0 = arith.constant 0 : i32
    %c0_i32_1 = arith.constant 0 : i32
    return %c0_i32, %c0_i32_0 : i32, i32
  }
  func.func @transform_11(%arg0: i32) -> (i32, i32) {
    %c0_i32 = arith.constant 0 : i32
    %c0_i32_0 = arith.constant 0 : i32
    %c0_i32_1 = arith.constant 0 : i32
    return %c0_i32, %c0_i32_0 : i32, i32
  }
  func.func @transform_12(%arg0: i32) -> (i32, i32) {
    %c0_i32 = arith.constant 0 : i32
    %c0_i32_0 = arith.constant 0 : i32
    %c0_i32_1 = arith.constant 0 : i32
    return %c0_i32, %c0_i32_0 : i32, i32
  }
  func.func @transform_13(%arg0: i32) -> (i32, i32, i32) {
    %c0_i32 = arith.constant 0 : i32
    %c0_i32_0 = arith.constant 0 : i32
    %c0_i32_1 = arith.constant 0 : i32
    return %arg0, %c0_i32, %c0_i32_0 : i32, i32, i32
  }
}

module attributes {stable_mosaic.version = 11 : i64} {
  func.func @_encoder_layer_kernel(%arg0: i32, %arg1: memref<1x8x32xf32, #tpu.memory_space<vmem>>, %arg2: memref<96x32xbf16, #tpu.memory_space<vmem>>, %arg3: memref<1x96xf32, #tpu.memory_space<vmem>>, %arg4: memref<32x32xbf16, #tpu.memory_space<vmem>>, %arg5: memref<1x32xf32, #tpu.memory_space<vmem>>, %arg6: memref<64x32xbf16, #tpu.memory_space<vmem>>, %arg7: memref<1x64xf32, #tpu.memory_space<vmem>>, %arg8: memref<32x64xbf16, #tpu.memory_space<vmem>>, %arg9: memref<1x32xf32, #tpu.memory_space<vmem>>, %arg10: memref<1x32xf32, #tpu.memory_space<vmem>>, %arg11: memref<1x32xf32, #tpu.memory_space<vmem>>, %arg12: memref<1x32xf32, #tpu.memory_space<vmem>>, %arg13: memref<1x32xf32, #tpu.memory_space<vmem>>, %arg14: memref<1x8x32xf32, #tpu.memory_space<vmem>>) attributes {dimension_semantics = [#tpu.dimension_semantics<parallel>], iteration_bounds = array<i64: 2>, scalar_prefetch = 0 : i64, scratch_operands = 0 : i64, tpu.core_type = #tpu.core_type<tc>, window_params = [{transform_indices = @transform_0, window_bounds = array<i64: 1, 8, 32>}, {pipeline_mode = #tpu.pipeline_mode<synchronous>, transform_indices = @transform_1, window_bounds = array<i64: 96, 32>}, {pipeline_mode = #tpu.pipeline_mode<synchronous>, transform_indices = @transform_2, window_bounds = array<i64: 1, 96>}, {pipeline_mode = #tpu.pipeline_mode<synchronous>, transform_indices = @transform_3, window_bounds = array<i64: 32, 32>}, {pipeline_mode = #tpu.pipeline_mode<synchronous>, transform_indices = @transform_4, window_bounds = array<i64: 1, 32>}, {pipeline_mode = #tpu.pipeline_mode<synchronous>, transform_indices = @transform_5, window_bounds = array<i64: 64, 32>}, {pipeline_mode = #tpu.pipeline_mode<synchronous>, transform_indices = @transform_6, window_bounds = array<i64: 1, 64>}, {pipeline_mode = #tpu.pipeline_mode<synchronous>, transform_indices = @transform_7, window_bounds = array<i64: 32, 64>}, {pipeline_mode = #tpu.pipeline_mode<synchronous>, transform_indices = @transform_8, window_bounds = array<i64: 1, 32>}, {pipeline_mode = #tpu.pipeline_mode<synchronous>, transform_indices = @transform_9, window_bounds = array<i64: 1, 32>}, {pipeline_mode = #tpu.pipeline_mode<synchronous>, transform_indices = @transform_10, window_bounds = array<i64: 1, 32>}, {pipeline_mode = #tpu.pipeline_mode<synchronous>, transform_indices = @transform_11, window_bounds = array<i64: 1, 32>}, {pipeline_mode = #tpu.pipeline_mode<synchronous>, transform_indices = @transform_12, window_bounds = array<i64: 1, 32>}, {transform_indices = @transform_13, window_bounds = array<i64: 1, 8, 32>}]} {
    %c0 = arith.constant 0 : index
    %c0_0 = arith.constant 0 : index
    %c0_1 = arith.constant 0 : index
    %0 = vector.load %arg1[%c0, %c0_0, %c0_1] : memref<1x8x32xf32, #tpu.memory_space<vmem>>, vector<1x8x32xf32>
    %1 = vector.shape_cast %0 : vector<1x8x32xf32> to vector<8x32xf32>
    %c0_2 = arith.constant 0 : index
    %c0_3 = arith.constant 0 : index
    %2 = vector.load %arg2[%c0_2, %c0_3] : memref<96x32xbf16, #tpu.memory_space<vmem>>, vector<96x32xbf16>
    %3 = arith.truncf %1 : vector<8x32xf32> to vector<8x32xbf16>
    %cst = arith.constant dense<0.000000e+00> : vector<8x96xf32>
    %4 = tpu.matmul %3, %2, %cst {dimension_numbers = #tpu.dot_dimension_numbers<[1], [1], [0], [0], [0, 0, 1, 0], [], []>} : vector<8x32xbf16>, vector<96x32xbf16>, vector<8x96xf32> -> vector<8x96xf32>
    %c0_4 = arith.constant 0 : index
    %c0_5 = arith.constant 0 : index
    %5 = vector.load %arg3[%c0_4, %c0_5] : memref<1x96xf32, #tpu.memory_space<vmem>>, vector<1x96xf32>
    %6 = vector.broadcast %5 : vector<1x96xf32> to vector<8x96xf32>
    %7 = arith.addf %4, %6 : vector<8x96xf32>
    %c0_6 = arith.constant 0 : index
    %c0_7 = arith.constant 0 : index
    %8 = vector.load %arg4[%c0_6, %c0_7] : memref<32x32xbf16, #tpu.memory_space<vmem>>, vector<32x32xbf16>
    %cst_8 = arith.constant 0.000000e+00 : f32
    %9 = vector.broadcast %cst_8 : f32 to vector<8x32xf32>
    %10 = vector.extract_strided_slice %7 {offsets = [0, 0], sizes = [8, 8], strides = [1, 1]} : vector<8x96xf32> to vector<8x8xf32>
    %11 = vector.extract_strided_slice %7 {offsets = [0, 32], sizes = [8, 8], strides = [1, 1]} : vector<8x96xf32> to vector<8x8xf32>
    %12 = vector.extract_strided_slice %7 {offsets = [0, 64], sizes = [8, 8], strides = [1, 1]} : vector<8x96xf32> to vector<8x8xf32>
    %13 = arith.truncf %10 : vector<8x8xf32> to vector<8x8xbf16>
    %14 = arith.truncf %11 : vector<8x8xf32> to vector<8x8xbf16>
    %cst_9 = arith.constant dense<0.000000e+00> : vector<8x8xf32>
    %15 = tpu.matmul %13, %14, %cst_9 {dimension_numbers = #tpu.dot_dimension_numbers<[1], [1], [0], [0], [0, 0, 1, 0], [], []>} : vector<8x8xbf16>, vector<8x8xbf16>, vector<8x8xf32> -> vector<8x8xf32>
    %cst_10 = arith.constant 0.353553385 : f32
    %16 = vector.broadcast %cst_10 : f32 to vector<8x8xf32>
    %17 = arith.mulf %15, %16 : vector<8x8xf32>
    %cst_11 = arith.constant dense<0xFF800000> : vector<8xf32>
    %18 = vector.multi_reduction <maximumf>, %17, %cst_11 [1] : vector<8x8xf32> to vector<8xf32>
    %19 = vector.shape_cast %18 : vector<8xf32> to vector<8x1xf32>
    %20 = vector.broadcast %19 : vector<8x1xf32> to vector<8x8xf32>
    %21 = arith.subf %17, %20 : vector<8x8xf32>
    %22 = math.exp %21 : vector<8x8xf32>
    %cst_12 = arith.constant dense<0.000000e+00> : vector<8xf32>
    %23 = vector.multi_reduction <add>, %22, %cst_12 [1] : vector<8x8xf32> to vector<8xf32>
    %24 = vector.shape_cast %23 : vector<8xf32> to vector<8x1xf32>
    %25 = tpu.reciprocal %24 {approx = true} : vector<8x1xf32> -> vector<8x1xf32>
    %26 = vector.broadcast %25 : vector<8x1xf32> to vector<8x8xf32>
    %27 = arith.mulf %22, %26 : vector<8x8xf32>
    %28 = arith.truncf %27 : vector<8x8xf32> to vector<8x8xbf16>
    %29 = arith.truncf %12 : vector<8x8xf32> to vector<8x8xbf16>
    %cst_13 = arith.constant dense<0.000000e+00> : vector<8x8xf32>
    %30 = tpu.matmul %28, %29, %cst_13 {dimension_numbers = #tpu.dot_dimension_numbers<[1], [0], [0], [1], [0, 0, 1, 1], [], []>} : vector<8x8xbf16>, vector<8x8xbf16>, vector<8x8xf32> -> vector<8x8xf32>
    %31 = arith.truncf %30 : vector<8x8xf32> to vector<8x8xbf16>
    %32 = vector.extract_strided_slice %8 {offsets = [0, 0], sizes = [32, 8], strides = [1, 1]} : vector<32x32xbf16> to vector<32x8xbf16>
    %cst_14 = arith.constant dense<0.000000e+00> : vector<8x32xf32>
    %33 = tpu.matmul %31, %32, %cst_14 {dimension_numbers = #tpu.dot_dimension_numbers<[1], [1], [0], [0], [0, 0, 1, 0], [], []>} : vector<8x8xbf16>, vector<32x8xbf16>, vector<8x32xf32> -> vector<8x32xf32>
    %34 = arith.addf %9, %33 : vector<8x32xf32>
    %35 = vector.extract_strided_slice %7 {offsets = [0, 8], sizes = [8, 8], strides = [1, 1]} : vector<8x96xf32> to vector<8x8xf32>
    %36 = vector.extract_strided_slice %7 {offsets = [0, 40], sizes = [8, 8], strides = [1, 1]} : vector<8x96xf32> to vector<8x8xf32>
    %37 = vector.extract_strided_slice %7 {offsets = [0, 72], sizes = [8, 8], strides = [1, 1]} : vector<8x96xf32> to vector<8x8xf32>
    %38 = arith.truncf %35 : vector<8x8xf32> to vector<8x8xbf16>
    %39 = arith.truncf %36 : vector<8x8xf32> to vector<8x8xbf16>
    %cst_15 = arith.constant dense<0.000000e+00> : vector<8x8xf32>
    %40 = tpu.matmul %38, %39, %cst_15 {dimension_numbers = #tpu.dot_dimension_numbers<[1], [1], [0], [0], [0, 0, 1, 0], [], []>} : vector<8x8xbf16>, vector<8x8xbf16>, vector<8x8xf32> -> vector<8x8xf32>
    %cst_16 = arith.constant 0.353553385 : f32
    %41 = vector.broadcast %cst_16 : f32 to vector<8x8xf32>
    %42 = arith.mulf %40, %41 : vector<8x8xf32>
    %cst_17 = arith.constant dense<0xFF800000> : vector<8xf32>
    %43 = vector.multi_reduction <maximumf>, %42, %cst_17 [1] : vector<8x8xf32> to vector<8xf32>
    %44 = vector.shape_cast %43 : vector<8xf32> to vector<8x1xf32>
    %45 = vector.broadcast %44 : vector<8x1xf32> to vector<8x8xf32>
    %46 = arith.subf %42, %45 : vector<8x8xf32>
    %47 = math.exp %46 : vector<8x8xf32>
    %cst_18 = arith.constant dense<0.000000e+00> : vector<8xf32>
    %48 = vector.multi_reduction <add>, %47, %cst_18 [1] : vector<8x8xf32> to vector<8xf32>
    %49 = vector.shape_cast %48 : vector<8xf32> to vector<8x1xf32>
    %50 = tpu.reciprocal %49 {approx = true} : vector<8x1xf32> -> vector<8x1xf32>
    %51 = vector.broadcast %50 : vector<8x1xf32> to vector<8x8xf32>
    %52 = arith.mulf %47, %51 : vector<8x8xf32>
    %53 = arith.truncf %52 : vector<8x8xf32> to vector<8x8xbf16>
    %54 = arith.truncf %37 : vector<8x8xf32> to vector<8x8xbf16>
    %cst_19 = arith.constant dense<0.000000e+00> : vector<8x8xf32>
    %55 = tpu.matmul %53, %54, %cst_19 {dimension_numbers = #tpu.dot_dimension_numbers<[1], [0], [0], [1], [0, 0, 1, 1], [], []>} : vector<8x8xbf16>, vector<8x8xbf16>, vector<8x8xf32> -> vector<8x8xf32>
    %56 = arith.truncf %55 : vector<8x8xf32> to vector<8x8xbf16>
    %57 = vector.extract_strided_slice %8 {offsets = [0, 8], sizes = [32, 8], strides = [1, 1]} : vector<32x32xbf16> to vector<32x8xbf16>
    %cst_20 = arith.constant dense<0.000000e+00> : vector<8x32xf32>
    %58 = tpu.matmul %56, %57, %cst_20 {dimension_numbers = #tpu.dot_dimension_numbers<[1], [1], [0], [0], [0, 0, 1, 0], [], []>} : vector<8x8xbf16>, vector<32x8xbf16>, vector<8x32xf32> -> vector<8x32xf32>
    %59 = arith.addf %34, %58 : vector<8x32xf32>
    %60 = vector.extract_strided_slice %7 {offsets = [0, 16], sizes = [8, 8], strides = [1, 1]} : vector<8x96xf32> to vector<8x8xf32>
    %61 = vector.extract_strided_slice %7 {offsets = [0, 48], sizes = [8, 8], strides = [1, 1]} : vector<8x96xf32> to vector<8x8xf32>
    %62 = vector.extract_strided_slice %7 {offsets = [0, 80], sizes = [8, 8], strides = [1, 1]} : vector<8x96xf32> to vector<8x8xf32>
    %63 = arith.truncf %60 : vector<8x8xf32> to vector<8x8xbf16>
    %64 = arith.truncf %61 : vector<8x8xf32> to vector<8x8xbf16>
    %cst_21 = arith.constant dense<0.000000e+00> : vector<8x8xf32>
    %65 = tpu.matmul %63, %64, %cst_21 {dimension_numbers = #tpu.dot_dimension_numbers<[1], [1], [0], [0], [0, 0, 1, 0], [], []>} : vector<8x8xbf16>, vector<8x8xbf16>, vector<8x8xf32> -> vector<8x8xf32>
    %cst_22 = arith.constant 0.353553385 : f32
    %66 = vector.broadcast %cst_22 : f32 to vector<8x8xf32>
    %67 = arith.mulf %65, %66 : vector<8x8xf32>
    %cst_23 = arith.constant dense<0xFF800000> : vector<8xf32>
    %68 = vector.multi_reduction <maximumf>, %67, %cst_23 [1] : vector<8x8xf32> to vector<8xf32>
    %69 = vector.shape_cast %68 : vector<8xf32> to vector<8x1xf32>
    %70 = vector.broadcast %69 : vector<8x1xf32> to vector<8x8xf32>
    %71 = arith.subf %67, %70 : vector<8x8xf32>
    %72 = math.exp %71 : vector<8x8xf32>
    %cst_24 = arith.constant dense<0.000000e+00> : vector<8xf32>
    %73 = vector.multi_reduction <add>, %72, %cst_24 [1] : vector<8x8xf32> to vector<8xf32>
    %74 = vector.shape_cast %73 : vector<8xf32> to vector<8x1xf32>
    %75 = tpu.reciprocal %74 {approx = true} : vector<8x1xf32> -> vector<8x1xf32>
    %76 = vector.broadcast %75 : vector<8x1xf32> to vector<8x8xf32>
    %77 = arith.mulf %72, %76 : vector<8x8xf32>
    %78 = arith.truncf %77 : vector<8x8xf32> to vector<8x8xbf16>
    %79 = arith.truncf %62 : vector<8x8xf32> to vector<8x8xbf16>
    %cst_25 = arith.constant dense<0.000000e+00> : vector<8x8xf32>
    %80 = tpu.matmul %78, %79, %cst_25 {dimension_numbers = #tpu.dot_dimension_numbers<[1], [0], [0], [1], [0, 0, 1, 1], [], []>} : vector<8x8xbf16>, vector<8x8xbf16>, vector<8x8xf32> -> vector<8x8xf32>
    %81 = arith.truncf %80 : vector<8x8xf32> to vector<8x8xbf16>
    %82 = vector.extract_strided_slice %8 {offsets = [0, 16], sizes = [32, 8], strides = [1, 1]} : vector<32x32xbf16> to vector<32x8xbf16>
    %cst_26 = arith.constant dense<0.000000e+00> : vector<8x32xf32>
    %83 = tpu.matmul %81, %82, %cst_26 {dimension_numbers = #tpu.dot_dimension_numbers<[1], [1], [0], [0], [0, 0, 1, 0], [], []>} : vector<8x8xbf16>, vector<32x8xbf16>, vector<8x32xf32> -> vector<8x32xf32>
    %84 = arith.addf %59, %83 : vector<8x32xf32>
    %85 = vector.extract_strided_slice %7 {offsets = [0, 24], sizes = [8, 8], strides = [1, 1]} : vector<8x96xf32> to vector<8x8xf32>
    %86 = vector.extract_strided_slice %7 {offsets = [0, 56], sizes = [8, 8], strides = [1, 1]} : vector<8x96xf32> to vector<8x8xf32>
    %87 = vector.extract_strided_slice %7 {offsets = [0, 88], sizes = [8, 8], strides = [1, 1]} : vector<8x96xf32> to vector<8x8xf32>
    %88 = arith.truncf %85 : vector<8x8xf32> to vector<8x8xbf16>
    %89 = arith.truncf %86 : vector<8x8xf32> to vector<8x8xbf16>
    %cst_27 = arith.constant dense<0.000000e+00> : vector<8x8xf32>
    %90 = tpu.matmul %88, %89, %cst_27 {dimension_numbers = #tpu.dot_dimension_numbers<[1], [1], [0], [0], [0, 0, 1, 0], [], []>} : vector<8x8xbf16>, vector<8x8xbf16>, vector<8x8xf32> -> vector<8x8xf32>
    %cst_28 = arith.constant 0.353553385 : f32
    %91 = vector.broadcast %cst_28 : f32 to vector<8x8xf32>
    %92 = arith.mulf %90, %91 : vector<8x8xf32>
    %cst_29 = arith.constant dense<0xFF800000> : vector<8xf32>
    %93 = vector.multi_reduction <maximumf>, %92, %cst_29 [1] : vector<8x8xf32> to vector<8xf32>
    %94 = vector.shape_cast %93 : vector<8xf32> to vector<8x1xf32>
    %95 = vector.broadcast %94 : vector<8x1xf32> to vector<8x8xf32>
    %96 = arith.subf %92, %95 : vector<8x8xf32>
    %97 = math.exp %96 : vector<8x8xf32>
    %cst_30 = arith.constant dense<0.000000e+00> : vector<8xf32>
    %98 = vector.multi_reduction <add>, %97, %cst_30 [1] : vector<8x8xf32> to vector<8xf32>
    %99 = vector.shape_cast %98 : vector<8xf32> to vector<8x1xf32>
    %100 = tpu.reciprocal %99 {approx = true} : vector<8x1xf32> -> vector<8x1xf32>
    %101 = vector.broadcast %100 : vector<8x1xf32> to vector<8x8xf32>
    %102 = arith.mulf %97, %101 : vector<8x8xf32>
    %103 = arith.truncf %102 : vector<8x8xf32> to vector<8x8xbf16>
    %104 = arith.truncf %87 : vector<8x8xf32> to vector<8x8xbf16>
    %cst_31 = arith.constant dense<0.000000e+00> : vector<8x8xf32>
    %105 = tpu.matmul %103, %104, %cst_31 {dimension_numbers = #tpu.dot_dimension_numbers<[1], [0], [0], [1], [0, 0, 1, 1], [], []>} : vector<8x8xbf16>, vector<8x8xbf16>, vector<8x8xf32> -> vector<8x8xf32>
    %106 = arith.truncf %105 : vector<8x8xf32> to vector<8x8xbf16>
    %107 = vector.extract_strided_slice %8 {offsets = [0, 24], sizes = [32, 8], strides = [1, 1]} : vector<32x32xbf16> to vector<32x8xbf16>
    %cst_32 = arith.constant dense<0.000000e+00> : vector<8x32xf32>
    %108 = tpu.matmul %106, %107, %cst_32 {dimension_numbers = #tpu.dot_dimension_numbers<[1], [1], [0], [0], [0, 0, 1, 0], [], []>} : vector<8x8xbf16>, vector<32x8xbf16>, vector<8x32xf32> -> vector<8x32xf32>
    %109 = arith.addf %84, %108 : vector<8x32xf32>
    %c0_33 = arith.constant 0 : index
    %c0_34 = arith.constant 0 : index
    %110 = vector.load %arg5[%c0_33, %c0_34] : memref<1x32xf32, #tpu.memory_space<vmem>>, vector<1x32xf32>
    %111 = vector.broadcast %110 : vector<1x32xf32> to vector<8x32xf32>
    %112 = arith.addf %109, %111 : vector<8x32xf32>
    %113 = arith.addf %1, %112 : vector<8x32xf32>
    %c0_35 = arith.constant 0 : index
    %c0_36 = arith.constant 0 : index
    %114 = vector.load %arg10[%c0_35, %c0_36] : memref<1x32xf32, #tpu.memory_space<vmem>>, vector<1x32xf32>
    %c0_37 = arith.constant 0 : index
    %c0_38 = arith.constant 0 : index
    %115 = vector.load %arg11[%c0_37, %c0_38] : memref<1x32xf32, #tpu.memory_space<vmem>>, vector<1x32xf32>
    %cst_39 = arith.constant dense<0.000000e+00> : vector<8xf32>
    %116 = vector.multi_reduction <add>, %113, %cst_39 [1] : vector<8x32xf32> to vector<8xf32>
    %117 = vector.shape_cast %116 : vector<8xf32> to vector<8x1xf32>
    %cst_40 = arith.constant 3.200000e+01 : f32
    %118 = vector.broadcast %cst_40 : f32 to vector<8x1xf32>
    %119 = arith.divf %117, %118 : vector<8x1xf32>
    %120 = vector.broadcast %119 : vector<8x1xf32> to vector<8x32xf32>
    %121 = arith.subf %113, %120 : vector<8x32xf32>
    %122 = arith.mulf %121, %121 : vector<8x32xf32>
    %cst_41 = arith.constant dense<0.000000e+00> : vector<8xf32>
    %123 = vector.multi_reduction <add>, %122, %cst_41 [1] : vector<8x32xf32> to vector<8xf32>
    %124 = vector.shape_cast %123 : vector<8xf32> to vector<8x1xf32>
    %cst_42 = arith.constant 3.200000e+01 : f32
    %125 = vector.broadcast %cst_42 : f32 to vector<8x1xf32>
    %126 = arith.divf %124, %125 : vector<8x1xf32>
    %127 = vector.broadcast %119 : vector<8x1xf32> to vector<8x32xf32>
    %128 = arith.subf %113, %127 : vector<8x32xf32>
    %cst_43 = arith.constant 9.99999974E-6 : f32
    %129 = vector.broadcast %cst_43 : f32 to vector<8x1xf32>
    %130 = arith.addf %126, %129 : vector<8x1xf32>
    %131 = math.rsqrt %130 : vector<8x1xf32>
    %132 = vector.broadcast %131 : vector<8x1xf32> to vector<8x32xf32>
    %133 = arith.mulf %128, %132 : vector<8x32xf32>
    %134 = vector.broadcast %114 : vector<1x32xf32> to vector<8x32xf32>
    %135 = arith.mulf %133, %134 : vector<8x32xf32>
    %136 = vector.broadcast %115 : vector<1x32xf32> to vector<8x32xf32>
    %137 = arith.addf %135, %136 : vector<8x32xf32>
    %c0_44 = arith.constant 0 : index
    %c0_45 = arith.constant 0 : index
    %138 = vector.load %arg6[%c0_44, %c0_45] : memref<64x32xbf16, #tpu.memory_space<vmem>>, vector<64x32xbf16>
    %139 = arith.truncf %137 : vector<8x32xf32> to vector<8x32xbf16>
    %cst_46 = arith.constant dense<0.000000e+00> : vector<8x64xf32>
    %140 = tpu.matmul %139, %138, %cst_46 {dimension_numbers = #tpu.dot_dimension_numbers<[1], [1], [0], [0], [0, 0, 1, 0], [], []>} : vector<8x32xbf16>, vector<64x32xbf16>, vector<8x64xf32> -> vector<8x64xf32>
    %c0_47 = arith.constant 0 : index
    %c0_48 = arith.constant 0 : index
    %141 = vector.load %arg7[%c0_47, %c0_48] : memref<1x64xf32, #tpu.memory_space<vmem>>, vector<1x64xf32>
    %142 = vector.broadcast %141 : vector<1x64xf32> to vector<8x64xf32>
    %143 = arith.addf %140, %142 : vector<8x64xf32>
    %cst_49 = arith.constant 0.000000e+00 : f32
    %144 = vector.broadcast %cst_49 : f32 to vector<8x64xf32>
    %145 = arith.maximumf %143, %144 : vector<8x64xf32>
    %c0_50 = arith.constant 0 : index
    %c0_51 = arith.constant 0 : index
    %146 = vector.load %arg8[%c0_50, %c0_51] : memref<32x64xbf16, #tpu.memory_space<vmem>>, vector<32x64xbf16>
    %147 = arith.truncf %145 : vector<8x64xf32> to vector<8x64xbf16>
    %cst_52 = arith.constant dense<0.000000e+00> : vector<8x32xf32>
    %148 = tpu.matmul %147, %146, %cst_52 {dimension_numbers = #tpu.dot_dimension_numbers<[1], [1], [0], [0], [0, 0, 1, 0], [], []>} : vector<8x64xbf16>, vector<32x64xbf16>, vector<8x32xf32> -> vector<8x32xf32>
    %c0_53 = arith.constant 0 : index
    %c0_54 = arith.constant 0 : index
    %149 = vector.load %arg9[%c0_53, %c0_54] : memref<1x32xf32, #tpu.memory_space<vmem>>, vector<1x32xf32>
    %150 = vector.broadcast %149 : vector<1x32xf32> to vector<8x32xf32>
    %151 = arith.addf %148, %150 : vector<8x32xf32>
    %152 = arith.addf %137, %151 : vector<8x32xf32>
    %c0_55 = arith.constant 0 : index
    %c0_56 = arith.constant 0 : index
    %153 = vector.load %arg12[%c0_55, %c0_56] : memref<1x32xf32, #tpu.memory_space<vmem>>, vector<1x32xf32>
    %c0_57 = arith.constant 0 : index
    %c0_58 = arith.constant 0 : index
    %154 = vector.load %arg13[%c0_57, %c0_58] : memref<1x32xf32, #tpu.memory_space<vmem>>, vector<1x32xf32>
    %cst_59 = arith.constant dense<0.000000e+00> : vector<8xf32>
    %155 = vector.multi_reduction <add>, %152, %cst_59 [1] : vector<8x32xf32> to vector<8xf32>
    %156 = vector.shape_cast %155 : vector<8xf32> to vector<8x1xf32>
    %cst_60 = arith.constant 3.200000e+01 : f32
    %157 = vector.broadcast %cst_60 : f32 to vector<8x1xf32>
    %158 = arith.divf %156, %157 : vector<8x1xf32>
    %159 = vector.broadcast %158 : vector<8x1xf32> to vector<8x32xf32>
    %160 = arith.subf %152, %159 : vector<8x32xf32>
    %161 = arith.mulf %160, %160 : vector<8x32xf32>
    %cst_61 = arith.constant dense<0.000000e+00> : vector<8xf32>
    %162 = vector.multi_reduction <add>, %161, %cst_61 [1] : vector<8x32xf32> to vector<8xf32>
    %163 = vector.shape_cast %162 : vector<8xf32> to vector<8x1xf32>
    %cst_62 = arith.constant 3.200000e+01 : f32
    %164 = vector.broadcast %cst_62 : f32 to vector<8x1xf32>
    %165 = arith.divf %163, %164 : vector<8x1xf32>
    %166 = vector.broadcast %158 : vector<8x1xf32> to vector<8x32xf32>
    %167 = arith.subf %152, %166 : vector<8x32xf32>
    %cst_63 = arith.constant 9.99999974E-6 : f32
    %168 = vector.broadcast %cst_63 : f32 to vector<8x1xf32>
    %169 = arith.addf %165, %168 : vector<8x1xf32>
    %170 = math.rsqrt %169 : vector<8x1xf32>
    %171 = vector.broadcast %170 : vector<8x1xf32> to vector<8x32xf32>
    %172 = arith.mulf %167, %171 : vector<8x32xf32>
    %173 = vector.broadcast %153 : vector<1x32xf32> to vector<8x32xf32>
    %174 = arith.mulf %172, %173 : vector<8x32xf32>
    %175 = vector.broadcast %154 : vector<1x32xf32> to vector<8x32xf32>
    %176 = arith.addf %174, %175 : vector<8x32xf32>
    %c0_64 = arith.constant 0 : index
    %c0_65 = arith.constant 0 : index
    %c0_66 = arith.constant 0 : index
    %177 = vector.load %arg14[%c0_64, %c0_65, %c0_66] : memref<1x8x32xf32, #tpu.memory_space<vmem>>, vector<1x8x32xf32>
    %178 = vector.shape_cast %177 : vector<1x8x32xf32> to vector<8x32xf32>
    %179 = vector.shape_cast %176 : vector<8x32xf32> to vector<1x8x32xf32>
    tpu.vector_store %arg14[%c0_64, %c0_65, %c0_66], %179 {strides = array<i32>} : memref<1x8x32xf32, #tpu.memory_space<vmem>>, vector<1x8x32xf32>,
    return
  }
  func.func @transform_0(%arg0: i32) -> (i32, i32, i32) {
    %c0_i32 = arith.constant 0 : i32
    %c0_i32_0 = arith.constant 0 : i32
    %c0_i32_1 = arith.constant 0 : i32
    return %arg0, %c0_i32, %c0_i32_0 : i32, i32, i32
  }
  func.func @transform_1(%arg0: i32) -> (i32, i32) {
    %c0_i32 = arith.constant 0 : i32
    %c0_i32_0 = arith.constant 0 : i32
    %c0_i32_1 = arith.constant 0 : i32
    return %c0_i32, %c0_i32_0 : i32, i32
  }
  func.func @transform_2(%arg0: i32) -> (i32, i32) {
    %c0_i32 = arith.constant 0 : i32
    %c0_i32_0 = arith.constant 0 : i32
    %c0_i32_1 = arith.constant 0 : i32
    return %c0_i32, %c0_i32_0 : i32, i32
  }
  func.func @transform_3(%arg0: i32) -> (i32, i32) {
    %c0_i32 = arith.constant 0 : i32
    %c0_i32_0 = arith.constant 0 : i32
    %c0_i32_1 = arith.constant 0 : i32
    return %c0_i32, %c0_i32_0 : i32, i32
  }
  func.func @transform_4(%arg0: i32) -> (i32, i32) {
    %c0_i32 = arith.constant 0 : i32
    %c0_i32_0 = arith.constant 0 : i32
    %c0_i32_1 = arith.constant 0 : i32
    return %c0_i32, %c0_i32_0 : i32, i32
  }
  func.func @transform_5(%arg0: i32) -> (i32, i32) {
    %c0_i32 = arith.constant 0 : i32
    %c0_i32_0 = arith.constant 0 : i32
    %c0_i32_1 = arith.constant 0 : i32
    return %c0_i32, %c0_i32_0 : i32, i32
  }
  func.func @transform_6(%arg0: i32) -> (i32, i32) {
    %c0_i32 = arith.constant 0 : i32
    %c0_i32_0 = arith.constant 0 : i32
    %c0_i32_1 = arith.constant 0 : i32
    return %c0_i32, %c0_i32_0 : i32, i32
  }
  func.func @transform_7(%arg0: i32) -> (i32, i32) {
    %c0_i32 = arith.constant 0 : i32
    %c0_i32_0 = arith.constant 0 : i32
    %c0_i32_1 = arith.constant 0 : i32
    return %c0_i32, %c0_i32_0 : i32, i32
  }
  func.func @transform_8(%arg0: i32) -> (i32, i32) {
    %c0_i32 = arith.constant 0 : i32
    %c0_i32_0 = arith.constant 0 : i32
    %c0_i32_1 = arith.constant 0 : i32
    return %c0_i32, %c0_i32_0 : i32, i32
  }
  func.func @transform_9(%arg0: i32) -> (i32, i32) {
    %c0_i32 = arith.constant 0 : i32
    %c0_i32_0 = arith.constant 0 : i32
    %c0_i32_1 = arith.constant 0 : i32
    return %c0_i32, %c0_i32_0 : i32, i32
  }
  func.func @transform_10(%arg0: i32) -> (i32, i32) {
    %c0_i32 = arith.constant 0 : i32
    %c0_i32_0 = arith.constant 0 : i32
    %c0_i32_1 = arith.constant 0 : i32
    return %c0_i32, %c0_i32_0 : i32, i32
  }
  func.func @transform_11(%arg0: i32) -> (i32, i32) {
    %c0_i32 = arith.constant 0 : i32
    %c0_i32_0 = arith.constant 0 : i32
    %c0_i32_1 = arith.constant 0 : i32
    return %c0_i32, %c0_i32_0 : i32, i32
  }
  func.func @transform_12(%arg0: i32) -> (i32, i32) {
    %c0_i32 = arith.constant 0 : i32
    %c0_i32_0 = arith.constant 0 : i32
    %c0_i32_1 = arith.constant 0 : i32
    return %c0_i32, %c0_i32_0 : i32, i32
  }
  func.func @transform_13(%arg0: i32) -> (i32, i32, i32) {
    %c0_i32 = arith.constant 0 : i32
    %c0_i32_0 = arith.constant 0 : i32
    %c0_i32_1 = arith.constant 0 : i32
    return %arg0, %c0_i32, %c0_i32_0 : i32, i32, i32
  }
}

</mosaic_0001>

<llo_original>
// kernel: simple_transformer_forward.5
$region0: #{simple_transformer_forward.5}
  #allocation0 [shape = 'u32[]', space=smem, size = 0x4, offset = 0x4, fixed_abs, tag = 'smem constant byte address 0x4 - core index']
  #allocation1 [shape = 'u32[72,128]{1,0:T(1,128)}', space=vmem, size = 0x9000, scoped, tag = 'internal scratch']
  %s0 = inlined_call_operand.vmem [shape: f32[16,32], index: 0, kind: input, shape index: {}]
  %s1 = inlined_call_operand.vmem [shape: bf16[64,32], index: 1, kind: input, shape index: {}]
  %s2 = inlined_call_operand.vmem [shape: f32[1,64], index: 2, kind: input, shape index: {}]
  %s3 = inlined_call_operand.vmem [shape: f32[16,64], index: 3, kind: output, shape index: {}]
  %s4 = sld [smem:[#allocation0]]
  $region22: #{simple_transformer_forward.5} parent=0
    _
  %s6 = ssub.s32 1, %s4
  %s7 = scalar_select 0, %s6, %s4
  // Predicated region
  $region2: #{simple_transformer_forward.5} parent=0 // pred_check
    _
  $region3: #{simple_transformer_forward.5} parent=0 // pred_check_branch
    %9 = sbr.rel (0) target = $region5
  $region4: #{simple_transformer_forward.5} parent=0 // pred_region
    _
  $region5: #{simple_transformer_forward.5} parent=0 // pred_fallthru
    _
  // Predicated region
  $region6: #{simple_transformer_forward.5} parent=0 // pred_check
    _
  $region7: #{simple_transformer_forward.5} parent=0 // pred_check_branch
    %11 = sbr.rel (0) target = $region9
  $region8: #{simple_transformer_forward.5} parent=0 // pred_region
    _
  $region9: #{simple_transformer_forward.5} parent=0 // pred_fallthru
    _
  // Predicated region
  $region10: #{simple_transformer_forward.5} parent=0 // pred_check
    _
  $region11: #{simple_transformer_forward.5} parent=0 // pred_check_branch
    %13 = sbr.rel (0) target = $region13
  $region12: #{simple_transformer_forward.5} parent=0 // pred_region
    _
  $region13: #{simple_transformer_forward.5} parent=0 // pred_fallthru
    _
  %v15 = vld [vmem:[%s0] sm:$0xff]
  %v16 = vld [vmem:[%s0 + $0x8] sm:$0xff]
  %v17 = vpack.c.bf16 %v16, %v15
  %v18 = vld [vmem:[%s1] sm:$0xf]
  %v19 = vld [vmem:[%s1 + $0x4] sm:$0xf]
  %v20 = vld [vmem:[%s1 + $0x8] sm:$0xf]
  %v21 = vld [vmem:[%s1 + $0xc] sm:$0xf]
  %v22 = vld [vmem:[%s1 + $0x10] sm:$0xf]
  %v23 = vld [vmem:[%s1 + $0x14] sm:$0xf]
  %v24 = vld [vmem:[%s1 + $0x18] sm:$0xf]
  %v25 = vld [vmem:[%s1 + $0x1c] sm:$0xf]
  %v26 = vld [vmem:[%s2] sm:$0x1]
  %v28 = vperm.slane %v26, 0
  %v38 = vunpack.c.l.b16 %v18
  %v39 = vunpack.c.l.b16 %v19
  %v40 = vunpack.c.l.b16 %v20
  %v41 = vunpack.c.l.b16 %v21
  %v42 = vunpack.c.l.b16 %v22
  %v43 = vunpack.c.l.b16 %v23
  %v44 = vunpack.c.l.b16 %v24
  %v45 = vunpack.c.l.b16 %v25
  %v46 = vpack.c.b16 %v39, %v38
  %v47 = vpack.c.b16 %v41, %v40
  %v48 = vpack.c.b16 %v43, %v42
  %v49 = vpack.c.b16 %v45, %v44
  %vm50 = vcmask 261120
  %v52 = vsel %vm50, %v17, 0
  %v55 = vsel %vm50, %v46, 0
  %v58 = vsel %vm50, %v47, 0
  %v61 = vsel %vm50, %v48, 0
  %v64 = vsel %vm50, %v49, 0
  %66 = vmatpush.bf16.xpose.msra.mxu0 0
  %67 = vmatpush.bf16.xpose.msra.mxu0 0
  %68 = vmatpush.bf16.xpose.msra.mxu0 0
  %69 = vmatpush.bf16.xpose.msra.mxu0 0
  %70 = vmatpush.bf16.xpose.msra.mxu0 %v64
  %71 = vmatpush.bf16.xpose.msra.mxu0 %v61
  %72 = vmatpush.bf16.xpose.msra.mxu0 %v58
  %73 = vmatpush.bf16.xpose.msra.mxu0 %v55
  %74 = vmatmul.bf16.gmra.mxu0 %v52
  %v75 = vpop.f32.mrf.mxu0
  %v76 = vadd.f32 %v28, %v75
  %v77 = vpop.f32.mrf.mxu0
  %v78 = vadd.f32 %v28, %v77
  %79 = vdwg.mxu0
  %vm80 = vcmask 523264
  %81 = vst.msk [vmem:[%s3] sm:$0xff] %vm80, %v76
  %82 = vst.msk [vmem:[%s3 + $0x8] sm:$0xff] %vm80, %v78
  // Predicated region
  $region14: #{simple_transformer_forward.5} parent=0 // pred_check
    _
  $region15: #{simple_transformer_forward.5} parent=0 // pred_check_branch
    %84 = sbr.rel (0) target = $region17
  $region16: #{simple_transformer_forward.5} parent=0 // pred_region
    _
  $region17: #{simple_transformer_forward.5} parent=0 // pred_fallthru
    _
  // Predicated region
  $region18: #{simple_transformer_forward.5} parent=0 // pred_check
    _
  $region19: #{simple_transformer_forward.5} parent=0 // pred_check_branch
    %86 = sbr.rel (0) target = $region21
  $region20: #{simple_transformer_forward.5} parent=0 // pred_region
    _
  $region21: #{simple_transformer_forward.5} parent=0 // pred_fallthru
    _

// kernel: simple_transformer_forward.3
$region0: #{simple_transformer_forward.3}
  #allocation0 [shape = 'u32[]', space=smem, size = 0x4, offset = 0x4, fixed_abs, tag = 'smem constant byte address 0x4 - core index']
  #allocation1 [shape = 'u32[72,128]{1,0:T(1,128)}', space=vmem, size = 0x9000, scoped, tag = 'internal scratch']
  %s0 = inlined_call_operand.vmem [shape: f32[2,8,32], index: 0, kind: input, shape index: {}]
  %s1 = inlined_call_operand.vmem [shape: bf16[96,32], index: 1, kind: input, shape index: {}]
  %s2 = inlined_call_operand.vmem [shape: f32[1,96], index: 2, kind: input, shape index: {}]
  %s3 = inlined_call_operand.vmem [shape: bf16[32,32], index: 3, kind: input, shape index: {}]
  %s4 = inlined_call_operand.vmem [shape: f32[1,32], index: 4, kind: input, shape index: {}, may-alias: {4,10,12}]
  %s5 = inlined_call_operand.vmem [shape: bf16[64,32], index: 5, kind: input, shape index: {}]
  %s6 = inlined_call_operand.vmem [shape: f32[1,64], index: 6, kind: input, shape index: {}]
  %s7 = inlined_call_operand.hbm [shape: bf16[32,64], index: 7, kind: input, shape index: {}]
  %s8 = inlined_call_operand.vmem [shape: f32[1,32], index: 8, kind: input, shape index: {}]
  %s9 = inlined_call_operand.vmem [shape: f32[1,32], index: 9, kind: input, shape index: {}, may-alias: {9,11}]
  %s10 = inlined_call_operand.vmem [shape: f32[1,32], index: 10, kind: input, shape index: {}, may-alias: {4,10,12}]
  %s11 = inlined_call_operand.vmem [shape: f32[1,32], index: 11, kind: input, shape index: {}, may-alias: {9,11}]
  %s12 = inlined_call_operand.vmem [shape: f32[1,32], index: 12, kind: input, shape index: {}, may-alias: {4,10,12}]
  %s13 = inlined_call_operand.vmem [shape: f32[2,8,32], index: 13, kind: output, shape index: {}]
  %s14 = sld [smem:[#allocation0]]
  $region89: #{simple_transformer_forward.3} parent=0
    _
  %s16 = ssub.s32 1, %s14
  %s17 = scalar_select 0, %s16, %s14
  $region1: #{simple_transformer_forward.3} parent=0
    #allocation2 [shape = 'u8[8192]{0}', space=vmem, size = 0x2000, scoped, tag = 'input window, operand 7, single buffered']
    #allocation3 [shape = 's32[2]{0}', space=sflag, size = 0x8, scoped, tag = 'scoped memory for simple_transformer_forward.3']
    %18 = vsyncpa [#allocation3], 0
    loop: start=0, step=1, limit=4
    $region2: #{simple_transformer_forward.3} parent=1 // loop_pre_header
      _
    $region3: #{simple_transformer_forward.3} parent=1 // loop_header
      %s20 = sphi 0, %s24
      %p21 = scmp.ge.s32.totalorder %s20, 4
      %s30 = sphi 0, %s32
      %s33 = sphi 0, %s30
      %s34 = sphi 0, %s33
      %s50 = sphi 0, %s34
      %s54 = sphi 0, %s54
      %s56 = sphi 0, %s54
      %s57 = sphi 0, %s56
      %s71 = sphi 0, %s57
      %s75 = sphi 0, %s75
      %s77 = sphi 0, %s75
      %s78 = sphi 0, %s77
      %s92 = sphi 0, %s78
      %s96 = sphi 0, %s96
      %s98 = sphi 0, %s96
      %s99 = sphi 0, %s98
      %s113 = sphi 0, %s99
      %s117 = sphi 0, %s117
      %s119 = sphi 0, %s117
      %s120 = sphi 0, %s119
      %s134 = sphi 0, %s120
      %s138 = sphi 0, %s138
      %s140 = sphi 0, %s138
      %s141 = sphi 0, %s140
      %s155 = sphi 0, %s141
      %s159 = sphi 0, %s159
      %s161 = sphi 0, %s159
      %s162 = sphi 0, %s161
      %s176 = sphi 0, %s162
      %s180 = sphi 0, %s180
      %s182 = sphi 0, %s180
      %s183 = sphi 0, %s182
      %s197 = sphi 0, %s183
      %s201 = sphi 0, %s201
      %s203 = sphi 0, %s201
      %s204 = sphi 0, %s203
      %s218 = sphi 0, %s204
      %s222 = sphi 0, %s222
      %s224 = sphi 0, %s222
      %s225 = sphi 0, %s224
      %s239 = sphi 0, %s225
      %s243 = sphi 0, %s243
      %s245 = sphi 0, %s243
      %s246 = sphi 0, %s245
      %s260 = sphi 0, %s246
      %s264 = sphi 0, %s264
      %s266 = sphi 0, %s264
      %s267 = sphi 0, %s266
      %s281 = sphi 0, %s267
      %s285 = sphi 0, %s285
      %s287 = sphi 0, %s285
      %s288 = sphi 0, %s287
      %s302 = sphi 0, %s288
      %s308 = sphi 0, %s310
      %s311 = sphi 0, %s308
      %s312 = sphi 0, %s311
      %s328 = sphi 0, %s312
    $region4: #{simple_transformer_forward.3} parent=1 // loop_header_branch
      %23 = sbr.rel (%p21) target = $region8
    $region5: #{simple_transformer_forward.3} parent=1 // loop_body
      %s25 = ssub.s32 %s20, 1
      %s26 = ssub.s32 %s20, 2
      %s27 = sadd.s32 %s20, 1
      %s28 = ssub.s32 %s20, %s27
      %p29 = scmp.eq.s32.totalorder %s28, 0
      %s31 = sadd.s32 %s30, 1
      %s32 = scalar_select %p29, %s30, %s31
      %p35 = pneg %p29
      %p36 = scmp.eq.s32.totalorder %s20, 1
      %p37 = por %p35, %p36
      %p38 = scmp.ne.s32.totalorder %s30, %s33
      %p39 = scmp.eq.s32.totalorder %s20, 0
      %p40 = por %p38, %p39
      %p41 = scmp.ne.s32.totalorder %s30, %s33
      %p42 = scmp.eq.s32.totalorder %s25, 1
      %p43 = por %p41, %p42
      %p44 = scmp.ne.s32.totalorder %s33, %s34
      %p45 = scmp.eq.s32.totalorder %s25, 0
      %p46 = por %p44, %p45
      %p47 = scmp.ne.s32.totalorder %s33, %s34
      %p48 = scmp.eq.s32.totalorder %s26, 1
      %p49 = por %p47, %p48
      %p51 = scmp.ne.s32.totalorder %s34, %s50
      %p52 = scmp.eq.s32.totalorder %s26, 0
      %p53 = por %p51, %p52
      %s55 = sadd.s32 %s54, 1
      %p58 = scmp.eq.s32.totalorder %s20, 1
      %p59 = scmp.ne.s32.totalorder %s54, %s56
      %p60 = scmp.eq.s32.totalorder %s20, 0
      %p61 = por %p59, %p60
      %p62 = scmp.ne.s32.totalorder %s54, %s56
      %p63 = scmp.eq.s32.totalorder %s25, 1
      %p64 = por %p62, %p63
      %p65 = scmp.ne.s32.totalorder %s56, %s57
      %p66 = scmp.eq.s32.totalorder %s25, 0
      %p67 = por %p65, %p66
      %p68 = scmp.ne.s32.totalorder %s56, %s57
      %p69 = scmp.eq.s32.totalorder %s26, 1
      %p70 = por %p68, %p69
      %p72 = scmp.ne.s32.totalorder %s57, %s71
      %p73 = scmp.eq.s32.totalorder %s26, 0
      %p74 = por %p72, %p73
      %s76 = sadd.s32 %s75, 1
      %p79 = scmp.eq.s32.totalorder %s20, 1
      %p80 = scmp.ne.s32.totalorder %s75, %s77
      %p81 = scmp.eq.s32.totalorder %s20, 0
      %p82 = por %p80, %p81
      %p83 = scmp.ne.s32.totalorder %s75, %s77
      %p84 = scmp.eq.s32.totalorder %s25, 1
      %p85 = por %p83, %p84
      %p86 = scmp.ne.s32.totalorder %s77, %s78
      %p87 = scmp.eq.s32.totalorder %s25, 0
      %p88 = por %p86, %p87
      %p89 = scmp.ne.s32.totalorder %s77, %s78
      %p90 = scmp.eq.s32.totalorder %s26, 1
      %p91 = por %p89, %p90
      %p93 = scmp.ne.s32.totalorder %s78, %s92
      %p94 = scmp.eq.s32.totalorder %s26, 0
      %p95 = por %p93, %p94
      %s97 = sadd.s32 %s96, 1
      %p100 = scmp.eq.s32.totalorder %s20, 1
      %p101 = scmp.ne.s32.totalorder %s96, %s98
      %p102 = scmp.eq.s32.totalorder %s20, 0
      %p103 = por %p101, %p102
      %p104 = scmp.ne.s32.totalorder %s96, %s98
      %p105 = scmp.eq.s32.totalorder %s25, 1
      %p106 = por %p104, %p105
      %p107 = scmp.ne.s32.totalorder %s98, %s99
      %p108 = scmp.eq.s32.totalorder %s25, 0
      %p109 = por %p107, %p108
      %p110 = scmp.ne.s32.totalorder %s98, %s99
      %p111 = scmp.eq.s32.totalorder %s26, 1
      %p112 = por %p110, %p111
      %p114 = scmp.ne.s32.totalorder %s99, %s113
      %p115 = scmp.eq.s32.totalorder %s26, 0
      %p116 = por %p114, %p115
      %s118 = sadd.s32 %s117, 1
      %p121 = scmp.eq.s32.totalorder %s20, 1
      %p122 = scmp.ne.s32.totalorder %s117, %s119
      %p123 = scmp.eq.s32.totalorder %s20, 0
      %p124 = por %p122, %p123
      %p125 = scmp.ne.s32.totalorder %s117, %s119
      %p126 = scmp.eq.s32.totalorder %s25, 1
      %p127 = por %p125, %p126
      %p128 = scmp.ne.s32.totalorder %s119, %s120
      %p129 = scmp.eq.s32.totalorder %s25, 0
      %p130 = por %p128, %p129
      %p131 = scmp.ne.s32.totalorder %s119, %s120
      %p132 = scmp.eq.s32.totalorder %s26, 1
      %p133 = por %p131, %p132
      %p135 = scmp.ne.s32.totalorder %s120, %s134
      %p136 = scmp.eq.s32.totalorder %s26, 0
      %p137 = por %p135, %p136
      %s139 = sadd.s32 %s138, 1
      %p142 = scmp.eq.s32.totalorder %s20, 1
      %p143 = scmp.ne.s32.totalorder %s138, %s140
      %p144 = scmp.eq.s32.totalorder %s20, 0
      %p145 = por %p143, %p144
      %p146 = scmp.ne.s32.totalorder %s138, %s140
      %p147 = scmp.eq.s32.totalorder %s25, 1
      %p148 = por %p146, %p147
      %p149 = scmp.ne.s32.totalorder %s140, %s141
      %p150 = scmp.eq.s32.totalorder %s25, 0
      %p151 = por %p149, %p150
      %p152 = scmp.ne.s32.totalorder %s140, %s141
      %p153 = scmp.eq.s32.totalorder %s26, 1
      %p154 = por %p152, %p153
      %p156 = scmp.ne.s32.totalorder %s141, %s155
      %p157 = scmp.eq.s32.totalorder %s26, 0
      %p158 = por %p156, %p157
      %s160 = sadd.s32 %s159, 1
      %p163 = scmp.eq.s32.totalorder %s20, 1
      %p164 = scmp.ne.s32.totalorder %s159, %s161
      %p165 = scmp.eq.s32.totalorder %s20, 0
      %p166 = por %p164, %p165
      %p167 = scmp.ne.s32.totalorder %s159, %s161
      %p168 = scmp.eq.s32.totalorder %s25, 1
      %p169 = por %p167, %p168
      %p170 = scmp.ne.s32.totalorder %s161, %s162
      %p171 = scmp.eq.s32.totalorder %s25, 0
      %p172 = por %p170, %p171
      %p173 = scmp.ne.s32.totalorder %s161, %s162
      %p174 = scmp.eq.s32.totalorder %s26, 1
      %p175 = por %p173, %p174
      %p177 = scmp.ne.s32.totalorder %s162, %s176
      %p178 = scmp.eq.s32.totalorder %s26, 0
      %p179 = por %p177, %p178
      %s181 = sadd.s32 %s180, 1
      %p184 = scmp.eq.s32.totalorder %s20, 1
      %p185 = scmp.ne.s32.totalorder %s180, %s182
      %p186 = scmp.eq.s32.totalorder %s20, 0
      %p187 = por %p185, %p186
      %p188 = scmp.ne.s32.totalorder %s180, %s182
      %p189 = scmp.eq.s32.totalorder %s25, 1
      %p190 = por %p188, %p189
      %p191 = scmp.ne.s32.totalorder %s182, %s183
      %p192 = scmp.eq.s32.totalorder %s25, 0
      %p193 = por %p191, %p192
      %p194 = scmp.ne.s32.totalorder %s182, %s183
      %p195 = scmp.eq.s32.totalorder %s26, 1
      %p196 = por %p194, %p195
      %p198 = scmp.ne.s32.totalorder %s183, %s197
      %p199 = scmp.eq.s32.totalorder %s26, 0
      %p200 = por %p198, %p199
      %s202 = sadd.s32 %s201, 1
      %p205 = scmp.eq.s32.totalorder %s20, 1
      %p206 = scmp.ne.s32.totalorder %s201, %s203
      %p207 = scmp.eq.s32.totalorder %s20, 0
      %p208 = por %p206, %p207
      %p209 = scmp.ne.s32.totalorder %s201, %s203
      %p210 = scmp.eq.s32.totalorder %s25, 1
      %p211 = por %p209, %p210
      %p212 = scmp.ne.s32.totalorder %s203, %s204
      %p213 = scmp.eq.s32.totalorder %s25, 0
      %p214 = por %p212, %p213
      %p215 = scmp.ne.s32.totalorder %s203, %s204
      %p216 = scmp.eq.s32.totalorder %s26, 1
      %p217 = por %p215, %p216
      %p219 = scmp.ne.s32.totalorder %s204, %s218
      %p220 = scmp.eq.s32.totalorder %s26, 0
      %p221 = por %p219, %p220
      %s223 = sadd.s32 %s222, 1
      %p226 = scmp.eq.s32.totalorder %s20, 1
      %p227 = scmp.ne.s32.totalorder %s222, %s224
      %p228 = scmp.eq.s32.totalorder %s20, 0
      %p229 = por %p227, %p228
      %p230 = scmp.ne.s32.totalorder %s222, %s224
      %p231 = scmp.eq.s32.totalorder %s25, 1
      %p232 = por %p230, %p231
      %p233 = scmp.ne.s32.totalorder %s224, %s225
      %p234 = scmp.eq.s32.totalorder %s25, 0
      %p235 = por %p233, %p234
      %p236 = scmp.ne.s32.totalorder %s224, %s225
      %p237 = scmp.eq.s32.totalorder %s26, 1
      %p238 = por %p236, %p237
      %p240 = scmp.ne.s32.totalorder %s225, %s239
      %p241 = scmp.eq.s32.totalorder %s26, 0
      %p242 = por %p240, %p241
      %s244 = sadd.s32 %s243, 1
      %p247 = scmp.eq.s32.totalorder %s20, 1
      %p248 = scmp.ne.s32.totalorder %s243, %s245
      %p249 = scmp.eq.s32.totalorder %s20, 0
      %p250 = por %p248, %p249
      %p251 = scmp.ne.s32.totalorder %s243, %s245
      %p252 = scmp.eq.s32.totalorder %s25, 1
      %p253 = por %p251, %p252
      %p254 = scmp.ne.s32.totalorder %s245, %s246
      %p255 = scmp.eq.s32.totalorder %s25, 0
      %p256 = por %p254, %p255
      %p257 = scmp.ne.s32.totalorder %s245, %s246
      %p258 = scmp.eq.s32.totalorder %s26, 1
      %p259 = por %p257, %p258
      %p261 = scmp.ne.s32.totalorder %s246, %s260
      %p262 = scmp.eq.s32.totalorder %s26, 0
      %p263 = por %p261, %p262
      %s265 = sadd.s32 %s264, 1
      %p268 = scmp.eq.s32.totalorder %s20, 1
      %p269 = scmp.ne.s32.totalorder %s264, %s266
      %p270 = scmp.eq.s32.totalorder %s20, 0
      %p271 = por %p269, %p270
      %p272 = scmp.ne.s32.totalorder %s264, %s266
      %p273 = scmp.eq.s32.totalorder %s25, 1
      %p274 = por %p272, %p273
      %p275 = scmp.ne.s32.totalorder %s266, %s267
      %p276 = scmp.eq.s32.totalorder %s25, 0
      %p277 = por %p275, %p276
      %p278 = scmp.ne.s32.totalorder %s266, %s267
      %p279 = scmp.eq.s32.totalorder %s26, 1
      %p280 = por %p278, %p279
      %p282 = scmp.ne.s32.totalorder %s267, %s281
      %p283 = scmp.eq.s32.totalorder %s26, 0
      %p284 = por %p282, %p283
      %s286 = sadd.s32 %s285, 1
      %p289 = scmp.eq.s32.totalorder %s20, 1
      %p290 = scmp.ne.s32.totalorder %s285, %s287
      %p291 = scmp.eq.s32.totalorder %s20, 0
      %p292 = por %p290, %p291
      %p293 = scmp.ne.s32.totalorder %s285, %s287
      %p294 = scmp.eq.s32.totalorder %s25, 1
      %p295 = por %p293, %p294
      %p296 = scmp.ne.s32.totalorder %s287, %s288
      %p297 = scmp.eq.s32.totalorder %s25, 0
      %p298 = por %p296, %p297
      %p299 = scmp.ne.s32.totalorder %s287, %s288
      %p300 = scmp.eq.s32.totalorder %s26, 1
      %p301 = por %p299, %p300
      %p303 = scmp.ne.s32.totalorder %s288, %s302
      %p304 = scmp.eq.s32.totalorder %s26, 0
      %p305 = por %p303, %p304
      %s306 = ssub.s32 %s20, %s27
      %p307 = scmp.eq.s32.totalorder %s306, 0
      %s309 = sadd.s32 %s308, 1
      %s310 = scalar_select %p307, %s308, %s309
      %p313 = pneg %p307
      %p314 = scmp.eq.s32.totalorder %s20, 1
      %p315 = por %p313, %p314
      %p316 = scmp.ne.s32.totalorder %s308, %s311
      %p317 = scmp.eq.s32.totalorder %s20, 0
      %p318 = por %p316, %p317
      %p319 = scmp.ne.s32.totalorder %s308, %s311
      %p320 = scmp.eq.s32.totalorder %s25, 1
      %p321 = por %p319, %p320
      %p322 = scmp.ne.s32.totalorder %s311, %s312
      %p323 = scmp.eq.s32.totalorder %s25, 0
      %p324 = por %p322, %p323
      %p325 = scmp.ne.s32.totalorder %s311, %s312
      %p326 = scmp.eq.s32.totalorder %s26, 1
      %p327 = por %p325, %p326
      %p329 = scmp.ne.s32.totalorder %s312, %s328
      %p330 = scmp.eq.s32.totalorder %s26, 0
      %p331 = por %p329, %p330
      %p332 = scmp.le.s32.totalorder 1, %s20
      %p333 = scmp.lt.s32.totalorder %s20, 3
      %p334 = pnand %p332, %p333
      %p335 = pneg %p334
      // Predicated region
      $region9: #{simple_transformer_forward.3} parent=5 // pred_check
        _
      $region10: #{simple_transformer_forward.3} parent=5 // pred_check_branch
        %337 = sbr.rel (%p334) target = $region12
      $region11: #{simple_transformer_forward.3} parent=5 // pred_region
        %s338 = ssub.s32 %s20, 1
        // Predicated region
        $region13: #{simple_transformer_forward.3} parent=11 // pred_check
          %p339 = pneg %p67
        $region14: #{simple_transformer_forward.3} parent=11 // pred_check_branch
          %341 = sbr.rel (%p339) target = $region16
        $region15: #{simple_transformer_forward.3} parent=11 // pred_region
          _
        $region16: #{simple_transformer_forward.3} parent=11 // pred_fallthru
          _
        // Predicated region
        $region17: #{simple_transformer_forward.3} parent=11 // pred_check
          %p342 = pneg %p88
        $region18: #{simple_transformer_forward.3} parent=11 // pred_check_branch
          %344 = sbr.rel (%p342) target = $region20
        $region19: #{simple_transformer_forward.3} parent=11 // pred_region
          _
        $region20: #{simple_transformer_forward.3} parent=11 // pred_fallthru
          _
        // Predicated region
        $region21: #{simple_transformer_forward.3} parent=11 // pred_check
          %p345 = pneg %p109
        $region22: #{simple_transformer_forward.3} parent=11 // pred_check_branch
          %347 = sbr.rel (%p345) target = $region24
        $region23: #{simple_transformer_forward.3} parent=11 // pred_region
          _
        $region24: #{simple_transformer_forward.3} parent=11 // pred_fallthru
          _
        // Predicated region
        $region25: #{simple_transformer_forward.3} parent=11 // pred_check
          %p348 = pneg %p130
        $region26: #{simple_transformer_forward.3} parent=11 // pred_check_branch
          %350 = sbr.rel (%p348) target = $region28
        $region27: #{simple_transformer_forward.3} parent=11 // pred_region
          _
        $region28: #{simple_transformer_forward.3} parent=11 // pred_fallthru
          _
        // Predicated region
        $region29: #{simple_transformer_forward.3} parent=11 // pred_check
          %p351 = pneg %p151
        $region30: #{simple_transformer_forward.3} parent=11 // pred_check_branch
          %353 = sbr.rel (%p351) target = $region32
        $region31: #{simple_transformer_forward.3} parent=11 // pred_region
          _
        $region32: #{simple_transformer_forward.3} parent=11 // pred_fallthru
          _
        // Predicated region
        $region33: #{simple_transformer_forward.3} parent=11 // pred_check
          %p354 = pneg %p172
        $region34: #{simple_transformer_forward.3} parent=11 // pred_check_branch
          %356 = sbr.rel (%p354) target = $region36
        $region35: #{simple_transformer_forward.3} parent=11 // pred_region
          _
        $region36: #{simple_transformer_forward.3} parent=11 // pred_fallthru
          _
        // Predicated region
        $region37: #{simple_transformer_forward.3} parent=11 // pred_check
          %p357 = pneg %p193
        $region38: #{simple_transformer_forward.3} parent=11 // pred_check_branch
          %359 = sbr.rel (%p357) target = $region40
        $region39: #{simple_transformer_forward.3} parent=11 // pred_region
          %361 = vsyncadd [#allocation3], 0
          %s362 = sshll.u32 %s7, 4
          %s363 = int_to_ptr.hbm [resolvable:$true] %s362
          %s364 = sshll.u32 [#allocation2], 4
          %s365 = int_to_ptr.vmem [resolvable:$true] %s364
          %370 = dma.hbm_to_vmem [thread:$0]  %s363, 256, %s365, [#allocation3], 64, 64, 4
        $region40: #{simple_transformer_forward.3} parent=11 // pred_fallthru
          _
        // Predicated region
        $region41: #{simple_transformer_forward.3} parent=11 // pred_check
          %p371 = pneg %p214
        $region42: #{simple_transformer_forward.3} parent=11 // pred_check_branch
          %373 = sbr.rel (%p371) target = $region44
        $region43: #{simple_transformer_forward.3} parent=11 // pred_region
          _
        $region44: #{simple_transformer_forward.3} parent=11 // pred_fallthru
          _
        // Predicated region
        $region45: #{simple_transformer_forward.3} parent=11 // pred_check
          %p374 = pneg %p235
        $region46: #{simple_transformer_forward.3} parent=11 // pred_check_branch
          %376 = sbr.rel (%p374) target = $region48
        $region47: #{simple_transformer_forward.3} parent=11 // pred_region
          _
        $region48: #{simple_transformer_forward.3} parent=11 // pred_fallthru
          _
        // Predicated region
        $region49: #{simple_transformer_forward.3} parent=11 // pred_check
          %p377 = pneg %p256
        $region50: #{simple_transformer_forward.3} parent=11 // pred_check_branch
          %379 = sbr.rel (%p377) target = $region52
        $region51: #{simple_transformer_forward.3} parent=11 // pred_region
          _
        $region52: #{simple_transformer_forward.3} parent=11 // pred_fallthru
          _
        // Predicated region
        $region53: #{simple_transformer_forward.3} parent=11 // pred_check
          %p380 = pneg %p277
        $region54: #{simple_transformer_forward.3} parent=11 // pred_check_branch
          %382 = sbr.rel (%p380) target = $region56
        $region55: #{simple_transformer_forward.3} parent=11 // pred_region
          _
        $region56: #{simple_transformer_forward.3} parent=11 // pred_fallthru
          _
        // Predicated region
        $region57: #{simple_transformer_forward.3} parent=11 // pred_check
          %p383 = pneg %p298
        $region58: #{simple_transformer_forward.3} parent=11 // pred_check_branch
          %385 = sbr.rel (%p383) target = $region60
        $region59: #{simple_transformer_forward.3} parent=11 // pred_region
          _
        $region60: #{simple_transformer_forward.3} parent=11 // pred_fallthru
          _
      $region12: #{simple_transformer_forward.3} parent=5 // pred_fallthru
        _
      %p386 = scmp.lt.s32.totalorder %s20, 2
      // Predicated region
      $region61: #{simple_transformer_forward.3} parent=5 // pred_check
        %p387 = pneg %p386
      $region62: #{simple_transformer_forward.3} parent=5 // pred_check_branch
        %389 = sbr.rel (%p387) target = $region64
      $region63: #{simple_transformer_forward.3} parent=5 // pred_region
        // Predicated region
        $region65: #{simple_transformer_forward.3} parent=63 // pred_check
          %p390 = pneg %p40
        $region66: #{simple_transformer_forward.3} parent=63 // pred_check_branch
          %392 = sbr.rel (%p390) target = $region68
        $region67: #{simple_transformer_forward.3} parent=63 // pred_region
          %p393 = scmp.lt.s32.totalorder %s20, 1
          %s394 = scalar_select %p393, %s20, 1
          %s395 = smul.addr %s394, 8
          %s396 = scalar_lea.vmem %s0, %s395
        $region68: #{simple_transformer_forward.3} parent=63 // pred_fallthru
          _
      $region64: #{simple_transformer_forward.3} parent=5 // pred_fallthru
        _
      %p397 = scmp.le.s32.totalorder 1, %s20
      %p398 = scmp.lt.s32.totalorder %s20, 3
      %p399 = pnand %p397, %p398
      %p400 = pneg %p399
      // Predicated region
      $region69: #{simple_transformer_forward.3} parent=5 // pred_check
        _
      $region70: #{simple_transformer_forward.3} parent=5 // pred_check_branch
        %402 = sbr.rel (%p399) target = $region72
      $region71: #{simple_transformer_forward.3} parent=5 // pred_region
        %s403 = ssub.s32 %s20, 1
        // Predicated region
        $region73: #{simple_transformer_forward.3} parent=71 // pred_check
          %p404 = pneg %p193
        $region74: #{simple_transformer_forward.3} parent=71 // pred_check_branch
          %406 = sbr.rel (%p404) target = $region76
        $region75: #{simple_transformer_forward.3} parent=71 // pred_region
          %408 = dma.done [#allocation3], 256
        $region76: #{simple_transformer_forward.3} parent=71 // pred_fallthru
          _
        %p409 = scmp.lt.s32.totalorder %s25, 1
        %s410 = scalar_select %p409, %s25, 1
        %s411 = smul.addr %s410, 8
        %s412 = scalar_lea.vmem %s0, %s411
        %p413 = pneg %p46
        %p414 = pneg %p43
        %p415 = pneg %p67
        %p416 = pneg %p64
        %p417 = pneg %p88
        %p418 = pneg %p85
        %p419 = pneg %p109
        %p420 = pneg %p106
        %p421 = pneg %p130
        %p422 = pneg %p127
        %p423 = pneg %p151
        %p424 = pneg %p148
        %p425 = pneg %p172
        %p426 = pneg %p169
        %p427 = pneg %p193
        %p428 = pneg %p190
        %p429 = pneg %p214
        %p430 = pneg %p211
        %p431 = pneg %p235
        %p432 = pneg %p232
        %p433 = pneg %p256
        %p434 = pneg %p253
        %p435 = pneg %p277
        %p436 = pneg %p274
        %p437 = pneg %p298
        %p438 = pneg %p295
        %p439 = pneg %p324
        %p440 = pneg %p321
        %p441 = scmp.lt.s32.totalorder %s25, 1
        %s442 = scalar_select %p441, %s25, 1
        %s443 = smul.addr %s442, 8
        %s444 = scalar_lea.vmem %s13, %s443
        %p445 = scmp.lt.s32.totalorder %s25, 1
        %s446 = scalar_select %p445, %s25, 1
        %s447 = smul.addr %s446, 8
        %s448 = scalar_lea.vmem %s0, %s447
        %p449 = scmp.lt.s32.totalorder %s25, 1
        %s450 = scalar_select %p449, %s25, 1
        %s451 = smul.addr %s450, 8
        %s452 = scalar_lea.vmem %s13, %s451
        %v454 = vld [vmem:[%s448] sm:$0xff]
        %v455 = vld [vmem:[%s1] sm:$0xf]
        %v456 = vld [vmem:[%s1 + $0x4] sm:$0xf]
        %v457 = vld [vmem:[%s1 + $0x8] sm:$0xf]
        %v458 = vld [vmem:[%s1 + $0xc] sm:$0xf]
        %v459 = vld [vmem:[%s1 + $0x10] sm:$0xf]
        %v460 = vld [vmem:[%s1 + $0x14] sm:$0xf]
        %v461 = vld [vmem:[%s1 + $0x18] sm:$0xf]
        %v462 = vld [vmem:[%s1 + $0x1c] sm:$0xf]
        %v463 = vld [vmem:[%s1 + $0x20] sm:$0xf]
        %v464 = vld [vmem:[%s1 + $0x24] sm:$0xf]
        %v465 = vld [vmem:[%s1 + $0x28] sm:$0xf]
        %v466 = vld [vmem:[%s1 + $0x2c] sm:$0xf]
        %v467 = vpack.c.bf16 %v454, %v454
        %v468 = vld [vmem:[%s2] sm:$0x1]
        %v470 = vperm.slane %v468, 0
        %v484 = vunpack.c.l.b16 %v455
        %v485 = vunpack.c.l.b16 %v456
        %v486 = vunpack.c.l.b16 %v457
        %v487 = vunpack.c.l.b16 %v458
        %v488 = vunpack.c.l.b16 %v459
        %v489 = vunpack.c.l.b16 %v460
        %v490 = vunpack.c.l.b16 %v461
        %v491 = vunpack.c.l.b16 %v462
        %v492 = vunpack.c.l.b16 %v463
        %v493 = vunpack.c.l.b16 %v464
        %v494 = vunpack.c.l.b16 %v465
        %v495 = vunpack.c.l.b16 %v466
        %v496 = vpack.c.b16 %v485, %v484
        %v497 = vpack.c.b16 %v487, %v486
        %v498 = vpack.c.b16 %v489, %v488
        %v499 = vpack.c.b16 %v491, %v490
        %v500 = vpack.c.b16 %v493, %v492
        %v501 = vpack.c.b16 %v495, %v494
        %vm502 = vcmask 261120
        %v504 = vsel %vm502, %v467, 0
        %v507 = vsel %vm502, %v496, 0
        %v510 = vsel %vm502, %v497, 0
        %v513 = vsel %vm502, %v498, 0
        %v516 = vsel %vm502, %v499, 0
        %v519 = vsel %vm502, %v500, 0
        %v522 = vsel %vm502, %v501, 0
        %524 = vmatpush.bf16.xpose.msra.mxu0 0
        %525 = vmatpush.bf16.xpose.msra.mxu0 0
        %526 = vmatpush.bf16.xpose.msra.mxu0 %v522
        %527 = vmatpush.bf16.xpose.msra.mxu0 %v519
        %528 = vmatpush.bf16.xpose.msra.mxu0 %v516
        %529 = vmatpush.bf16.xpose.msra.mxu0 %v513
        %530 = vmatpush.bf16.xpose.msra.mxu0 %v510
        %531 = vmatpush.bf16.xpose.msra.mxu0 %v507
        %532 = vmatmul.bf16.gmra.mxu0 %v504
        %v533 = vpop.f32.mrf.mxu0
        %v534 = vadd.f32 %v470, %v533
        %v535 = vpop.f32.mrf.mxu0
        %536 = vdwg.mxu0
        %v537 = vld [vmem:[%s3] sm:$0xf]
        %v538 = vld [vmem:[%s3 + $0x4] sm:$0xf]
        %v539 = vld [vmem:[%s3 + $0x8] sm:$0xf]
        %v540 = vld [vmem:[%s3 + $0xc] sm:$0xf]
        %v541 = vpack.c.bf16 %v534, %v534
        %543 = vrot.lane.b32.xlu0 %v541, 96
        %v544 = vpop.permute.xlu0 %543
        %vm545 = vcmask 64512
        %v547 = vsel %vm545, %v541, 0
        %v550 = vsel %vm545, %v544, 0
        %552 = vmatpush.bf16.xpose.msra.mxu0 0
        %553 = vmatpush.bf16.xpose.msra.mxu0 0
        %554 = vmatpush.bf16.xpose.msra.mxu0 0
        %555 = vmatpush.bf16.xpose.msra.mxu0 0
        %556 = vmatpush.bf16.xpose.msra.mxu0 0
        %557 = vmatpush.bf16.xpose.msra.mxu0 0
        %558 = vmatpush.bf16.xpose.msra.mxu0 0
        %559 = vmatpush.bf16.xpose.msra.mxu0 %v550
        %560 = vmatmul.bf16.gmra.mxu0 %v547
        %v561 = vpop.f32.mrf.mxu0
        %v562 = vadd.f32 0.0, %v561
        %v563 = vpop.f32.mrf.mxu0
        %564 = vdwg.mxu0
        %v565 = vmul.f32 %v562, 0.35355338
        %v566 = vsel %vm545, %v565, -inf
        %567 = vmax.xlane.f32.xlu0 %v566
        %v568 = vpop.xlane.xlu0 %567
        %v569 = vsub.f32 %v565, %v568
        %v570 = vmul.f32 %v569, 1.442695
        %v571 = vpow.pop %v570
        %v572 = vsel %vm545, %v571, 0.0
        %573 = vadd.xlane.f32.xlu0 %v572
        %v574 = vpop.xlane.xlu0 %573
        %v575 = vrcp.pop %v574
        %v576 = vmul.f32 %v571, %v575
        %v577 = vpack.c.bf16 %v576, %v576
        %578 = vrot.lane.b32.xlu0 %v541, 64
        %v579 = vpop.permute.xlu0 %578
        %v581 = vsel %vm545, %v577, 0
        %vm583 = vcmask 1043456
        %v585 = vsel %vm583, %v579, 0
        %587 = vmatpush.bf16.msra.mxu0 0
        %588 = vmatpush.bf16.msra.mxu0 0
        %589 = vmatpush.bf16.msra.mxu0 0
        %590 = vmatpush.bf16.msra.mxu0 0
        %591 = vmatpush.bf16.msra.mxu0 0
        %592 = vmatpush.bf16.msra.mxu0 0
        %593 = vmatpush.bf16.msra.mxu0 0
        %594 = vmatpush.bf16.msra.mxu0 %v585
        %595 = vmatmul.bf16.gmra.mxu0 %v581
        %v596 = vpop.f32.mrf.mxu0
        %v597 = vadd.f32 0.0, %v596
        %v598 = vpop.f32.mrf.mxu0
        %599 = vdwg.mxu0
        %v600 = vpack.c.bf16 %v597, %v597
        %601 = vrot.lane.b32.xlu0 %v541, 120
        %v602 = vpop.permute.xlu0 %601
        %603 = vrot.lane.b32.xlu0 %v541, 88
        %v604 = vpop.permute.xlu0 %603
        %v606 = vsel %vm545, %v602, 0
        %v609 = vsel %vm545, %v604, 0
        %611 = vmatpush.bf16.xpose.msra.mxu0 0
        %612 = vmatpush.bf16.xpose.msra.mxu0 0
        %613 = vmatpush.bf16.xpose.msra.mxu0 0
        %614 = vmatpush.bf16.xpose.msra.mxu0 0
        %615 = vmatpush.bf16.xpose.msra.mxu0 0
        %616 = vmatpush.bf16.xpose.msra.mxu0 0
        %617 = vmatpush.bf16.xpose.msra.mxu0 0
        %618 = vmatpush.bf16.xpose.msra.mxu0 %v609
        %619 = vmatmul.bf16.gmra.mxu0 %v606
        %v620 = vpop.f32.mrf.mxu0
        %v621 = vadd.f32 0.0, %v620
        %v622 = vpop.f32.mrf.mxu0
        %623 = vdwg.mxu0
        %v624 = vmul.f32 %v621, 0.35355338
        %v625 = vsel %vm545, %v624, -inf
        %626 = vmax.xlane.f32.xlu0 %v625
        %v627 = vpop.xlane.xlu0 %626
        %v628 = vsub.f32 %v624, %v627
        %v629 = vmul.f32 %v628, 1.442695
        %v630 = vpow.pop %v629
        %v631 = vsel %vm545, %v630, 0.0
        %632 = vadd.xlane.f32.xlu0 %v631
        %v633 = vpop.xlane.xlu0 %632
        %v634 = vrcp.pop %v633
        %v635 = vmul.f32 %v630, %v634
        %v636 = vpack.c.bf16 %v635, %v635
        %637 = vrot.lane.b32.xlu0 %v541, 56
        %v638 = vpop.permute.xlu0 %637
        %v640 = vsel %vm545, %v636, 0
        %v643 = vsel %vm583, %v638, 0
        %645 = vmatpush.bf16.msra.mxu0 0
        %646 = vmatpush.bf16.msra.mxu0 0
        %647 = vmatpush.bf16.msra.mxu0 0
        %648 = vmatpush.bf16.msra.mxu0 0
        %649 = vmatpush.bf16.msra.mxu0 0
        %650 = vmatpush.bf16.msra.mxu0 0
        %651 = vmatpush.bf16.msra.mxu0 0
        %652 = vmatpush.bf16.msra.mxu0 %v643
        %653 = vmatmul.bf16.gmra.mxu0 %v640
        %v654 = vpop.f32.mrf.mxu0
        %v655 = vadd.f32 0.0, %v654
        %v656 = vpop.f32.mrf.mxu0
        %657 = vdwg.mxu0
        %v658 = vpack.c.bf16 %v655, %v655
        %v663 = vunpack.c.l.b16 %v537
        %v664 = vunpack.c.l.b16 %v538
        %v665 = vunpack.c.l.b16 %v539
        %v666 = vunpack.c.l.b16 %v540
        %v667 = vpack.c.b16 %v664, %v663
        %v668 = vpack.c.b16 %v666, %v665
        %669 = vrot.lane.b32.xlu0 %v667, 120
        %v670 = vpop.permute.xlu0 %669
        %671 = vrot.lane.b32.xlu0 %v668, 120
        %v672 = vpop.permute.xlu0 %671
        %v674 = vsel %vm545, %v658, 0
        %v677 = vsel %vm545, %v670, 0
        %v680 = vsel %vm545, %v672, 0
        %682 = vmatpush.bf16.xpose.msra.mxu0 0
        %683 = vmatpush.bf16.xpose.msra.mxu0 0
        %684 = vmatpush.bf16.xpose.msra.mxu0 0
        %685 = vmatpush.bf16.xpose.msra.mxu0 0
        %686 = vmatpush.bf16.xpose.msra.mxu0 0
        %687 = vmatpush.bf16.xpose.msra.mxu0 0
        %688 = vmatpush.bf16.xpose.msra.mxu0 %v680
        %689 = vmatpush.bf16.xpose.msra.mxu0 %v677
        %690 = vmatmul.bf16.gmra.mxu0 %v674
        %v691 = vpop.f32.mrf.mxu0
        %v692 = vadd.f32 0.0, %v691
        %v693 = vpop.f32.mrf.mxu0
        %694 = vdwg.mxu0
        %v696 = vsel %vm545, %v600, 0
        %v699 = vsel %vm545, %v667, 0
        %v702 = vsel %vm545, %v668, 0
        %704 = vmatpush.bf16.xpose.msra.mxu0 0
        %705 = vmatpush.bf16.xpose.msra.mxu0 0
        %706 = vmatpush.bf16.xpose.msra.mxu0 0
        %707 = vmatpush.bf16.xpose.msra.mxu0 0
        %708 = vmatpush.bf16.xpose.msra.mxu0 0
        %709 = vmatpush.bf16.xpose.msra.mxu0 0
        %710 = vmatpush.bf16.xpose.msra.mxu0 %v702
        %711 = vmatpush.bf16.xpose.msra.mxu0 %v699
        %712 = vmatmul.bf16.gmra.mxu0 %v696
        %v713 = vpop.f32.mrf.mxu0
        %v714 = vadd.f32 %v692, %v713
        %v715 = vpop.f32.mrf.mxu0
        %716 = vdwg.mxu0
        %717 = vrot.lane.b32.xlu0 %v541, 112
        %v718 = vpop.permute.xlu0 %717
        %719 = vrot.lane.b32.xlu0 %v541, 80
        %v720 = vpop.permute.xlu0 %719
        %v722 = vsel %vm545, %v718, 0
        %v725 = vsel %vm545, %v720, 0
        %727 = vmatpush.bf16.xpose.msra.mxu0 0
        %728 = vmatpush.bf16.xpose.msra.mxu0 0
        %729 = vmatpush.bf16.xpose.msra.mxu0 0
        %730 = vmatpush.bf16.xpose.msra.mxu0 0
        %731 = vmatpush.bf16.xpose.msra.mxu0 0
        %732 = vmatpush.bf16.xpose.msra.mxu0 0
        %733 = vmatpush.bf16.xpose.msra.mxu0 0
        %734 = vmatpush.bf16.xpose.msra.mxu0 %v725
        %735 = vmatmul.bf16.gmra.mxu0 %v722
        %v736 = vpop.f32.mrf.mxu0
        %v737 = vadd.f32 0.0, %v736
        %v738 = vpop.f32.mrf.mxu0
        %739 = vdwg.mxu0
        %v740 = vmul.f32 %v737, 0.35355338
        %v741 = vsel %vm545, %v740, -inf
        %742 = vmax.xlane.f32.xlu0 %v741
        %v743 = vpop.xlane.xlu0 %742
        %v744 = vsub.f32 %v740, %v743
        %v745 = vmul.f32 %v744, 1.442695
        %v746 = vpow.pop %v745
        %v747 = vsel %vm545, %v746, 0.0
        %748 = vadd.xlane.f32.xlu0 %v747
        %v749 = vpop.xlane.xlu0 %748
        %v750 = vrcp.pop %v749
        %v751 = vmul.f32 %v746, %v750
        %v752 = vpack.c.bf16 %v751, %v751
        %753 = vrot.lane.b32.xlu0 %v541, 48
        %v754 = vpop.permute.xlu0 %753
        %v756 = vsel %vm545, %v752, 0
        %v759 = vsel %vm583, %v754, 0
        %761 = vmatpush.bf16.msra.mxu0 0
        %762 = vmatpush.bf16.msra.mxu0 0
        %763 = vmatpush.bf16.msra.mxu0 0
        %764 = vmatpush.bf16.msra.mxu0 0
        %765 = vmatpush.bf16.msra.mxu0 0
        %766 = vmatpush.bf16.msra.mxu0 0
        %767 = vmatpush.bf16.msra.mxu0 0
        %768 = vmatpush.bf16.msra.mxu0 %v759
        %769 = vmatmul.bf16.gmra.mxu0 %v756
        %v770 = vpop.f32.mrf.mxu0
        %v771 = vadd.f32 0.0, %v770
        %v772 = vpop.f32.mrf.mxu0
        %773 = vdwg.mxu0
        %v774 = vpack.c.bf16 %v771, %v771
        %775 = vrot.lane.b32.xlu0 %v667, 112
        %v776 = vpop.permute.xlu0 %775
        %777 = vrot.lane.b32.xlu0 %v668, 112
        %v778 = vpop.permute.xlu0 %777
        %v780 = vsel %vm545, %v774, 0
        %v783 = vsel %vm545, %v776, 0
        %v786 = vsel %vm545, %v778, 0
        %788 = vmatpush.bf16.xpose.msra.mxu0 0
        %789 = vmatpush.bf16.xpose.msra.mxu0 0
        %790 = vmatpush.bf16.xpose.msra.mxu0 0
        %791 = vmatpush.bf16.xpose.msra.mxu0 0
        %792 = vmatpush.bf16.xpose.msra.mxu0 0
        %793 = vmatpush.bf16.xpose.msra.mxu0 0
        %794 = vmatpush.bf16.xpose.msra.mxu0 %v786
        %795 = vmatpush.bf16.xpose.msra.mxu0 %v783
        %796 = vmatmul.bf16.gmra.mxu0 %v780
        %v797 = vpop.f32.mrf.mxu0
        %v798 = vadd.f32 0.0, %v797
        %v799 = vpop.f32.mrf.mxu0
        %800 = vdwg.mxu0
        %v801 = vadd.f32 %v714, %v798
        %802 = vrot.lane.b32.xlu0 %v541, 104
        %v803 = vpop.permute.xlu0 %802
        %804 = vrot.lane.b32.xlu0 %v541, 72
        %v805 = vpop.permute.xlu0 %804
        %v807 = vsel %vm545, %v803, 0
        %v810 = vsel %vm545, %v805, 0
        %812 = vmatpush.bf16.xpose.msra.mxu0 0
        %813 = vmatpush.bf16.xpose.msra.mxu0 0
        %814 = vmatpush.bf16.xpose.msra.mxu0 0
        %815 = vmatpush.bf16.xpose.msra.mxu0 0
        %816 = vmatpush.bf16.xpose.msra.mxu0 0
        %817 = vmatpush.bf16.xpose.msra.mxu0 0
        %818 = vmatpush.bf16.xpose.msra.mxu0 0
        %819 = vmatpush.bf16.xpose.msra.mxu0 %v810
        %820 = vmatmul.bf16.gmra.mxu0 %v807
        %v821 = vpop.f32.mrf.mxu0
        %v822 = vadd.f32 0.0, %v821
        %v823 = vpop.f32.mrf.mxu0
        %824 = vdwg.mxu0
        %v825 = vmul.f32 %v822, 0.35355338
        %v826 = vsel %vm545, %v825, -inf
        %827 = vmax.xlane.f32.xlu0 %v826
        %v828 = vpop.xlane.xlu0 %827
        %v829 = vsub.f32 %v825, %v828
        %v830 = vmul.f32 %v829, 1.442695
        %v831 = vpow.pop %v830
        %v832 = vsel %vm545, %v831, 0.0
        %833 = vadd.xlane.f32.xlu0 %v832
        %v834 = vpop.xlane.xlu0 %833
        %v835 = vrcp.pop %v834
        %v836 = vmul.f32 %v831, %v835
        %v837 = vpack.c.bf16 %v836, %v836
        %838 = vrot.lane.b32.xlu0 %v541, 40
        %v839 = vpop.permute.xlu0 %838
        %v841 = vsel %vm545, %v837, 0
        %v844 = vsel %vm583, %v839, 0
        %846 = vmatpush.bf16.msra.mxu0 0
        %847 = vmatpush.bf16.msra.mxu0 0
        %848 = vmatpush.bf16.msra.mxu0 0
        %849 = vmatpush.bf16.msra.mxu0 0
        %850 = vmatpush.bf16.msra.mxu0 0
        %851 = vmatpush.bf16.msra.mxu0 0
        %852 = vmatpush.bf16.msra.mxu0 0
        %853 = vmatpush.bf16.msra.mxu0 %v844
        %854 = vmatmul.bf16.gmra.mxu0 %v841
        %v855 = vpop.f32.mrf.mxu0
        %v856 = vadd.f32 0.0, %v855
        %v857 = vpop.f32.mrf.mxu0
        %858 = vdwg.mxu0
        %v859 = vpack.c.bf16 %v856, %v856
        %860 = vrot.lane.b32.xlu0 %v667, 104
        %v861 = vpop.permute.xlu0 %860
        %862 = vrot.lane.b32.xlu0 %v668, 104
        %v863 = vpop.permute.xlu0 %862
        %v865 = vsel %vm545, %v859, 0
        %v868 = vsel %vm545, %v861, 0
        %v871 = vsel %vm545, %v863, 0
        %873 = vmatpush.bf16.xpose.msra.mxu0 0
        %874 = vmatpush.bf16.xpose.msra.mxu0 0
        %875 = vmatpush.bf16.xpose.msra.mxu0 0
        %876 = vmatpush.bf16.xpose.msra.mxu0 0
        %877 = vmatpush.bf16.xpose.msra.mxu0 0
        %878 = vmatpush.bf16.xpose.msra.mxu0 0
        %879 = vmatpush.bf16.xpose.msra.mxu0 %v871
        %880 = vmatpush.bf16.xpose.msra.mxu0 %v868
        %881 = vmatmul.bf16.gmra.mxu0 %v865
        %v882 = vpop.f32.mrf.mxu0
        %v883 = vadd.f32 0.0, %v882
        %v884 = vpop.f32.mrf.mxu0
        %885 = vdwg.mxu0
        %v886 = vadd.f32 %v801, %v883
        %v887 = vld [vmem:[%s4] sm:$0x1]
        %v889 = vperm.slane %v887, 0
        %v891 = vadd.f32 %v886, %v889
        %v892 = vadd.f32 %v454, %v891
        %v893 = vld [vmem:[%s9] sm:$0x1]
        %v894 = vld [vmem:[%s10] sm:$0x1]
        %v895 = vsel %vm502, %v892, 0.0
        %896 = vadd.xlane.f32.xlu0 %v895
        %v897 = vpop.xlane.xlu0 %896
        %v898 = vrcp.pop 32.0
        %v899 = vmul.f32 32.0, %v898
        %v900 = vsub.f32 1.0, %v899
        %v901 = vmul.f32 %v898, %v900
        %v902 = vadd.f32 %v898, %v901
        %vm903 = vweird.f32 %v898
        %v904 = vsel %vm903, %v898, %v902
        %v905 = vmul.f32 %v897, %v904
        %v906 = vsub.f32 %v892, %v905
        %v907 = vmul.f32 %v906, %v906
        %v908 = vsel %vm502, %v907, 0.0
        %909 = vadd.xlane.f32.xlu0 %v908
        %v910 = vpop.xlane.xlu0 %909
        %v911 = vmul.f32 %v910, %v904
        %v912 = vadd.f32 %v911, 1e-05
        %v913 = vrsqrt.pop %v912
        %v914 = vmul.f32 %v913, %v912
        %v915 = vmul.f32 %v914, %v913
        %v916 = vmul.f32 0.5, %v915
        %v917 = vsub.f32 1.5, %v916
        %v918 = vmul.f32 %v913, %v917
        %vm919 = vweird.f32 %v912
        %vm920 = vweird.f32 %v913
        %vm921 = vmor %vm919, %vm920
        %v922 = vsel %vm921, %v913, %v918
        %v923 = vmul.f32 %v906, %v922
        %v925 = vperm.slane %v893, 0
        %v927 = vmul.f32 %v923, %v925
        %v929 = vperm.slane %v894, 0
        %v931 = vadd.f32 %v927, %v929
        %v932 = vld [vmem:[%s5] sm:$0xf]
        %v933 = vld [vmem:[%s5 + $0x4] sm:$0xf]
        %v934 = vld [vmem:[%s5 + $0x8] sm:$0xf]
        %v935 = vld [vmem:[%s5 + $0xc] sm:$0xf]
        %v936 = vld [vmem:[%s5 + $0x10] sm:$0xf]
        %v937 = vld [vmem:[%s5 + $0x14] sm:$0xf]
        %v938 = vld [vmem:[%s5 + $0x18] sm:$0xf]
        %v939 = vld [vmem:[%s5 + $0x1c] sm:$0xf]
        %v940 = vpack.c.bf16 %v931, %v931
        %v941 = vld [vmem:[%s6] sm:$0x1]
        %v943 = vperm.slane %v941, 0
        %v953 = vunpack.c.l.b16 %v932
        %v954 = vunpack.c.l.b16 %v933
        %v955 = vunpack.c.l.b16 %v934
        %v956 = vunpack.c.l.b16 %v935
        %v957 = vunpack.c.l.b16 %v936
        %v958 = vunpack.c.l.b16 %v937
        %v959 = vunpack.c.l.b16 %v938
        %v960 = vunpack.c.l.b16 %v939
        %v961 = vpack.c.b16 %v954, %v953
        %v962 = vpack.c.b16 %v956, %v955
        %v963 = vpack.c.b16 %v958, %v957
        %v964 = vpack.c.b16 %v960, %v959
        %v966 = vsel %vm502, %v940, 0
        %v969 = vsel %vm502, %v961, 0
        %v972 = vsel %vm502, %v962, 0
        %v975 = vsel %vm502, %v963, 0
        %v978 = vsel %vm502, %v964, 0
        %980 = vmatpush.bf16.xpose.msra.mxu0 0
        %981 = vmatpush.bf16.xpose.msra.mxu0 0
        %982 = vmatpush.bf16.xpose.msra.mxu0 0
        %983 = vmatpush.bf16.xpose.msra.mxu0 0
        %984 = vmatpush.bf16.xpose.msra.mxu0 %v978
        %985 = vmatpush.bf16.xpose.msra.mxu0 %v975
        %986 = vmatpush.bf16.xpose.msra.mxu0 %v972
        %987 = vmatpush.bf16.xpose.msra.mxu0 %v969
        %988 = vmatmul.bf16.gmra.mxu0 %v966
        %v989 = vpop.f32.mrf.mxu0
        %v990 = vadd.f32 %v943, %v989
        %v991 = vpop.f32.mrf.mxu0
        %992 = vdwg.mxu0
        %v993 = vmax.f32 %v990, 0.0
        %v994 = vld [vmem:[#allocation2] sm:$0xf]
        %v995 = vld [vmem:[#allocation2 + $0x4] sm:$0xf]
        %v996 = vld [vmem:[#allocation2 + $0x8] sm:$0xf]
        %v997 = vld [vmem:[#allocation2 + $0xc] sm:$0xf]
        %v998 = vpack.c.bf16 %v993, %v993
        %v999 = vld [vmem:[%s8] sm:$0x1]
        %v1001 = vperm.slane %v999, 0
        %v1007 = vunpack.c.l.b16 %v994
        %v1008 = vunpack.c.l.b16 %v995
        %v1009 = vunpack.c.l.b16 %v996
        %v1010 = vunpack.c.l.b16 %v997
        %v1011 = vpack.c.b16 %v1008, %v1007
        %v1012 = vpack.c.b16 %v1010, %v1009
        %vm1013 = vcmask 523264
        %v1015 = vsel %vm1013, %v998, 0
        %v1018 = vsel %vm1013, %v1011, 0
        %v1021 = vsel %vm1013, %v1012, 0
        %1023 = vmatpush.bf16.xpose.msra.mxu0 0
        %1024 = vmatpush.bf16.xpose.msra.mxu0 0
        %1025 = vmatpush.bf16.xpose.msra.mxu0 0
        %1026 = vmatpush.bf16.xpose.msra.mxu0 0
        %1027 = vmatpush.bf16.xpose.msra.mxu0 0
        %1028 = vmatpush.bf16.xpose.msra.mxu0 0
        %1029 = vmatpush.bf16.xpose.msra.mxu0 %v1021
        %1030 = vmatpush.bf16.xpose.msra.mxu0 %v1018
        %1031 = vmatmul.bf16.gmra.mxu0 %v1015
        %v1032 = vpop.f32.mrf.mxu0
        %v1033 = vadd.f32 %v1001, %v1032
        %v1034 = vpop.f32.mrf.mxu0
        %1035 = vdwg.mxu0
        %v1036 = vadd.f32 %v931, %v1033
        %v1037 = vld [vmem:[%s11] sm:$0x1]
        %v1038 = vld [vmem:[%s12] sm:$0x1]
        %v1039 = vsel %vm502, %v1036, 0.0
        %1040 = vadd.xlane.f32.xlu0 %v1039
        %v1041 = vpop.xlane.xlu0 %1040
        %v1042 = vmul.f32 %v1041, %v904
        %v1043 = vsub.f32 %v1036, %v1042
        %v1044 = vmul.f32 %v1043, %v1043
        %v1045 = vsel %vm502, %v1044, 0.0
        %1046 = vadd.xlane.f32.xlu0 %v1045
        %v1047 = vpop.xlane.xlu0 %1046
        %v1048 = vmul.f32 %v1047, %v904
        %v1049 = vadd.f32 %v1048, 1e-05
        %v1050 = vrsqrt.pop %v1049
        %v1051 = vmul.f32 %v1050, %v1049
        %v1052 = vmul.f32 %v1051, %v1050
        %v1053 = vmul.f32 0.5, %v1052
        %v1054 = vsub.f32 1.5, %v1053
        %v1055 = vmul.f32 %v1050, %v1054
        %vm1056 = vweird.f32 %v1049
        %vm1057 = vweird.f32 %v1050
        %vm1058 = vmor %vm1056, %vm1057
        %v1059 = vsel %vm1058, %v1050, %v1055
        %v1060 = vmul.f32 %v1043, %v1059
        %v1062 = vperm.slane %v1037, 0
        %v1064 = vmul.f32 %v1060, %v1062
        %v1066 = vperm.slane %v1038, 0
        %v1068 = vadd.f32 %v1064, %v1066
        %1069 = vst.msk [vmem:[%s452] sm:$0xff] %vm502, %v1068
        %p1070 = scmp.lt.s32.totalorder %s25, 1
        %s1071 = scalar_select %p1070, %s25, 1
        %s1072 = smul.addr %s1071, 8
        %s1073 = scalar_lea.vmem %s13, %s1072
        // Predicated region
        $region77: #{simple_transformer_forward.3} parent=71 // pred_check
          %p1074 = pneg %p321
        $region78: #{simple_transformer_forward.3} parent=71 // pred_check_branch
          %1076 = sbr.rel (%p1074) target = $region80
        $region79: #{simple_transformer_forward.3} parent=71 // pred_region
          _
        $region80: #{simple_transformer_forward.3} parent=71 // pred_fallthru
          _
      $region72: #{simple_transformer_forward.3} parent=5 // pred_fallthru
        _
      %p1077 = scmp.le.s32.totalorder 2, %s20
      // Predicated region
      $region81: #{simple_transformer_forward.3} parent=5 // pred_check
        %p1078 = pneg %p1077
      $region82: #{simple_transformer_forward.3} parent=5 // pred_check_branch
        %1080 = sbr.rel (%p1078) target = $region84
      $region83: #{simple_transformer_forward.3} parent=5 // pred_region
        %s1081 = ssub.s32 %s20, 2
        // Predicated region
        $region85: #{simple_transformer_forward.3} parent=83 // pred_check
          %p1082 = pneg %p327
        $region86: #{simple_transformer_forward.3} parent=83 // pred_check_branch
          %1084 = sbr.rel (%p1082) target = $region88
        $region87: #{simple_transformer_forward.3} parent=83 // pred_region
          %p1085 = scmp.lt.s32.totalorder %s26, 1
          %s1086 = scalar_select %p1085, %s26, 1
          %s1087 = smul.addr %s1086, 8
          %s1088 = scalar_lea.vmem %s13, %s1087
        $region88: #{simple_transformer_forward.3} parent=83 // pred_fallthru
          _
      $region84: #{simple_transformer_forward.3} parent=5 // pred_fallthru
        _
    $region6: #{simple_transformer_forward.3} parent=1 // loop_footer
      %s24 = sadd.s32 1, %s20
    $region7: #{simple_transformer_forward.3} parent=1 // loop_footer_branch
      %19 = sbr.rel target = $region3
    $region8: #{simple_transformer_forward.3} parent=1 // loop_exit
      _
    %1089 = vsyncpa [#allocation3], 1
    %s1090 = scalar_lea.sflag [#allocation3], 1
    %1091 = vsyncpa %s1090, 1

// kernel: simple_transformer_forward.4
$region0: #{simple_transformer_forward.4}
  #allocation0 [shape = 'u32[]', space=smem, size = 0x4, offset = 0x4, fixed_abs, tag = 'smem constant byte address 0x4 - core index']
  #allocation1 [shape = 'u32[72,128]{1,0:T(1,128)}', space=vmem, size = 0x9000, scoped, tag = 'internal scratch']
  %s0 = inlined_call_operand.vmem [shape: f32[2,8,32], index: 0, kind: input, shape index: {}]
  %s1 = inlined_call_operand.vmem [shape: bf16[96,32], index: 1, kind: input, shape index: {}]
  %s2 = inlined_call_operand.vmem [shape: f32[1,96], index: 2, kind: input, shape index: {}]
  %s3 = inlined_call_operand.hbm [shape: bf16[32,32], index: 3, kind: input, shape index: {}]
  %s4 = inlined_call_operand.vmem [shape: f32[1,32], index: 4, kind: input, shape index: {}, may-alias: {4,10,12}]
  %s5 = inlined_call_operand.vmem [shape: bf16[64,32], index: 5, kind: input, shape index: {}]
  %s6 = inlined_call_operand.hbm [shape: f32[1,64], index: 6, kind: input, shape index: {}]
  %s7 = inlined_call_operand.hbm [shape: bf16[32,64], index: 7, kind: input, shape index: {}]
  %s8 = inlined_call_operand.hbm [shape: f32[1,32], index: 8, kind: input, shape index: {}]
  %s9 = inlined_call_operand.vmem [shape: f32[1,32], index: 9, kind: input, shape index: {}, may-alias: {9,11}]
  %s10 = inlined_call_operand.vmem [shape: f32[1,32], index: 10, kind: input, shape index: {}, may-alias: {4,10,12}]
  %s11 = inlined_call_operand.vmem [shape: f32[1,32], index: 11, kind: input, shape index: {}, may-alias: {9,11}]
  %s12 = inlined_call_operand.vmem [shape: f32[1,32], index: 12, kind: input, shape index: {}, may-alias: {4,10,12}]
  %s13 = inlined_call_operand.vmem [shape: f32[2,8,32], index: 13, kind: output, shape index: {}]
  %s14 = sld [smem:[#allocation0]]
  $region101: #{simple_transformer_forward.4} parent=0
    _
  %s16 = ssub.s32 1, %s14
  %s17 = scalar_select 0, %s16, %s14
  $region1: #{simple_transformer_forward.4} parent=0
    #allocation2 [shape = 'u8[8192]{0}', space=vmem, size = 0x2000, scoped, tag = 'input window, operand 3, single buffered']
    #allocation3 [shape = 's32[2]{0}', space=sflag, size = 0x8, scoped, tag = 'scoped memory for simple_transformer_forward.4']
    #allocation4 [shape = 'u8[512]{0}', space=vmem, size = 0x400, scoped, tag = 'input window, operand 6, single buffered']
    #allocation5 [shape = 's32[1]{0}', space=sflag, size = 0x4, scoped, tag = 'scoped memory for simple_transformer_forward.4']
    #allocation6 [shape = 'u8[8192]{0}', space=vmem, size = 0x2000, scoped, tag = 'input window, operand 7, single buffered']
    #allocation7 [shape = 'u8[512]{0}', space=vmem, size = 0x400, scoped, tag = 'input window, operand 8, single buffered']
    #allocation8 [shape = 's32[1]{0}', space=sflag, size = 0x4, scoped, tag = 'scoped memory for simple_transformer_forward.4']
    %18 = vsyncpa [#allocation3], 0
    %19 = vsyncpa [#allocation5], 0
    %20 = vsyncpa [#allocation8], 0
    loop: start=0, step=1, limit=4
    $region2: #{simple_transformer_forward.4} parent=1 // loop_pre_header
      _
    $region3: #{simple_transformer_forward.4} parent=1 // loop_header
      %s22 = sphi 0, %s26
      %p23 = scmp.ge.s32.totalorder %s22, 4
      %s32 = sphi 0, %s34
      %s35 = sphi 0, %s32
      %s36 = sphi 0, %s35
      %s52 = sphi 0, %s36
      %s56 = sphi 0, %s56
      %s58 = sphi 0, %s56
      %s59 = sphi 0, %s58
      %s73 = sphi 0, %s59
      %s77 = sphi 0, %s77
      %s79 = sphi 0, %s77
      %s80 = sphi 0, %s79
      %s94 = sphi 0, %s80
      %s98 = sphi 0, %s98
      %s100 = sphi 0, %s98
      %s101 = sphi 0, %s100
      %s115 = sphi 0, %s101
      %s119 = sphi 0, %s119
      %s121 = sphi 0, %s119
      %s122 = sphi 0, %s121
      %s136 = sphi 0, %s122
      %s140 = sphi 0, %s140
      %s142 = sphi 0, %s140
      %s143 = sphi 0, %s142
      %s157 = sphi 0, %s143
      %s161 = sphi 0, %s161
      %s163 = sphi 0, %s161
      %s164 = sphi 0, %s163
      %s178 = sphi 0, %s164
      %s182 = sphi 0, %s182
      %s184 = sphi 0, %s182
      %s185 = sphi 0, %s184
      %s199 = sphi 0, %s185
      %s203 = sphi 0, %s203
      %s205 = sphi 0, %s203
      %s206 = sphi 0, %s205
      %s220 = sphi 0, %s206
      %s224 = sphi 0, %s224
      %s226 = sphi 0, %s224
      %s227 = sphi 0, %s226
      %s241 = sphi 0, %s227
      %s245 = sphi 0, %s245
      %s247 = sphi 0, %s245
      %s248 = sphi 0, %s247
      %s262 = sphi 0, %s248
      %s266 = sphi 0, %s266
      %s268 = sphi 0, %s266
      %s269 = sphi 0, %s268
      %s283 = sphi 0, %s269
      %s287 = sphi 0, %s287
      %s289 = sphi 0, %s287
      %s290 = sphi 0, %s289
      %s304 = sphi 0, %s290
      %s310 = sphi 0, %s312
      %s313 = sphi 0, %s310
      %s314 = sphi 0, %s313
      %s330 = sphi 0, %s314
    $region4: #{simple_transformer_forward.4} parent=1 // loop_header_branch
      %25 = sbr.rel (%p23) target = $region8
    $region5: #{simple_transformer_forward.4} parent=1 // loop_body
      %s27 = ssub.s32 %s22, 1
      %s28 = ssub.s32 %s22, 2
      %s29 = sadd.s32 %s22, 1
      %s30 = ssub.s32 %s22, %s29
      %p31 = scmp.eq.s32.totalorder %s30, 0
      %s33 = sadd.s32 %s32, 1
      %s34 = scalar_select %p31, %s32, %s33
      %p37 = pneg %p31
      %p38 = scmp.eq.s32.totalorder %s22, 1
      %p39 = por %p37, %p38
      %p40 = scmp.ne.s32.totalorder %s32, %s35
      %p41 = scmp.eq.s32.totalorder %s22, 0
      %p42 = por %p40, %p41
      %p43 = scmp.ne.s32.totalorder %s32, %s35
      %p44 = scmp.eq.s32.totalorder %s27, 1
      %p45 = por %p43, %p44
      %p46 = scmp.ne.s32.totalorder %s35, %s36
      %p47 = scmp.eq.s32.totalorder %s27, 0
      %p48 = por %p46, %p47
      %p49 = scmp.ne.s32.totalorder %s35, %s36
      %p50 = scmp.eq.s32.totalorder %s28, 1
      %p51 = por %p49, %p50
      %p53 = scmp.ne.s32.totalorder %s36, %s52
      %p54 = scmp.eq.s32.totalorder %s28, 0
      %p55 = por %p53, %p54
      %s57 = sadd.s32 %s56, 1
      %p60 = scmp.eq.s32.totalorder %s22, 1
      %p61 = scmp.ne.s32.totalorder %s56, %s58
      %p62 = scmp.eq.s32.totalorder %s22, 0
      %p63 = por %p61, %p62
      %p64 = scmp.ne.s32.totalorder %s56, %s58
      %p65 = scmp.eq.s32.totalorder %s27, 1
      %p66 = por %p64, %p65
      %p67 = scmp.ne.s32.totalorder %s58, %s59
      %p68 = scmp.eq.s32.totalorder %s27, 0
      %p69 = por %p67, %p68
      %p70 = scmp.ne.s32.totalorder %s58, %s59
      %p71 = scmp.eq.s32.totalorder %s28, 1
      %p72 = por %p70, %p71
      %p74 = scmp.ne.s32.totalorder %s59, %s73
      %p75 = scmp.eq.s32.totalorder %s28, 0
      %p76 = por %p74, %p75
      %s78 = sadd.s32 %s77, 1
      %p81 = scmp.eq.s32.totalorder %s22, 1
      %p82 = scmp.ne.s32.totalorder %s77, %s79
      %p83 = scmp.eq.s32.totalorder %s22, 0
      %p84 = por %p82, %p83
      %p85 = scmp.ne.s32.totalorder %s77, %s79
      %p86 = scmp.eq.s32.totalorder %s27, 1
      %p87 = por %p85, %p86
      %p88 = scmp.ne.s32.totalorder %s79, %s80
      %p89 = scmp.eq.s32.totalorder %s27, 0
      %p90 = por %p88, %p89
      %p91 = scmp.ne.s32.totalorder %s79, %s80
      %p92 = scmp.eq.s32.totalorder %s28, 1
      %p93 = por %p91, %p92
      %p95 = scmp.ne.s32.totalorder %s80, %s94
      %p96 = scmp.eq.s32.totalorder %s28, 0
      %p97 = por %p95, %p96
      %s99 = sadd.s32 %s98, 1
      %p102 = scmp.eq.s32.totalorder %s22, 1
      %p103 = scmp.ne.s32.totalorder %s98, %s100
      %p104 = scmp.eq.s32.totalorder %s22, 0
      %p105 = por %p103, %p104
      %p106 = scmp.ne.s32.totalorder %s98, %s100
      %p107 = scmp.eq.s32.totalorder %s27, 1
      %p108 = por %p106, %p107
      %p109 = scmp.ne.s32.totalorder %s100, %s101
      %p110 = scmp.eq.s32.totalorder %s27, 0
      %p111 = por %p109, %p110
      %p112 = scmp.ne.s32.totalorder %s100, %s101
      %p113 = scmp.eq.s32.totalorder %s28, 1
      %p114 = por %p112, %p113
      %p116 = scmp.ne.s32.totalorder %s101, %s115
      %p117 = scmp.eq.s32.totalorder %s28, 0
      %p118 = por %p116, %p117
      %s120 = sadd.s32 %s119, 1
      %p123 = scmp.eq.s32.totalorder %s22, 1
      %p124 = scmp.ne.s32.totalorder %s119, %s121
      %p125 = scmp.eq.s32.totalorder %s22, 0
      %p126 = por %p124, %p125
      %p127 = scmp.ne.s32.totalorder %s119, %s121
      %p128 = scmp.eq.s32.totalorder %s27, 1
      %p129 = por %p127, %p128
      %p130 = scmp.ne.s32.totalorder %s121, %s122
      %p131 = scmp.eq.s32.totalorder %s27, 0
      %p132 = por %p130, %p131
      %p133 = scmp.ne.s32.totalorder %s121, %s122
      %p134 = scmp.eq.s32.totalorder %s28, 1
      %p135 = por %p133, %p134
      %p137 = scmp.ne.s32.totalorder %s122, %s136
      %p138 = scmp.eq.s32.totalorder %s28, 0
      %p139 = por %p137, %p138
      %s141 = sadd.s32 %s140, 1
      %p144 = scmp.eq.s32.totalorder %s22, 1
      %p145 = scmp.ne.s32.totalorder %s140, %s142
      %p146 = scmp.eq.s32.totalorder %s22, 0
      %p147 = por %p145, %p146
      %p148 = scmp.ne.s32.totalorder %s140, %s142
      %p149 = scmp.eq.s32.totalorder %s27, 1
      %p150 = por %p148, %p149
      %p151 = scmp.ne.s32.totalorder %s142, %s143
      %p152 = scmp.eq.s32.totalorder %s27, 0
      %p153 = por %p151, %p152
      %p154 = scmp.ne.s32.totalorder %s142, %s143
      %p155 = scmp.eq.s32.totalorder %s28, 1
      %p156 = por %p154, %p155
      %p158 = scmp.ne.s32.totalorder %s143, %s157
      %p159 = scmp.eq.s32.totalorder %s28, 0
      %p160 = por %p158, %p159
      %s162 = sadd.s32 %s161, 1
      %p165 = scmp.eq.s32.totalorder %s22, 1
      %p166 = scmp.ne.s32.totalorder %s161, %s163
      %p167 = scmp.eq.s32.totalorder %s22, 0
      %p168 = por %p166, %p167
      %p169 = scmp.ne.s32.totalorder %s161, %s163
      %p170 = scmp.eq.s32.totalorder %s27, 1
      %p171 = por %p169, %p170
      %p172 = scmp.ne.s32.totalorder %s163, %s164
      %p173 = scmp.eq.s32.totalorder %s27, 0
      %p174 = por %p172, %p173
      %p175 = scmp.ne.s32.totalorder %s163, %s164
      %p176 = scmp.eq.s32.totalorder %s28, 1
      %p177 = por %p175, %p176
      %p179 = scmp.ne.s32.totalorder %s164, %s178
      %p180 = scmp.eq.s32.totalorder %s28, 0
      %p181 = por %p179, %p180
      %s183 = sadd.s32 %s182, 1
      %p186 = scmp.eq.s32.totalorder %s22, 1
      %p187 = scmp.ne.s32.totalorder %s182, %s184
      %p188 = scmp.eq.s32.totalorder %s22, 0
      %p189 = por %p187, %p188
      %p190 = scmp.ne.s32.totalorder %s182, %s184
      %p191 = scmp.eq.s32.totalorder %s27, 1
      %p192 = por %p190, %p191
      %p193 = scmp.ne.s32.totalorder %s184, %s185
      %p194 = scmp.eq.s32.totalorder %s27, 0
      %p195 = por %p193, %p194
      %p196 = scmp.ne.s32.totalorder %s184, %s185
      %p197 = scmp.eq.s32.totalorder %s28, 1
      %p198 = por %p196, %p197
      %p200 = scmp.ne.s32.totalorder %s185, %s199
      %p201 = scmp.eq.s32.totalorder %s28, 0
      %p202 = por %p200, %p201
      %s204 = sadd.s32 %s203, 1
      %p207 = scmp.eq.s32.totalorder %s22, 1
      %p208 = scmp.ne.s32.totalorder %s203, %s205
      %p209 = scmp.eq.s32.totalorder %s22, 0
      %p210 = por %p208, %p209
      %p211 = scmp.ne.s32.totalorder %s203, %s205
      %p212 = scmp.eq.s32.totalorder %s27, 1
      %p213 = por %p211, %p212
      %p214 = scmp.ne.s32.totalorder %s205, %s206
      %p215 = scmp.eq.s32.totalorder %s27, 0
      %p216 = por %p214, %p215
      %p217 = scmp.ne.s32.totalorder %s205, %s206
      %p218 = scmp.eq.s32.totalorder %s28, 1
      %p219 = por %p217, %p218
      %p221 = scmp.ne.s32.totalorder %s206, %s220
      %p222 = scmp.eq.s32.totalorder %s28, 0
      %p223 = por %p221, %p222
      %s225 = sadd.s32 %s224, 1
      %p228 = scmp.eq.s32.totalorder %s22, 1
      %p229 = scmp.ne.s32.totalorder %s224, %s226
      %p230 = scmp.eq.s32.totalorder %s22, 0
      %p231 = por %p229, %p230
      %p232 = scmp.ne.s32.totalorder %s224, %s226
      %p233 = scmp.eq.s32.totalorder %s27, 1
      %p234 = por %p232, %p233
      %p235 = scmp.ne.s32.totalorder %s226, %s227
      %p236 = scmp.eq.s32.totalorder %s27, 0
      %p237 = por %p235, %p236
      %p238 = scmp.ne.s32.totalorder %s226, %s227
      %p239 = scmp.eq.s32.totalorder %s28, 1
      %p240 = por %p238, %p239
      %p242 = scmp.ne.s32.totalorder %s227, %s241
      %p243 = scmp.eq.s32.totalorder %s28, 0
      %p244 = por %p242, %p243
      %s246 = sadd.s32 %s245, 1
      %p249 = scmp.eq.s32.totalorder %s22, 1
      %p250 = scmp.ne.s32.totalorder %s245, %s247
      %p251 = scmp.eq.s32.totalorder %s22, 0
      %p252 = por %p250, %p251
      %p253 = scmp.ne.s32.totalorder %s245, %s247
      %p254 = scmp.eq.s32.totalorder %s27, 1
      %p255 = por %p253, %p254
      %p256 = scmp.ne.s32.totalorder %s247, %s248
      %p257 = scmp.eq.s32.totalorder %s27, 0
      %p258 = por %p256, %p257
      %p259 = scmp.ne.s32.totalorder %s247, %s248
      %p260 = scmp.eq.s32.totalorder %s28, 1
      %p261 = por %p259, %p260
      %p263 = scmp.ne.s32.totalorder %s248, %s262
      %p264 = scmp.eq.s32.totalorder %s28, 0
      %p265 = por %p263, %p264
      %s267 = sadd.s32 %s266, 1
      %p270 = scmp.eq.s32.totalorder %s22, 1
      %p271 = scmp.ne.s32.totalorder %s266, %s268
      %p272 = scmp.eq.s32.totalorder %s22, 0
      %p273 = por %p271, %p272
      %p274 = scmp.ne.s32.totalorder %s266, %s268
      %p275 = scmp.eq.s32.totalorder %s27, 1
      %p276 = por %p274, %p275
      %p277 = scmp.ne.s32.totalorder %s268, %s269
      %p278 = scmp.eq.s32.totalorder %s27, 0
      %p279 = por %p277, %p278
      %p280 = scmp.ne.s32.totalorder %s268, %s269
      %p281 = scmp.eq.s32.totalorder %s28, 1
      %p282 = por %p280, %p281
      %p284 = scmp.ne.s32.totalorder %s269, %s283
      %p285 = scmp.eq.s32.totalorder %s28, 0
      %p286 = por %p284, %p285
      %s288 = sadd.s32 %s287, 1
      %p291 = scmp.eq.s32.totalorder %s22, 1
      %p292 = scmp.ne.s32.totalorder %s287, %s289
      %p293 = scmp.eq.s32.totalorder %s22, 0
      %p294 = por %p292, %p293
      %p295 = scmp.ne.s32.totalorder %s287, %s289
      %p296 = scmp.eq.s32.totalorder %s27, 1
      %p297 = por %p295, %p296
      %p298 = scmp.ne.s32.totalorder %s289, %s290
      %p299 = scmp.eq.s32.totalorder %s27, 0
      %p300 = por %p298, %p299
      %p301 = scmp.ne.s32.totalorder %s289, %s290
      %p302 = scmp.eq.s32.totalorder %s28, 1
      %p303 = por %p301, %p302
      %p305 = scmp.ne.s32.totalorder %s290, %s304
      %p306 = scmp.eq.s32.totalorder %s28, 0
      %p307 = por %p305, %p306
      %s308 = ssub.s32 %s22, %s29
      %p309 = scmp.eq.s32.totalorder %s308, 0
      %s311 = sadd.s32 %s310, 1
      %s312 = scalar_select %p309, %s310, %s311
      %p315 = pneg %p309
      %p316 = scmp.eq.s32.totalorder %s22, 1
      %p317 = por %p315, %p316
      %p318 = scmp.ne.s32.totalorder %s310, %s313
      %p319 = scmp.eq.s32.totalorder %s22, 0
      %p320 = por %p318, %p319
      %p321 = scmp.ne.s32.totalorder %s310, %s313
      %p322 = scmp.eq.s32.totalorder %s27, 1
      %p323 = por %p321, %p322
      %p324 = scmp.ne.s32.totalorder %s313, %s314
      %p325 = scmp.eq.s32.totalorder %s27, 0
      %p326 = por %p324, %p325
      %p327 = scmp.ne.s32.totalorder %s313, %s314
      %p328 = scmp.eq.s32.totalorder %s28, 1
      %p329 = por %p327, %p328
      %p331 = scmp.ne.s32.totalorder %s314, %s330
      %p332 = scmp.eq.s32.totalorder %s28, 0
      %p333 = por %p331, %p332
      %p334 = scmp.le.s32.totalorder 1, %s22
      %p335 = scmp.lt.s32.totalorder %s22, 3
      %p336 = pnand %p334, %p335
      %p337 = pneg %p336
      // Predicated region
      $region9: #{simple_transformer_forward.4} parent=5 // pred_check
        _
      $region10: #{simple_transformer_forward.4} parent=5 // pred_check_branch
        %339 = sbr.rel (%p336) target = $region12
      $region11: #{simple_transformer_forward.4} parent=5 // pred_region
        %s340 = ssub.s32 %s22, 1
        // Predicated region
        $region13: #{simple_transformer_forward.4} parent=11 // pred_check
          %p341 = pneg %p69
        $region14: #{simple_transformer_forward.4} parent=11 // pred_check_branch
          %343 = sbr.rel (%p341) target = $region16
        $region15: #{simple_transformer_forward.4} parent=11 // pred_region
          _
        $region16: #{simple_transformer_forward.4} parent=11 // pred_fallthru
          _
        // Predicated region
        $region17: #{simple_transformer_forward.4} parent=11 // pred_check
          %p344 = pneg %p90
        $region18: #{simple_transformer_forward.4} parent=11 // pred_check_branch
          %346 = sbr.rel (%p344) target = $region20
        $region19: #{simple_transformer_forward.4} parent=11 // pred_region
          _
        $region20: #{simple_transformer_forward.4} parent=11 // pred_fallthru
          _
        // Predicated region
        $region21: #{simple_transformer_forward.4} parent=11 // pred_check
          %p347 = pneg %p111
        $region22: #{simple_transformer_forward.4} parent=11 // pred_check_branch
          %349 = sbr.rel (%p347) target = $region24
        $region23: #{simple_transformer_forward.4} parent=11 // pred_region
          %351 = vsyncadd [#allocation3], 0
          %s352 = sshll.u32 %s3, 4
          %s353 = int_to_ptr.hbm [resolvable:$true] %s352
          %s354 = sshll.u32 [#allocation2], 4
          %s355 = int_to_ptr.vmem [resolvable:$true] %s354
          %360 = dma.hbm_to_vmem [thread:$0]  %s353, 256, %s355, [#allocation3], 64, 64, 4
        $region24: #{simple_transformer_forward.4} parent=11 // pred_fallthru
          _
        // Predicated region
        $region25: #{simple_transformer_forward.4} parent=11 // pred_check
          %p361 = pneg %p132
        $region26: #{simple_transformer_forward.4} parent=11 // pred_check_branch
          %363 = sbr.rel (%p361) target = $region28
        $region27: #{simple_transformer_forward.4} parent=11 // pred_region
          _
        $region28: #{simple_transformer_forward.4} parent=11 // pred_fallthru
          _
        // Predicated region
        $region29: #{simple_transformer_forward.4} parent=11 // pred_check
          %p364 = pneg %p153
        $region30: #{simple_transformer_forward.4} parent=11 // pred_check_branch
          %366 = sbr.rel (%p364) target = $region32
        $region31: #{simple_transformer_forward.4} parent=11 // pred_region
          _
        $region32: #{simple_transformer_forward.4} parent=11 // pred_fallthru
          _
        // Predicated region
        $region33: #{simple_transformer_forward.4} parent=11 // pred_check
          %p367 = pneg %p174
        $region34: #{simple_transformer_forward.4} parent=11 // pred_check_branch
          %369 = sbr.rel (%p367) target = $region36
        $region35: #{simple_transformer_forward.4} parent=11 // pred_region
          %371 = vsyncadd [#allocation5], 0
          %s373 = sshll.u32 %s6, 4
          %s374 = int_to_ptr.hbm [resolvable:$true] %s373
          %s375 = sshll.u32 [#allocation4], 4
          %s376 = int_to_ptr.vmem [resolvable:$true] %s375
          %378 = dma.hbm_to_vmem [thread:$0]  %s374, 16, %s376, [#allocation5]
        $region36: #{simple_transformer_forward.4} parent=11 // pred_fallthru
          _
        // Predicated region
        $region37: #{simple_transformer_forward.4} parent=11 // pred_check
          %p379 = pneg %p195
        $region38: #{simple_transformer_forward.4} parent=11 // pred_check_branch
          %381 = sbr.rel (%p379) target = $region40
        $region39: #{simple_transformer_forward.4} parent=11 // pred_region
          %383 = vsyncadd [#allocation5], 0
          %s384 = sshll.u32 %s7, 4
          %s385 = int_to_ptr.hbm [resolvable:$true] %s384
          %s386 = sshll.u32 [#allocation6], 4
          %s387 = int_to_ptr.vmem [resolvable:$true] %s386
          %392 = dma.hbm_to_vmem [thread:$0]  %s385, 256, %s387, [#allocation5], 64, 64, 4
        $region40: #{simple_transformer_forward.4} parent=11 // pred_fallthru
          _
        // Predicated region
        $region41: #{simple_transformer_forward.4} parent=11 // pred_check
          %p393 = pneg %p216
        $region42: #{simple_transformer_forward.4} parent=11 // pred_check_branch
          %395 = sbr.rel (%p393) target = $region44
        $region43: #{simple_transformer_forward.4} parent=11 // pred_region
          %397 = vsyncadd [#allocation8], 0
          %s399 = sshll.u32 %s8, 4
          %s400 = int_to_ptr.hbm [resolvable:$true] %s399
          %s401 = sshll.u32 [#allocation7], 4
          %s402 = int_to_ptr.vmem [resolvable:$true] %s401
          %404 = dma.hbm_to_vmem [thread:$0]  %s400, 16, %s402, [#allocation8]
        $region44: #{simple_transformer_forward.4} parent=11 // pred_fallthru
          _
        // Predicated region
        $region45: #{simple_transformer_forward.4} parent=11 // pred_check
          %p405 = pneg %p237
        $region46: #{simple_transformer_forward.4} parent=11 // pred_check_branch
          %407 = sbr.rel (%p405) target = $region48
        $region47: #{simple_transformer_forward.4} parent=11 // pred_region
          _
        $region48: #{simple_transformer_forward.4} parent=11 // pred_fallthru
          _
        // Predicated region
        $region49: #{simple_transformer_forward.4} parent=11 // pred_check
          %p408 = pneg %p258
        $region50: #{simple_transformer_forward.4} parent=11 // pred_check_branch
          %410 = sbr.rel (%p408) target = $region52
        $region51: #{simple_transformer_forward.4} parent=11 // pred_region
          _
        $region52: #{simple_transformer_forward.4} parent=11 // pred_fallthru
          _
        // Predicated region
        $region53: #{simple_transformer_forward.4} parent=11 // pred_check
          %p411 = pneg %p279
        $region54: #{simple_transformer_forward.4} parent=11 // pred_check_branch
          %413 = sbr.rel (%p411) target = $region56
        $region55: #{simple_transformer_forward.4} parent=11 // pred_region
          _
        $region56: #{simple_transformer_forward.4} parent=11 // pred_fallthru
          _
        // Predicated region
        $region57: #{simple_transformer_forward.4} parent=11 // pred_check
          %p414 = pneg %p300
        $region58: #{simple_transformer_forward.4} parent=11 // pred_check_branch
          %416 = sbr.rel (%p414) target = $region60
        $region59: #{simple_transformer_forward.4} parent=11 // pred_region
          _
        $region60: #{simple_transformer_forward.4} parent=11 // pred_fallthru
          _
      $region12: #{simple_transformer_forward.4} parent=5 // pred_fallthru
        _
      %p417 = scmp.lt.s32.totalorder %s22, 2
      // Predicated region
      $region61: #{simple_transformer_forward.4} parent=5 // pred_check
        %p418 = pneg %p417
      $region62: #{simple_transformer_forward.4} parent=5 // pred_check_branch
        %420 = sbr.rel (%p418) target = $region64
      $region63: #{simple_transformer_forward.4} parent=5 // pred_region
        // Predicated region
        $region65: #{simple_transformer_forward.4} parent=63 // pred_check
          %p421 = pneg %p42
        $region66: #{simple_transformer_forward.4} parent=63 // pred_check_branch
          %423 = sbr.rel (%p421) target = $region68
        $region67: #{simple_transformer_forward.4} parent=63 // pred_region
          %p424 = scmp.lt.s32.totalorder %s22, 1
          %s425 = scalar_select %p424, %s22, 1
          %s426 = smul.addr %s425, 8
          %s427 = scalar_lea.vmem %s0, %s426
        $region68: #{simple_transformer_forward.4} parent=63 // pred_fallthru
          _
      $region64: #{simple_transformer_forward.4} parent=5 // pred_fallthru
        _
      %p428 = scmp.le.s32.totalorder 1, %s22
      %p429 = scmp.lt.s32.totalorder %s22, 3
      %p430 = pnand %p428, %p429
      %p431 = pneg %p430
      // Predicated region
      $region69: #{simple_transformer_forward.4} parent=5 // pred_check
        _
      $region70: #{simple_transformer_forward.4} parent=5 // pred_check_branch
        %433 = sbr.rel (%p430) target = $region72
      $region71: #{simple_transformer_forward.4} parent=5 // pred_region
        %s434 = ssub.s32 %s22, 1
        // Predicated region
        $region73: #{simple_transformer_forward.4} parent=71 // pred_check
          %p435 = pneg %p111
        $region74: #{simple_transformer_forward.4} parent=71 // pred_check_branch
          %437 = sbr.rel (%p435) target = $region76
        $region75: #{simple_transformer_forward.4} parent=71 // pred_region
          %439 = dma.done [#allocation3], 256
        $region76: #{simple_transformer_forward.4} parent=71 // pred_fallthru
          _
        // Predicated region
        $region77: #{simple_transformer_forward.4} parent=71 // pred_check
          %p440 = pneg %p174
        $region78: #{simple_transformer_forward.4} parent=71 // pred_check_branch
          %442 = sbr.rel (%p440) target = $region80
        $region79: #{simple_transformer_forward.4} parent=71 // pred_region
          %444 = dma.done [#allocation5], 16
        $region80: #{simple_transformer_forward.4} parent=71 // pred_fallthru
          _
        // Predicated region
        $region81: #{simple_transformer_forward.4} parent=71 // pred_check
          %p445 = pneg %p195
        $region82: #{simple_transformer_forward.4} parent=71 // pred_check_branch
          %447 = sbr.rel (%p445) target = $region84
        $region83: #{simple_transformer_forward.4} parent=71 // pred_region
          %449 = dma.done [#allocation5], 256
        $region84: #{simple_transformer_forward.4} parent=71 // pred_fallthru
          _
        // Predicated region
        $region85: #{simple_transformer_forward.4} parent=71 // pred_check
          %p450 = pneg %p216
        $region86: #{simple_transformer_forward.4} parent=71 // pred_check_branch
          %452 = sbr.rel (%p450) target = $region88
        $region87: #{simple_transformer_forward.4} parent=71 // pred_region
          %454 = dma.done [#allocation8], 16
        $region88: #{simple_transformer_forward.4} parent=71 // pred_fallthru
          _
        %p455 = scmp.lt.s32.totalorder %s27, 1
        %s456 = scalar_select %p455, %s27, 1
        %s457 = smul.addr %s456, 8
        %s458 = scalar_lea.vmem %s0, %s457
        %p459 = pneg %p48
        %p460 = pneg %p45
        %p461 = pneg %p69
        %p462 = pneg %p66
        %p463 = pneg %p90
        %p464 = pneg %p87
        %p465 = pneg %p111
        %p466 = pneg %p108
        %p467 = pneg %p132
        %p468 = pneg %p129
        %p469 = pneg %p153
        %p470 = pneg %p150
        %p471 = pneg %p174
        %p472 = pneg %p171
        %p473 = pneg %p195
        %p474 = pneg %p192
        %p475 = pneg %p216
        %p476 = pneg %p213
        %p477 = pneg %p237
        %p478 = pneg %p234
        %p479 = pneg %p258
        %p480 = pneg %p255
        %p481 = pneg %p279
        %p482 = pneg %p276
        %p483 = pneg %p300
        %p484 = pneg %p297
        %p485 = pneg %p326
        %p486 = pneg %p323
        %p487 = scmp.lt.s32.totalorder %s27, 1
        %s488 = scalar_select %p487, %s27, 1
        %s489 = smul.addr %s488, 8
        %s490 = scalar_lea.vmem %s13, %s489
        %p491 = scmp.lt.s32.totalorder %s27, 1
        %s492 = scalar_select %p491, %s27, 1
        %s493 = smul.addr %s492, 8
        %s494 = scalar_lea.vmem %s0, %s493
        %p495 = scmp.lt.s32.totalorder %s27, 1
        %s496 = scalar_select %p495, %s27, 1
        %s497 = smul.addr %s496, 8
        %s498 = scalar_lea.vmem %s13, %s497
        %v500 = vld [vmem:[%s494] sm:$0xff]
        %v501 = vld [vmem:[%s1] sm:$0xf]
        %v502 = vld [vmem:[%s1 + $0x4] sm:$0xf]
        %v503 = vld [vmem:[%s1 + $0x8] sm:$0xf]
        %v504 = vld [vmem:[%s1 + $0xc] sm:$0xf]
        %v505 = vld [vmem:[%s1 + $0x10] sm:$0xf]
        %v506 = vld [vmem:[%s1 + $0x14] sm:$0xf]
        %v507 = vld [vmem:[%s1 + $0x18] sm:$0xf]
        %v508 = vld [vmem:[%s1 + $0x1c] sm:$0xf]
        %v509 = vld [vmem:[%s1 + $0x20] sm:$0xf]
        %v510 = vld [vmem:[%s1 + $0x24] sm:$0xf]
        %v511 = vld [vmem:[%s1 + $0x28] sm:$0xf]
        %v512 = vld [vmem:[%s1 + $0x2c] sm:$0xf]
        %v513 = vpack.c.bf16 %v500, %v500
        %v514 = vld [vmem:[%s2] sm:$0x1]
        %v516 = vperm.slane %v514, 0
        %v530 = vunpack.c.l.b16 %v501
        %v531 = vunpack.c.l.b16 %v502
        %v532 = vunpack.c.l.b16 %v503
        %v533 = vunpack.c.l.b16 %v504
        %v534 = vunpack.c.l.b16 %v505
        %v535 = vunpack.c.l.b16 %v506
        %v536 = vunpack.c.l.b16 %v507
        %v537 = vunpack.c.l.b16 %v508
        %v538 = vunpack.c.l.b16 %v509
        %v539 = vunpack.c.l.b16 %v510
        %v540 = vunpack.c.l.b16 %v511
        %v541 = vunpack.c.l.b16 %v512
        %v542 = vpack.c.b16 %v531, %v530
        %v543 = vpack.c.b16 %v533, %v532
        %v544 = vpack.c.b16 %v535, %v534
        %v545 = vpack.c.b16 %v537, %v536
        %v546 = vpack.c.b16 %v539, %v538
        %v547 = vpack.c.b16 %v541, %v540
        %vm548 = vcmask 261120
        %v550 = vsel %vm548, %v513, 0
        %v553 = vsel %vm548, %v542, 0
        %v556 = vsel %vm548, %v543, 0
        %v559 = vsel %vm548, %v544, 0
        %v562 = vsel %vm548, %v545, 0
        %v565 = vsel %vm548, %v546, 0
        %v568 = vsel %vm548, %v547, 0
        %570 = vmatpush.bf16.xpose.msra.mxu0 0
        %571 = vmatpush.bf16.xpose.msra.mxu0 0
        %572 = vmatpush.bf16.xpose.msra.mxu0 %v568
        %573 = vmatpush.bf16.xpose.msra.mxu0 %v565
        %574 = vmatpush.bf16.xpose.msra.mxu0 %v562
        %575 = vmatpush.bf16.xpose.msra.mxu0 %v559
        %576 = vmatpush.bf16.xpose.msra.mxu0 %v556
        %577 = vmatpush.bf16.xpose.msra.mxu0 %v553
        %578 = vmatmul.bf16.gmra.mxu0 %v550
        %v579 = vpop.f32.mrf.mxu0
        %v580 = vadd.f32 %v516, %v579
        %v581 = vpop.f32.mrf.mxu0
        %582 = vdwg.mxu0
        %v583 = vld [vmem:[#allocation2] sm:$0xf]
        %v584 = vld [vmem:[#allocation2 + $0x4] sm:$0xf]
        %v585 = vld [vmem:[#allocation2 + $0x8] sm:$0xf]
        %v586 = vld [vmem:[#allocation2 + $0xc] sm:$0xf]
        %v587 = vpack.c.bf16 %v580, %v580
        %589 = vrot.lane.b32.xlu0 %v587, 96
        %v590 = vpop.permute.xlu0 %589
        %vm591 = vcmask 64512
        %v593 = vsel %vm591, %v587, 0
        %v596 = vsel %vm591, %v590, 0
        %598 = vmatpush.bf16.xpose.msra.mxu0 0
        %599 = vmatpush.bf16.xpose.msra.mxu0 0
        %600 = vmatpush.bf16.xpose.msra.mxu0 0
        %601 = vmatpush.bf16.xpose.msra.mxu0 0
        %602 = vmatpush.bf16.xpose.msra.mxu0 0
        %603 = vmatpush.bf16.xpose.msra.mxu0 0
        %604 = vmatpush.bf16.xpose.msra.mxu0 0
        %605 = vmatpush.bf16.xpose.msra.mxu0 %v596
        %606 = vmatmul.bf16.gmra.mxu0 %v593
        %v607 = vpop.f32.mrf.mxu0
        %v608 = vadd.f32 0.0, %v607
        %v609 = vpop.f32.mrf.mxu0
        %610 = vdwg.mxu0
        %v611 = vmul.f32 %v608, 0.35355338
        %v612 = vsel %vm591, %v611, -inf
        %613 = vmax.xlane.f32.xlu0 %v612
        %v614 = vpop.xlane.xlu0 %613
        %v615 = vsub.f32 %v611, %v614
        %v616 = vmul.f32 %v615, 1.442695
        %v617 = vpow.pop %v616
        %v618 = vsel %vm591, %v617, 0.0
        %619 = vadd.xlane.f32.xlu0 %v618
        %v620 = vpop.xlane.xlu0 %619
        %v621 = vrcp.pop %v620
        %v622 = vmul.f32 %v617, %v621
        %v623 = vpack.c.bf16 %v622, %v622
        %624 = vrot.lane.b32.xlu0 %v587, 64
        %v625 = vpop.permute.xlu0 %624
        %v627 = vsel %vm591, %v623, 0
        %vm629 = vcmask 1043456
        %v631 = vsel %vm629, %v625, 0
        %633 = vmatpush.bf16.msra.mxu0 0
        %634 = vmatpush.bf16.msra.mxu0 0
        %635 = vmatpush.bf16.msra.mxu0 0
        %636 = vmatpush.bf16.msra.mxu0 0
        %637 = vmatpush.bf16.msra.mxu0 0
        %638 = vmatpush.bf16.msra.mxu0 0
        %639 = vmatpush.bf16.msra.mxu0 0
        %640 = vmatpush.bf16.msra.mxu0 %v631
        %641 = vmatmul.bf16.gmra.mxu0 %v627
        %v642 = vpop.f32.mrf.mxu0
        %v643 = vadd.f32 0.0, %v642
        %v644 = vpop.f32.mrf.mxu0
        %645 = vdwg.mxu0
        %v646 = vpack.c.bf16 %v643, %v643
        %647 = vrot.lane.b32.xlu0 %v587, 120
        %v648 = vpop.permute.xlu0 %647
        %649 = vrot.lane.b32.xlu0 %v587, 88
        %v650 = vpop.permute.xlu0 %649
        %v652 = vsel %vm591, %v648, 0
        %v655 = vsel %vm591, %v650, 0
        %657 = vmatpush.bf16.xpose.msra.mxu0 0
        %658 = vmatpush.bf16.xpose.msra.mxu0 0
        %659 = vmatpush.bf16.xpose.msra.mxu0 0
        %660 = vmatpush.bf16.xpose.msra.mxu0 0
        %661 = vmatpush.bf16.xpose.msra.mxu0 0
        %662 = vmatpush.bf16.xpose.msra.mxu0 0
        %663 = vmatpush.bf16.xpose.msra.mxu0 0
        %664 = vmatpush.bf16.xpose.msra.mxu0 %v655
        %665 = vmatmul.bf16.gmra.mxu0 %v652
        %v666 = vpop.f32.mrf.mxu0
        %v667 = vadd.f32 0.0, %v666
        %v668 = vpop.f32.mrf.mxu0
        %669 = vdwg.mxu0
        %v670 = vmul.f32 %v667, 0.35355338
        %v671 = vsel %vm591, %v670, -inf
        %672 = vmax.xlane.f32.xlu0 %v671
        %v673 = vpop.xlane.xlu0 %672
        %v674 = vsub.f32 %v670, %v673
        %v675 = vmul.f32 %v674, 1.442695
        %v676 = vpow.pop %v675
        %v677 = vsel %vm591, %v676, 0.0
        %678 = vadd.xlane.f32.xlu0 %v677
        %v679 = vpop.xlane.xlu0 %678
        %v680 = vrcp.pop %v679
        %v681 = vmul.f32 %v676, %v680
        %v682 = vpack.c.bf16 %v681, %v681
        %683 = vrot.lane.b32.xlu0 %v587, 56
        %v684 = vpop.permute.xlu0 %683
        %v686 = vsel %vm591, %v682, 0
        %v689 = vsel %vm629, %v684, 0
        %691 = vmatpush.bf16.msra.mxu0 0
        %692 = vmatpush.bf16.msra.mxu0 0
        %693 = vmatpush.bf16.msra.mxu0 0
        %694 = vmatpush.bf16.msra.mxu0 0
        %695 = vmatpush.bf16.msra.mxu0 0
        %696 = vmatpush.bf16.msra.mxu0 0
        %697 = vmatpush.bf16.msra.mxu0 0
        %698 = vmatpush.bf16.msra.mxu0 %v689
        %699 = vmatmul.bf16.gmra.mxu0 %v686
        %v700 = vpop.f32.mrf.mxu0
        %v701 = vadd.f32 0.0, %v700
        %v702 = vpop.f32.mrf.mxu0
        %703 = vdwg.mxu0
        %v704 = vpack.c.bf16 %v701, %v701
        %v709 = vunpack.c.l.b16 %v583
        %v710 = vunpack.c.l.b16 %v584
        %v711 = vunpack.c.l.b16 %v585
        %v712 = vunpack.c.l.b16 %v586
        %v713 = vpack.c.b16 %v710, %v709
        %v714 = vpack.c.b16 %v712, %v711
        %715 = vrot.lane.b32.xlu0 %v713, 120
        %v716 = vpop.permute.xlu0 %715
        %717 = vrot.lane.b32.xlu0 %v714, 120
        %v718 = vpop.permute.xlu0 %717
        %v720 = vsel %vm591, %v704, 0
        %v723 = vsel %vm591, %v716, 0
        %v726 = vsel %vm591, %v718, 0
        %728 = vmatpush.bf16.xpose.msra.mxu0 0
        %729 = vmatpush.bf16.xpose.msra.mxu0 0
        %730 = vmatpush.bf16.xpose.msra.mxu0 0
        %731 = vmatpush.bf16.xpose.msra.mxu0 0
        %732 = vmatpush.bf16.xpose.msra.mxu0 0
        %733 = vmatpush.bf16.xpose.msra.mxu0 0
        %734 = vmatpush.bf16.xpose.msra.mxu0 %v726
        %735 = vmatpush.bf16.xpose.msra.mxu0 %v723
        %736 = vmatmul.bf16.gmra.mxu0 %v720
        %v737 = vpop.f32.mrf.mxu0
        %v738 = vadd.f32 0.0, %v737
        %v739 = vpop.f32.mrf.mxu0
        %740 = vdwg.mxu0
        %v742 = vsel %vm591, %v646, 0
        %v745 = vsel %vm591, %v713, 0
        %v748 = vsel %vm591, %v714, 0
        %750 = vmatpush.bf16.xpose.msra.mxu0 0
        %751 = vmatpush.bf16.xpose.msra.mxu0 0
        %752 = vmatpush.bf16.xpose.msra.mxu0 0
        %753 = vmatpush.bf16.xpose.msra.mxu0 0
        %754 = vmatpush.bf16.xpose.msra.mxu0 0
        %755 = vmatpush.bf16.xpose.msra.mxu0 0
        %756 = vmatpush.bf16.xpose.msra.mxu0 %v748
        %757 = vmatpush.bf16.xpose.msra.mxu0 %v745
        %758 = vmatmul.bf16.gmra.mxu0 %v742
        %v759 = vpop.f32.mrf.mxu0
        %v760 = vadd.f32 %v738, %v759
        %v761 = vpop.f32.mrf.mxu0
        %762 = vdwg.mxu0
        %763 = vrot.lane.b32.xlu0 %v587, 112
        %v764 = vpop.permute.xlu0 %763
        %765 = vrot.lane.b32.xlu0 %v587, 80
        %v766 = vpop.permute.xlu0 %765
        %v768 = vsel %vm591, %v764, 0
        %v771 = vsel %vm591, %v766, 0
        %773 = vmatpush.bf16.xpose.msra.mxu0 0
        %774 = vmatpush.bf16.xpose.msra.mxu0 0
        %775 = vmatpush.bf16.xpose.msra.mxu0 0
        %776 = vmatpush.bf16.xpose.msra.mxu0 0
        %777 = vmatpush.bf16.xpose.msra.mxu0 0
        %778 = vmatpush.bf16.xpose.msra.mxu0 0
        %779 = vmatpush.bf16.xpose.msra.mxu0 0
        %780 = vmatpush.bf16.xpose.msra.mxu0 %v771
        %781 = vmatmul.bf16.gmra.mxu0 %v768
        %v782 = vpop.f32.mrf.mxu0
        %v783 = vadd.f32 0.0, %v782
        %v784 = vpop.f32.mrf.mxu0
        %785 = vdwg.mxu0
        %v786 = vmul.f32 %v783, 0.35355338
        %v787 = vsel %vm591, %v786, -inf
        %788 = vmax.xlane.f32.xlu0 %v787
        %v789 = vpop.xlane.xlu0 %788
        %v790 = vsub.f32 %v786, %v789
        %v791 = vmul.f32 %v790, 1.442695
        %v792 = vpow.pop %v791
        %v793 = vsel %vm591, %v792, 0.0
        %794 = vadd.xlane.f32.xlu0 %v793
        %v795 = vpop.xlane.xlu0 %794
        %v796 = vrcp.pop %v795
        %v797 = vmul.f32 %v792, %v796
        %v798 = vpack.c.bf16 %v797, %v797
        %799 = vrot.lane.b32.xlu0 %v587, 48
        %v800 = vpop.permute.xlu0 %799
        %v802 = vsel %vm591, %v798, 0
        %v805 = vsel %vm629, %v800, 0
        %807 = vmatpush.bf16.msra.mxu0 0
        %808 = vmatpush.bf16.msra.mxu0 0
        %809 = vmatpush.bf16.msra.mxu0 0
        %810 = vmatpush.bf16.msra.mxu0 0
        %811 = vmatpush.bf16.msra.mxu0 0
        %812 = vmatpush.bf16.msra.mxu0 0
        %813 = vmatpush.bf16.msra.mxu0 0
        %814 = vmatpush.bf16.msra.mxu0 %v805
        %815 = vmatmul.bf16.gmra.mxu0 %v802
        %v816 = vpop.f32.mrf.mxu0
        %v817 = vadd.f32 0.0, %v816
        %v818 = vpop.f32.mrf.mxu0
        %819 = vdwg.mxu0
        %v820 = vpack.c.bf16 %v817, %v817
        %821 = vrot.lane.b32.xlu0 %v713, 112
        %v822 = vpop.permute.xlu0 %821
        %823 = vrot.lane.b32.xlu0 %v714, 112
        %v824 = vpop.permute.xlu0 %823
        %v826 = vsel %vm591, %v820, 0
        %v829 = vsel %vm591, %v822, 0
        %v832 = vsel %vm591, %v824, 0
        %834 = vmatpush.bf16.xpose.msra.mxu0 0
        %835 = vmatpush.bf16.xpose.msra.mxu0 0
        %836 = vmatpush.bf16.xpose.msra.mxu0 0
        %837 = vmatpush.bf16.xpose.msra.mxu0 0
        %838 = vmatpush.bf16.xpose.msra.mxu0 0
        %839 = vmatpush.bf16.xpose.msra.mxu0 0
        %840 = vmatpush.bf16.xpose.msra.mxu0 %v832
        %841 = vmatpush.bf16.xpose.msra.mxu0 %v829
        %842 = vmatmul.bf16.gmra.mxu0 %v826
        %v843 = vpop.f32.mrf.mxu0
        %v844 = vadd.f32 0.0, %v843
        %v845 = vpop.f32.mrf.mxu0
        %846 = vdwg.mxu0
        %v847 = vadd.f32 %v760, %v844
        %848 = vrot.lane.b32.xlu0 %v587, 104
        %v849 = vpop.permute.xlu0 %848
        %850 = vrot.lane.b32.xlu0 %v587, 72
        %v851 = vpop.permute.xlu0 %850
        %v853 = vsel %vm591, %v849, 0
        %v856 = vsel %vm591, %v851, 0
        %858 = vmatpush.bf16.xpose.msra.mxu0 0
        %859 = vmatpush.bf16.xpose.msra.mxu0 0
        %860 = vmatpush.bf16.xpose.msra.mxu0 0
        %861 = vmatpush.bf16.xpose.msra.mxu0 0
        %862 = vmatpush.bf16.xpose.msra.mxu0 0
        %863 = vmatpush.bf16.xpose.msra.mxu0 0
        %864 = vmatpush.bf16.xpose.msra.mxu0 0
        %865 = vmatpush.bf16.xpose.msra.mxu0 %v856
        %866 = vmatmul.bf16.gmra.mxu0 %v853
        %v867 = vpop.f32.mrf.mxu0
        %v868 = vadd.f32 0.0, %v867
        %v869 = vpop.f32.mrf.mxu0
        %870 = vdwg.mxu0
        %v871 = vmul.f32 %v868, 0.35355338
        %v872 = vsel %vm591, %v871, -inf
        %873 = vmax.xlane.f32.xlu0 %v872
        %v874 = vpop.xlane.xlu0 %873
        %v875 = vsub.f32 %v871, %v874
        %v876 = vmul.f32 %v875, 1.442695
        %v877 = vpow.pop %v876
        %v878 = vsel %vm591, %v877, 0.0
        %879 = vadd.xlane.f32.xlu0 %v878
        %v880 = vpop.xlane.xlu0 %879
        %v881 = vrcp.pop %v880
        %v882 = vmul.f32 %v877, %v881
        %v883 = vpack.c.bf16 %v882, %v882
        %884 = vrot.lane.b32.xlu0 %v587, 40
        %v885 = vpop.permute.xlu0 %884
        %v887 = vsel %vm591, %v883, 0
        %v890 = vsel %vm629, %v885, 0
        %892 = vmatpush.bf16.msra.mxu0 0
        %893 = vmatpush.bf16.msra.mxu0 0
        %894 = vmatpush.bf16.msra.mxu0 0
        %895 = vmatpush.bf16.msra.mxu0 0
        %896 = vmatpush.bf16.msra.mxu0 0
        %897 = vmatpush.bf16.msra.mxu0 0
        %898 = vmatpush.bf16.msra.mxu0 0
        %899 = vmatpush.bf16.msra.mxu0 %v890
        %900 = vmatmul.bf16.gmra.mxu0 %v887
        %v901 = vpop.f32.mrf.mxu0
        %v902 = vadd.f32 0.0, %v901
        %v903 = vpop.f32.mrf.mxu0
        %904 = vdwg.mxu0
        %v905 = vpack.c.bf16 %v902, %v902
        %906 = vrot.lane.b32.xlu0 %v713, 104
        %v907 = vpop.permute.xlu0 %906
        %908 = vrot.lane.b32.xlu0 %v714, 104
        %v909 = vpop.permute.xlu0 %908
        %v911 = vsel %vm591, %v905, 0
        %v914 = vsel %vm591, %v907, 0
        %v917 = vsel %vm591, %v909, 0
        %919 = vmatpush.bf16.xpose.msra.mxu0 0
        %920 = vmatpush.bf16.xpose.msra.mxu0 0
        %921 = vmatpush.bf16.xpose.msra.mxu0 0
        %922 = vmatpush.bf16.xpose.msra.mxu0 0
        %923 = vmatpush.bf16.xpose.msra.mxu0 0
        %924 = vmatpush.bf16.xpose.msra.mxu0 0
        %925 = vmatpush.bf16.xpose.msra.mxu0 %v917
        %926 = vmatpush.bf16.xpose.msra.mxu0 %v914
        %927 = vmatmul.bf16.gmra.mxu0 %v911
        %v928 = vpop.f32.mrf.mxu0
        %v929 = vadd.f32 0.0, %v928
        %v930 = vpop.f32.mrf.mxu0
        %931 = vdwg.mxu0
        %v932 = vadd.f32 %v847, %v929
        %v933 = vld [vmem:[%s4] sm:$0x1]
        %v935 = vperm.slane %v933, 0
        %v937 = vadd.f32 %v932, %v935
        %v938 = vadd.f32 %v500, %v937
        %v939 = vld [vmem:[%s9] sm:$0x1]
        %v940 = vld [vmem:[%s10] sm:$0x1]
        %v941 = vsel %vm548, %v938, 0.0
        %942 = vadd.xlane.f32.xlu0 %v941
        %v943 = vpop.xlane.xlu0 %942
        %v944 = vrcp.pop 32.0
        %v945 = vmul.f32 32.0, %v944
        %v946 = vsub.f32 1.0, %v945
        %v947 = vmul.f32 %v944, %v946
        %v948 = vadd.f32 %v944, %v947
        %vm949 = vweird.f32 %v944
        %v950 = vsel %vm949, %v944, %v948
        %v951 = vmul.f32 %v943, %v950
        %v952 = vsub.f32 %v938, %v951
        %v953 = vmul.f32 %v952, %v952
        %v954 = vsel %vm548, %v953, 0.0
        %955 = vadd.xlane.f32.xlu0 %v954
        %v956 = vpop.xlane.xlu0 %955
        %v957 = vmul.f32 %v956, %v950
        %v958 = vadd.f32 %v957, 1e-05
        %v959 = vrsqrt.pop %v958
        %v960 = vmul.f32 %v959, %v958
        %v961 = vmul.f32 %v960, %v959
        %v962 = vmul.f32 0.5, %v961
        %v963 = vsub.f32 1.5, %v962
        %v964 = vmul.f32 %v959, %v963
        %vm965 = vweird.f32 %v958
        %vm966 = vweird.f32 %v959
        %vm967 = vmor %vm965, %vm966
        %v968 = vsel %vm967, %v959, %v964
        %v969 = vmul.f32 %v952, %v968
        %v971 = vperm.slane %v939, 0
        %v973 = vmul.f32 %v969, %v971
        %v975 = vperm.slane %v940, 0
        %v977 = vadd.f32 %v973, %v975
        %v978 = vld [vmem:[%s5] sm:$0xf]
        %v979 = vld [vmem:[%s5 + $0x4] sm:$0xf]
        %v980 = vld [vmem:[%s5 + $0x8] sm:$0xf]
        %v981 = vld [vmem:[%s5 + $0xc] sm:$0xf]
        %v982 = vld [vmem:[%s5 + $0x10] sm:$0xf]
        %v983 = vld [vmem:[%s5 + $0x14] sm:$0xf]
        %v984 = vld [vmem:[%s5 + $0x18] sm:$0xf]
        %v985 = vld [vmem:[%s5 + $0x1c] sm:$0xf]
        %v986 = vpack.c.bf16 %v977, %v977
        %v987 = vld [vmem:[#allocation4] sm:$0x1]
        %v989 = vperm.slane %v987, 0
        %v999 = vunpack.c.l.b16 %v978
        %v1000 = vunpack.c.l.b16 %v979
        %v1001 = vunpack.c.l.b16 %v980
        %v1002 = vunpack.c.l.b16 %v981
        %v1003 = vunpack.c.l.b16 %v982
        %v1004 = vunpack.c.l.b16 %v983
        %v1005 = vunpack.c.l.b16 %v984
        %v1006 = vunpack.c.l.b16 %v985
        %v1007 = vpack.c.b16 %v1000, %v999
        %v1008 = vpack.c.b16 %v1002, %v1001
        %v1009 = vpack.c.b16 %v1004, %v1003
        %v1010 = vpack.c.b16 %v1006, %v1005
        %v1012 = vsel %vm548, %v986, 0
        %v1015 = vsel %vm548, %v1007, 0
        %v1018 = vsel %vm548, %v1008, 0
        %v1021 = vsel %vm548, %v1009, 0
        %v1024 = vsel %vm548, %v1010, 0
        %1026 = vmatpush.bf16.xpose.msra.mxu0 0
        %1027 = vmatpush.bf16.xpose.msra.mxu0 0
        %1028 = vmatpush.bf16.xpose.msra.mxu0 0
        %1029 = vmatpush.bf16.xpose.msra.mxu0 0
        %1030 = vmatpush.bf16.xpose.msra.mxu0 %v1024
        %1031 = vmatpush.bf16.xpose.msra.mxu0 %v1021
        %1032 = vmatpush.bf16.xpose.msra.mxu0 %v1018
        %1033 = vmatpush.bf16.xpose.msra.mxu0 %v1015
        %1034 = vmatmul.bf16.gmra.mxu0 %v1012
        %v1035 = vpop.f32.mrf.mxu0
        %v1036 = vadd.f32 %v989, %v1035
        %v1037 = vpop.f32.mrf.mxu0
        %1038 = vdwg.mxu0
        %v1039 = vmax.f32 %v1036, 0.0
        %v1040 = vld [vmem:[#allocation6] sm:$0xf]
        %v1041 = vld [vmem:[#allocation6 + $0x4] sm:$0xf]
        %v1042 = vld [vmem:[#allocation6 + $0x8] sm:$0xf]
        %v1043 = vld [vmem:[#allocation6 + $0xc] sm:$0xf]
        %v1044 = vpack.c.bf16 %v1039, %v1039
        %v1045 = vld [vmem:[#allocation7] sm:$0x1]
        %v1047 = vperm.slane %v1045, 0
        %v1053 = vunpack.c.l.b16 %v1040
        %v1054 = vunpack.c.l.b16 %v1041
        %v1055 = vunpack.c.l.b16 %v1042
        %v1056 = vunpack.c.l.b16 %v1043
        %v1057 = vpack.c.b16 %v1054, %v1053
        %v1058 = vpack.c.b16 %v1056, %v1055
        %vm1059 = vcmask 523264
        %v1061 = vsel %vm1059, %v1044, 0
        %v1064 = vsel %vm1059, %v1057, 0
        %v1067 = vsel %vm1059, %v1058, 0
        %1069 = vmatpush.bf16.xpose.msra.mxu0 0
        %1070 = vmatpush.bf16.xpose.msra.mxu0 0
        %1071 = vmatpush.bf16.xpose.msra.mxu0 0
        %1072 = vmatpush.bf16.xpose.msra.mxu0 0
        %1073 = vmatpush.bf16.xpose.msra.mxu0 0
        %1074 = vmatpush.bf16.xpose.msra.mxu0 0
        %1075 = vmatpush.bf16.xpose.msra.mxu0 %v1067
        %1076 = vmatpush.bf16.xpose.msra.mxu0 %v1064
        %1077 = vmatmul.bf16.gmra.mxu0 %v1061
        %v1078 = vpop.f32.mrf.mxu0
        %v1079 = vadd.f32 %v1047, %v1078
        %v1080 = vpop.f32.mrf.mxu0
        %1081 = vdwg.mxu0
        %v1082 = vadd.f32 %v977, %v1079
        %v1083 = vld [vmem:[%s11] sm:$0x1]
        %v1084 = vld [vmem:[%s12] sm:$0x1]
        %v1085 = vsel %vm548, %v1082, 0.0
        %1086 = vadd.xlane.f32.xlu0 %v1085
        %v1087 = vpop.xlane.xlu0 %1086
        %v1088 = vmul.f32 %v1087, %v950
        %v1089 = vsub.f32 %v1082, %v1088
        %v1090 = vmul.f32 %v1089, %v1089
        %v1091 = vsel %vm548, %v1090, 0.0
        %1092 = vadd.xlane.f32.xlu0 %v1091
        %v1093 = vpop.xlane.xlu0 %1092
        %v1094 = vmul.f32 %v1093, %v950
        %v1095 = vadd.f32 %v1094, 1e-05
        %v1096 = vrsqrt.pop %v1095
        %v1097 = vmul.f32 %v1096, %v1095
        %v1098 = vmul.f32 %v1097, %v1096
        %v1099 = vmul.f32 0.5, %v1098
        %v1100 = vsub.f32 1.5, %v1099
        %v1101 = vmul.f32 %v1096, %v1100
        %vm1102 = vweird.f32 %v1095
        %vm1103 = vweird.f32 %v1096
        %vm1104 = vmor %vm1102, %vm1103
        %v1105 = vsel %vm1104, %v1096, %v1101
        %v1106 = vmul.f32 %v1089, %v1105
        %v1108 = vperm.slane %v1083, 0
        %v1110 = vmul.f32 %v1106, %v1108
        %v1112 = vperm.slane %v1084, 0
        %v1114 = vadd.f32 %v1110, %v1112
        %1115 = vst.msk [vmem:[%s498] sm:$0xff] %vm548, %v1114
        %p1116 = scmp.lt.s32.totalorder %s27, 1
        %s1117 = scalar_select %p1116, %s27, 1
        %s1118 = smul.addr %s1117, 8
        %s1119 = scalar_lea.vmem %s13, %s1118
        // Predicated region
        $region89: #{simple_transformer_forward.4} parent=71 // pred_check
          %p1120 = pneg %p323
        $region90: #{simple_transformer_forward.4} parent=71 // pred_check_branch
          %1122 = sbr.rel (%p1120) target = $region92
        $region91: #{simple_transformer_forward.4} parent=71 // pred_region
          _
        $region92: #{simple_transformer_forward.4} parent=71 // pred_fallthru
          _
      $region72: #{simple_transformer_forward.4} parent=5 // pred_fallthru
        _
      %p1123 = scmp.le.s32.totalorder 2, %s22
      // Predicated region
      $region93: #{simple_transformer_forward.4} parent=5 // pred_check
        %p1124 = pneg %p1123
      $region94: #{simple_transformer_forward.4} parent=5 // pred_check_branch
        %1126 = sbr.rel (%p1124) target = $region96
      $region95: #{simple_transformer_forward.4} parent=5 // pred_region
        %s1127 = ssub.s32 %s22, 2
        // Predicated region
        $region97: #{simple_transformer_forward.4} parent=95 // pred_check
          %p1128 = pneg %p329
        $region98: #{simple_transformer_forward.4} parent=95 // pred_check_branch
          %1130 = sbr.rel (%p1128) target = $region100
        $region99: #{simple_transformer_forward.4} parent=95 // pred_region
          %p1131 = scmp.lt.s32.totalorder %s28, 1
          %s1132 = scalar_select %p1131, %s28, 1
          %s1133 = smul.addr %s1132, 8
          %s1134 = scalar_lea.vmem %s13, %s1133
        $region100: #{simple_transformer_forward.4} parent=95 // pred_fallthru
          _
      $region96: #{simple_transformer_forward.4} parent=5 // pred_fallthru
        _
    $region6: #{simple_transformer_forward.4} parent=1 // loop_footer
      %s26 = sadd.s32 1, %s22
    $region7: #{simple_transformer_forward.4} parent=1 // loop_footer_branch
      %21 = sbr.rel target = $region3
    $region8: #{simple_transformer_forward.4} parent=1 // loop_exit
      _
    %1135 = vsyncpa [#allocation3], 1
    %s1136 = scalar_lea.sflag [#allocation3], 1
    %1137 = vsyncpa %s1136, 1
    %1138 = vsyncpa [#allocation5], 1
    %1139 = vsyncpa [#allocation8], 1

</llo_original>
